<compile_context>
chip_gen: v5e
topology: v5e:2x2
jax: 0.10.0
libtpu: 0.0.40
codegen_flags: <defaults>
</compile_context>

<pallas_src>
import functools

import jax
import jax.numpy as jnp
from jax import lax
from jax.experimental import pallas as pl
from jax.experimental.pallas import tpu as pltpu

EPS = 1e-5          # BatchNorm1d default eps
NEG_SLOPE = 0.01    # LeakyReLU default negative_slope


def _lrelu(z):
    return jnp.where(z >= 0, z, NEG_SLOPE * z)


# ----------------------------------------------------------------------------
# Fused kernel: feature_expansion + conv stack + pool + fc + (seq=1) attention
# ----------------------------------------------------------------------------
def fused_kernel(x_ref, wfe_ref, vecs_ref, w2_ref, w3_ref, poolt_ref,
                 wfc_ref, wvo_ref, bias_ref, o_ref, *, L, BL):
    f32 = jnp.float32

    # ---- Stage 1: feature expansion (+BN fold; bias via the "ones" input lane) ----
    # (1, Kpad) @ (Kpad, B*L) -> lane-stacked h, one value per (batch, position).
    h = _lrelu(jnp.dot(x_ref[...], wfe_ref[...],
                       preferred_element_type=f32))                       # (1, BL)

    # ---- Periodic edge masks for Conv1d(padding=1) shifts (built once) ----
    lane = jax.lax.broadcasted_iota(jnp.int32, (1, BL), 1)
    pos = (lane & (L - 1)) if (L & (L - 1)) == 0 else (lane % L)
    first = pos == 0            # position l == 0     within each batch block
    last = pos == (L - 1)       # position l == L-1   within each batch block

    def sprev(a):   # a[..., l-1] within each batch block, zero at l == 0
        return jnp.where(first, 0.0, pltpu.roll(a, shift=1, axis=1))

    def snext(a):   # a[..., l+1] within each batch block, zero at l == L-1
        return jnp.where(last, 0.0, pltpu.roll(a, shift=BL - 1, axis=1))

    # ---- Packed per-channel columns (BN scales already folded into weights) ----
    w1p = vecs_ref[0:32, :]        # conv1 tap k=0 (times x[l-1]), BN-scaled
    w1c = vecs_ref[32:64, :]       # conv1 tap k=1
    w1n = vecs_ref[64:96, :]       # conv1 tap k=2 (times x[l+1])
    c1 = vecs_ref[96:128, :]       # conv1 folded bias+BN shift
    c2 = vecs_ref[128:192, :]      # conv2 folded bias+BN shift
    c3 = vecs_ref[192:320, :]      # conv3 folded bias+BN shift

    # ---- Stage 2: conv stack, whole batch at once (lane-stacked) ----
    # Conv1d(1->32): Cin=1 rank-1 taps on the VPU (no K=1 matmuls).
    y1 = _lrelu(w1p * sprev(h) + w1c * h + w1n * snext(h) + c1)           # (32, BL)

    # Conv1d(32->64): im2col -> ONE K=96 matmul over the whole batch.
    x2 = jnp.concatenate([sprev(y1), y1, snext(y1)], axis=0)              # (96, BL)
    y2 = _lrelu(jnp.dot(w2_ref[...], x2, preferred_element_type=f32) + c2)  # (64, BL)

    # Conv1d(64->128): im2col -> ONE K=192 matmul over the whole batch.
    x3 = jnp.concatenate([sprev(y2), y2, snext(y2)], axis=0)              # (192, BL)
    y3 = _lrelu(jnp.dot(w3_ref[...], x3, preferred_element_type=f32) + c3)  # (128, BL)

    # ---- AdaptiveAvgPool1d(1): one NT selector matmul -> row-major (B, 128) ----
    # pooled_t[b, c] = sum_l y3[c, b*L + l]   (the 1/L is folded into wfc)
    pooled_t = lax.dot_general(
        poolt_ref[...], y3,
        dimension_numbers=(((1,), (1,)), ((), ())),
        preferred_element_type=f32)                                       # (B, 128)

    # ---- Stage 3: fc (+BN, +1/L) then seq_len==1 attention; lane-dense output ----
    z = _lrelu(jnp.dot(pooled_t, wfc_ref[...], preferred_element_type=f32)
               + bias_ref[0:1, :])                                        # (B, H)
    o_ref[...] = (jnp.dot(z, wvo_ref[...], preferred_element_type=f32)
                  + bias_ref[8:9, :])                                     # (B, H)


# ----------------------------------------------------------------------------
# Parameters (deterministic synthetic init, PyTorch-equivalent layouts)
# ----------------------------------------------------------------------------
def init_params(key, input_dim=15, hidden_dim=128):
    keys = iter(jax.random.split(key, 64))

    def nrm(shape, std=0.1):
        return std * jax.random.normal(next(keys), shape, dtype=jnp.float32)

    p = {}

    def bn(prefix, c):
        p[f"g_{prefix}"] = 1.0 + nrm((c,))
        p[f"be_{prefix}"] = nrm((c,))
        p[f"m_{prefix}"] = nrm((c,))
        p[f"v_{prefix}"] = 1.0 + jnp.abs(nrm((c,)))

    # feature_expansion: Linear(input_dim -> hidden_dim), stored as (in, out)
    p["w_fe"] = nrm((input_dim, hidden_dim))
    p["b_fe"] = nrm((hidden_dim,))
    bn("fe", hidden_dim)
    # conv layers (PyTorch Conv1d weight layout: (Cout, Cin, K))
    for i, (ci, co) in enumerate([(1, 32), (32, 64), (64, 128)], start=1):
        p[f"w_c{i}"] = nrm((co, ci, 3))
        p[f"b_c{i}"] = nrm((co,))
        bn(f"c{i}", co)
    # fc_layers: Linear(128 -> hidden_dim), stored as (in, out)
    p["w_fc"] = nrm((128, hidden_dim))
    p["b_fc"] = nrm((hidden_dim,))
    bn("fc", hidden_dim)
    # SelfAttention linears (hidden_dim -> hidden_dim), stored as (in, out)
    for name in ("q", "k", "v", "o"):
        p[f"w_{name}"] = nrm((hidden_dim, hidden_dim))
        p[f"b_{name}"] = nrm((hidden_dim,))
    return p


# ----------------------------------------------------------------------------
# Host-side weight folding + single grid-less pallas_call
# ----------------------------------------------------------------------------
def steady_pathway_pallas(x, p, hidden_dim=128):
    f32 = jnp.float32
    H = hidden_dim
    L = hidden_dim                  # conv sequence length == hidden_dim
    B, IN = x.shape
    BL = B * L

    # ---- feature_expansion: BN fold + block-diagonal lane-stacking + bias lane ----
    s_fe = p["g_fe"] / jnp.sqrt(p["v_fe"] + EPS)
    wfe = p["w_fe"] * s_fe[None, :]                                    # (IN, L)
    bfe = s_fe * (p["b_fe"] - p["m_fe"]) + p["be_fe"]                  # (L,)
    K = B * IN
    Kpad = ((K + 1 + 7) // 8) * 8                                      # room for bias row
    wfe_big = jnp.zeros((Kpad, BL), f32)
    wfe_big = wfe_big.at[:K, :].set(jnp.kron(jnp.eye(B, dtype=f32), wfe))
    wfe_big = wfe_big.at[K, :].set(jnp.tile(bfe, B))
    x_big = jnp.zeros((1, Kpad), f32)
    x_big = x_big.at[0, :K].set(x.reshape(-1)).at[0, K].set(1.0)

    # ---- conv BN folds (scale into weights, shift into per-channel columns) ----
    def bn_scale_shift(i):
        s = p[f"g_c{i}"] / jnp.sqrt(p[f"v_c{i}"] + EPS)
        c = s * (p[f"b_c{i}"] - p[f"m_c{i}"]) + p[f"be_c{i}"]
        return s, c

    s1, c1 = bn_scale_shift(1)
    s2, c2 = bn_scale_shift(2)
    s3, c3 = bn_scale_shift(3)

    # Conv1 (Cin=1): per-tap columns with the BN scale folded in; pack all tiny
    # per-channel operands into ONE sublane-stacked (320, 1) array.
    w1 = p["w_c1"][:, 0, :]                                            # (32, 3)
    col = lambda v: v.reshape(-1, 1)
    vecs = jnp.concatenate(
        [col(s1 * w1[:, 0]), col(s1 * w1[:, 1]), col(s1 * w1[:, 2]),
         col(c1), col(c2), col(c3)], axis=0)                           # (320, 1)

    # Conv2/3: im2col weights (Cout, 3*Cin), tap-major blocks [k=0 | k=1 | k=2]
    # matching the kernel's concat order [x[l-1] | x[l] | x[l+1]]; BN scale folded.
    w2 = s2[:, None] * jnp.concatenate([p["w_c2"][:, :, k] for k in range(3)], axis=1)
    w3 = s3[:, None] * jnp.concatenate([p["w_c3"][:, :, k] for k in range(3)], axis=1)

    # ---- avg-pool 0/1 selector, contracted against the lane axis in-kernel ----
    poolt = jnp.kron(jnp.eye(B, dtype=f32), jnp.ones((1, L), f32))     # (B, BL)

    # ---- fc_layers: fold BN and the avg-pool 1/L ----
    s_fc = p["g_fc"] / jnp.sqrt(p["v_fc"] + EPS)
    wfc = (p["w_fc"] * s_fc[None, :]) / float(L)                       # (128, H)
    bfc = s_fc * (p["b_fc"] - p["m_fc"]) + p["be_fc"]                  # (H,)

    # ---- SelfAttention with seq_len == 1: softmax == 1 ----
    wvo = p["w_v"] @ p["w_o"]                                          # (H, H)
    bvo = p["b_v"] @ p["w_o"] + p["b_o"]                               # (H,)

    bias2 = jnp.zeros((16, H), f32).at[0, :].set(bfc).at[8, :].set(bvo)

    return pl.pallas_call(
        functools.partial(fused_kernel, L=L, BL=BL),
        out_shape=jax.ShapeDtypeStruct((B, H), jnp.float32),
    )(x_big, wfe_big, vecs, w2, w3, poolt, wfc, wvo, bias2)             # (B, H)


# ----------------------------------------------------------------------------
# Pure-JAX reference (same eval-mode semantics) for a correctness check
# ----------------------------------------------------------------------------
def steady_pathway_ref(x, p, hidden_dim=128):
    def bn(z, g, b, m, v):
        return g * (z - m) / jnp.sqrt(v + EPS) + b

    h = x @ p["w_fe"] + p["b_fe"]
    h = _lrelu(bn(h, p["g_fe"], p["be_fe"], p["m_fe"], p["v_fe"]))
    a = h[:, None, :]
    L = hidden_dim
    for i in (1, 2, 3):
        w = p[f"w_c{i}"]
        ap = jnp.pad(a, ((0, 0), (0, 0), (1, 1)))
        conv = sum(jnp.einsum("oc,bcl->bol", w[:, :, k], ap[:, :, k:k + L]) for k in range(3))
        conv = conv + p[f"b_c{i}"][None, :, None]
        conv = bn(conv, p[f"g_c{i}"][None, :, None], p[f"be_c{i}"][None, :, None],
                  p[f"m_c{i}"][None, :, None], p[f"v_c{i}"][None, :, None])
        a = _lrelu(conv)
    pooled = jnp.mean(a, axis=2)
    z = pooled @ p["w_fc"] + p["b_fc"]
    z = _lrelu(bn(z, p["g_fc"], p["be_fc"], p["m_fc"], p["v_fc"]))
    q = z @ p["w_q"] + p["b_q"]
    k = z @ p["w_k"] + p["b_k"]
    v = z @ p["w_v"] + p["b_v"]
    e = jnp.sum(q * k, axis=-1, keepdims=True) / (float(hidden_dim) ** 0.5)
    attn = jax.nn.softmax(e[:, :, None], axis=-1)[:, :, 0]     # softmax over seq_len==1 -> 1
    out = attn * v
    return out @ p["w_o"] + p["b_o"]


if __name__ == "__main__":
    B, INPUT_DIM, HIDDEN = 8, 15, 128
    key = jax.random.PRNGKey(0)
    kx, kp = jax.random.split(key)
    x = jax.random.normal(kx, (B, INPUT_DIM), dtype=jnp.float32)
    params = init_params(kp, INPUT_DIM, HIDDEN)

    fwd = jax.jit(functools.partial(steady_pathway_pallas, hidden_dim=HIDDEN))
    out = jax.block_until_ready(fwd(x, params))
    assert out.shape == (B, HIDDEN)

    ref = steady_pathway_ref(x, params, HIDDEN)
    if not jnp.allclose(out, ref, rtol=2e-3, atol=2e-3):
        err = float(jnp.max(jnp.abs(out - ref)))
        raise AssertionError(f"Pallas output does not match JAX reference (max|err|={err})")

    print("KERNEL_OK")
</pallas_src>

<mosaic_0001>
module attributes {stable_mosaic.version = 11 : i64} {
  func.func @fused_kernel(%arg0: memref<1x128xf32, #tpu.memory_space<vmem>>, %arg1: memref<128x1024xf32, #tpu.memory_space<vmem>>, %arg2: memref<320x1xf32, #tpu.memory_space<vmem>>, %arg3: memref<64x96xf32, #tpu.memory_space<vmem>>, %arg4: memref<128x192xf32, #tpu.memory_space<vmem>>, %arg5: memref<8x1024xf32, #tpu.memory_space<vmem>>, %arg6: memref<128x128xf32, #tpu.memory_space<vmem>>, %arg7: memref<128x128xf32, #tpu.memory_space<vmem>>, %arg8: memref<16x128xf32, #tpu.memory_space<vmem>>, %arg9: memref<8x128xf32, #tpu.memory_space<vmem>>) attributes {dimension_semantics = [], scalar_prefetch = 0 : i64, scratch_operands = 0 : i64, tpu.core_type = #tpu.core_type<tc>} {
    %c0 = arith.constant 0 : index
    %c0_0 = arith.constant 0 : index
    %0 = vector.load %arg0[%c0, %c0_0] : memref<1x128xf32, #tpu.memory_space<vmem>>, vector<1x128xf32>
    %c0_1 = arith.constant 0 : index
    %c0_2 = arith.constant 0 : index
    %1 = vector.load %arg1[%c0_1, %c0_2] : memref<128x1024xf32, #tpu.memory_space<vmem>>, vector<128x1024xf32>
    %cst = arith.constant dense<0.000000e+00> : vector<1x1024xf32>
    %2 = tpu.matmul %0, %1, %cst {dimension_numbers = #tpu.dot_dimension_numbers<[1], [0], [0], [1], [0, 0, 1, 1], [], []>} : vector<1x128xf32>, vector<128x1024xf32>, vector<1x1024xf32> -> vector<1x1024xf32>
    %cst_3 = arith.constant 0.000000e+00 : f32
    %3 = vector.broadcast %cst_3 : f32 to vector<1x1024xf32>
    %4 = arith.cmpf oge, %2, %3 : vector<1x1024xf32>
    %cst_4 = arith.constant 0.00999999977 : f32
    %5 = vector.broadcast %cst_4 : f32 to vector<1x1024xf32>
    %6 = arith.mulf %5, %2 : vector<1x1024xf32>
    %7 = arith.select %4, %2, %6 : vector<1x1024xi1>, vector<1x1024xf32>
    %8 = tpu.iota {dimensions = array<i32: 1>} : vector<1x1024xi32>
    %c127_i32 = arith.constant 127 : i32
    %9 = vector.broadcast %c127_i32 : i32 to vector<1x1024xi32>
    %10 = arith.andi %8, %9 : vector<1x1024xi32>
    %c0_i32 = arith.constant 0 : i32
    %11 = vector.broadcast %c0_i32 : i32 to vector<1x1024xi32>
    %12 = arith.cmpi eq, %10, %11 : vector<1x1024xi32>
    %c127_i32_5 = arith.constant 127 : i32
    %13 = vector.broadcast %c127_i32_5 : i32 to vector<1x1024xi32>
    %14 = arith.cmpi eq, %10, %13 : vector<1x1024xi32>
    %c0_6 = arith.constant 0 : index
    %c0_7 = arith.constant 0 : index
    %15 = vector.load %arg2[%c0_6, %c0_7] : memref<320x1xf32, #tpu.memory_space<vmem>>, vector<32x1xf32>
    %c32 = arith.constant 32 : index
    %c0_8 = arith.constant 0 : index
    %16 = vector.load %arg2[%c32, %c0_8] : memref<320x1xf32, #tpu.memory_space<vmem>>, vector<32x1xf32>
    %c64 = arith.constant 64 : index
    %c0_9 = arith.constant 0 : index
    %17 = vector.load %arg2[%c64, %c0_9] : memref<320x1xf32, #tpu.memory_space<vmem>>, vector<32x1xf32>
    %c96 = arith.constant 96 : index
    %c0_10 = arith.constant 0 : index
    %18 = vector.load %arg2[%c96, %c0_10] : memref<320x1xf32, #tpu.memory_space<vmem>>, vector<32x1xf32>
    %c128 = arith.constant 128 : index
    %c0_11 = arith.constant 0 : index
    %19 = vector.load %arg2[%c128, %c0_11] : memref<320x1xf32, #tpu.memory_space<vmem>>, vector<64x1xf32>
    %c192 = arith.constant 192 : index
    %c0_12 = arith.constant 0 : index
    %20 = vector.load %arg2[%c192, %c0_12] : memref<320x1xf32, #tpu.memory_space<vmem>>, vector<128x1xf32>
    %c1_i32 = arith.constant 1 : i32
    %21 = tpu.dynamic_rotate %7 by %c1_i32 dim 1 : vector<1x1024xf32>, i32 -> vector<1x1024xf32>
    %cst_13 = arith.constant 0.000000e+00 : f32
    %22 = vector.broadcast %cst_13 : f32 to vector<1x1024xf32>
    %23 = arith.select %12, %22, %21 : vector<1x1024xi1>, vector<1x1024xf32>
    %24 = vector.broadcast %15 : vector<32x1xf32> to vector<32x1024xf32>
    %25 = vector.broadcast %23 : vector<1x1024xf32> to vector<32x1024xf32>
    %26 = arith.mulf %24, %25 : vector<32x1024xf32>
    %27 = vector.broadcast %16 : vector<32x1xf32> to vector<32x1024xf32>
    %28 = vector.broadcast %7 : vector<1x1024xf32> to vector<32x1024xf32>
    %29 = arith.mulf %27, %28 : vector<32x1024xf32>
    %30 = arith.addf %26, %29 : vector<32x1024xf32>
    %c1023_i32 = arith.constant 1023 : i32
    %31 = tpu.dynamic_rotate %7 by %c1023_i32 dim 1 : vector<1x1024xf32>, i32 -> vector<1x1024xf32>
    %cst_14 = arith.constant 0.000000e+00 : f32
    %32 = vector.broadcast %cst_14 : f32 to vector<1x1024xf32>
    %33 = arith.select %14, %32, %31 : vector<1x1024xi1>, vector<1x1024xf32>
    %34 = vector.broadcast %17 : vector<32x1xf32> to vector<32x1024xf32>
    %35 = vector.broadcast %33 : vector<1x1024xf32> to vector<32x1024xf32>
    %36 = arith.mulf %34, %35 : vector<32x1024xf32>
    %37 = arith.addf %30, %36 : vector<32x1024xf32>
    %38 = vector.broadcast %18 : vector<32x1xf32> to vector<32x1024xf32>
    %39 = arith.addf %37, %38 : vector<32x1024xf32>
    %cst_15 = arith.constant 0.000000e+00 : f32
    %40 = vector.broadcast %cst_15 : f32 to vector<32x1024xf32>
    %41 = arith.cmpf oge, %39, %40 : vector<32x1024xf32>
    %cst_16 = arith.constant 0.00999999977 : f32
    %42 = vector.broadcast %cst_16 : f32 to vector<32x1024xf32>
    %43 = arith.mulf %42, %39 : vector<32x1024xf32>
    %44 = arith.select %41, %39, %43 : vector<32x1024xi1>, vector<32x1024xf32>
    %c1_i32_17 = arith.constant 1 : i32
    %45 = tpu.dynamic_rotate %44 by %c1_i32_17 dim 1 : vector<32x1024xf32>, i32 -> vector<32x1024xf32>
    %cst_18 = arith.constant 0.000000e+00 : f32
    %46 = vector.shape_cast %12 : vector<1x1024xi1> to vector<1x1024xi1>
    %47 = vector.broadcast %46 : vector<1x1024xi1> to vector<32x1024xi1>
    %48 = vector.broadcast %cst_18 : f32 to vector<32x1024xf32>
    %49 = arith.select %47, %48, %45 : vector<32x1024xi1>, vector<32x1024xf32>
    %c1023_i32_19 = arith.constant 1023 : i32
    %50 = tpu.dynamic_rotate %44 by %c1023_i32_19 dim 1 : vector<32x1024xf32>, i32 -> vector<32x1024xf32>
    %cst_20 = arith.constant 0.000000e+00 : f32
    %51 = vector.shape_cast %14 : vector<1x1024xi1> to vector<1x1024xi1>
    %52 = vector.broadcast %51 : vector<1x1024xi1> to vector<32x1024xi1>
    %53 = vector.broadcast %cst_20 : f32 to vector<32x1024xf32>
    %54 = arith.select %52, %53, %50 : vector<32x1024xi1>, vector<32x1024xf32>
    %55 = tpu.concatenate %49, %44, %54 in 0 : vector<32x1024xf32>, vector<32x1024xf32>, vector<32x1024xf32> -> vector<96x1024xf32>
    %c0_21 = arith.constant 0 : index
    %c0_22 = arith.constant 0 : index
    %56 = vector.load %arg3[%c0_21, %c0_22] : memref<64x96xf32, #tpu.memory_space<vmem>>, vector<64x96xf32>
    %cst_23 = arith.constant dense<0.000000e+00> : vector<64x1024xf32>
    %57 = tpu.matmul %56, %55, %cst_23 {dimension_numbers = #tpu.dot_dimension_numbers<[1], [0], [0], [1], [0, 0, 1, 1], [], []>} : vector<64x96xf32>, vector<96x1024xf32>, vector<64x1024xf32> -> vector<64x1024xf32>
    %58 = vector.broadcast %19 : vector<64x1xf32> to vector<64x1024xf32>
    %59 = arith.addf %57, %58 : vector<64x1024xf32>
    %cst_24 = arith.constant 0.000000e+00 : f32
    %60 = vector.broadcast %cst_24 : f32 to vector<64x1024xf32>
    %61 = arith.cmpf oge, %59, %60 : vector<64x1024xf32>
    %cst_25 = arith.constant 0.00999999977 : f32
    %62 = vector.broadcast %cst_25 : f32 to vector<64x1024xf32>
    %63 = arith.mulf %62, %59 : vector<64x1024xf32>
    %64 = arith.select %61, %59, %63 : vector<64x1024xi1>, vector<64x1024xf32>
    %c1_i32_26 = arith.constant 1 : i32
    %65 = tpu.dynamic_rotate %64 by %c1_i32_26 dim 1 : vector<64x1024xf32>, i32 -> vector<64x1024xf32>
    %cst_27 = arith.constant 0.000000e+00 : f32
    %66 = vector.shape_cast %12 : vector<1x1024xi1> to vector<1x1024xi1>
    %67 = vector.broadcast %66 : vector<1x1024xi1> to vector<64x1024xi1>
    %68 = vector.broadcast %cst_27 : f32 to vector<64x1024xf32>
    %69 = arith.select %67, %68, %65 : vector<64x1024xi1>, vector<64x1024xf32>
    %c1023_i32_28 = arith.constant 1023 : i32
    %70 = tpu.dynamic_rotate %64 by %c1023_i32_28 dim 1 : vector<64x1024xf32>, i32 -> vector<64x1024xf32>
    %cst_29 = arith.constant 0.000000e+00 : f32
    %71 = vector.shape_cast %14 : vector<1x1024xi1> to vector<1x1024xi1>
    %72 = vector.broadcast %71 : vector<1x1024xi1> to vector<64x1024xi1>
    %73 = vector.broadcast %cst_29 : f32 to vector<64x1024xf32>
    %74 = arith.select %72, %73, %70 : vector<64x1024xi1>, vector<64x1024xf32>
    %75 = tpu.concatenate %69, %64, %74 in 0 : vector<64x1024xf32>, vector<64x1024xf32>, vector<64x1024xf32> -> vector<192x1024xf32>
    %c0_30 = arith.constant 0 : index
    %c0_31 = arith.constant 0 : index
    %76 = vector.load %arg4[%c0_30, %c0_31] : memref<128x192xf32, #tpu.memory_space<vmem>>, vector<128x192xf32>
    %cst_32 = arith.constant dense<0.000000e+00> : vector<128x1024xf32>
    %77 = tpu.matmul %76, %75, %cst_32 {dimension_numbers = #tpu.dot_dimension_numbers<[1], [0], [0], [1], [0, 0, 1, 1], [], []>} : vector<128x192xf32>, vector<192x1024xf32>, vector<128x1024xf32> -> vector<128x1024xf32>
    %78 = vector.broadcast %20 : vector<128x1xf32> to vector<128x1024xf32>
    %79 = arith.addf %77, %78 : vector<128x1024xf32>
    %cst_33 = arith.constant 0.000000e+00 : f32
    %80 = vector.broadcast %cst_33 : f32 to vector<128x1024xf32>
    %81 = arith.cmpf oge, %79, %80 : vector<128x1024xf32>
    %cst_34 = arith.constant 0.00999999977 : f32
    %82 = vector.broadcast %cst_34 : f32 to vector<128x1024xf32>
    %83 = arith.mulf %82, %79 : vector<128x1024xf32>
    %84 = arith.select %81, %79, %83 : vector<128x1024xi1>, vector<128x1024xf32>
    %c0_35 = arith.constant 0 : index
    %c0_36 = arith.constant 0 : index
    %85 = vector.load %arg5[%c0_35, %c0_36] : memref<8x1024xf32, #tpu.memory_space<vmem>>, vector<8x1024xf32>
    %cst_37 = arith.constant dense<0.000000e+00> : vector<8x128xf32>
    %86 = tpu.matmul %85, %84, %cst_37 {dimension_numbers = #tpu.dot_dimension_numbers<[1], [1], [0], [0], [0, 0, 1, 0], [], []>} : vector<8x1024xf32>, vector<128x1024xf32>, vector<8x128xf32> -> vector<8x128xf32>
    %c0_38 = arith.constant 0 : index
    %c0_39 = arith.constant 0 : index
    %87 = vector.load %arg6[%c0_38, %c0_39] : memref<128x128xf32, #tpu.memory_space<vmem>>, vector<128x128xf32>
    %cst_40 = arith.constant dense<0.000000e+00> : vector<8x128xf32>
    %88 = tpu.matmul %86, %87, %cst_40 {dimension_numbers = #tpu.dot_dimension_numbers<[1], [0], [0], [1], [0, 0, 1, 1], [], []>} : vector<8x128xf32>, vector<128x128xf32>, vector<8x128xf32> -> vector<8x128xf32>
    %c0_41 = arith.constant 0 : index
    %c0_42 = arith.constant 0 : index
    %89 = vector.load %arg8[%c0_41, %c0_42] : memref<16x128xf32, #tpu.memory_space<vmem>>, vector<1x128xf32>
    %90 = vector.broadcast %89 : vector<1x128xf32> to vector<8x128xf32>
    %91 = arith.addf %88, %90 : vector<8x128xf32>
    %cst_43 = arith.constant 0.000000e+00 : f32
    %92 = vector.broadcast %cst_43 : f32 to vector<8x128xf32>
    %93 = arith.cmpf oge, %91, %92 : vector<8x128xf32>
    %cst_44 = arith.constant 0.00999999977 : f32
    %94 = vector.broadcast %cst_44 : f32 to vector<8x128xf32>
    %95 = arith.mulf %94, %91 : vector<8x128xf32>
    %96 = arith.select %93, %91, %95 : vector<8x128xi1>, vector<8x128xf32>
    %c0_45 = arith.constant 0 : index
    %c0_46 = arith.constant 0 : index
    %97 = vector.load %arg7[%c0_45, %c0_46] : memref<128x128xf32, #tpu.memory_space<vmem>>, vector<128x128xf32>
    %cst_47 = arith.constant dense<0.000000e+00> : vector<8x128xf32>
    %98 = tpu.matmul %96, %97, %cst_47 {dimension_numbers = #tpu.dot_dimension_numbers<[1], [0], [0], [1], [0, 0, 1, 1], [], []>} : vector<8x128xf32>, vector<128x128xf32>, vector<8x128xf32> -> vector<8x128xf32>
    %c8 = arith.constant 8 : index
    %c0_48 = arith.constant 0 : index
    %99 = vector.load %arg8[%c8, %c0_48] : memref<16x128xf32, #tpu.memory_space<vmem>>, vector<1x128xf32>
    %100 = vector.broadcast %99 : vector<1x128xf32> to vector<8x128xf32>
    %101 = arith.addf %98, %100 : vector<8x128xf32>
    %c0_49 = arith.constant 0 : index
    %c0_50 = arith.constant 0 : index
    %102 = vector.load %arg9[%c0_49, %c0_50] : memref<8x128xf32, #tpu.memory_space<vmem>>, vector<8x128xf32>
    tpu.vector_store %arg9[%c0_49, %c0_50], %101 {strides = array<i32>} : memref<8x128xf32, #tpu.memory_space<vmem>>, vector<8x128xf32>,
    return
  }
}

</mosaic_0001>

<llo_original>
// kernel: tile.8
$region0: #{tile.8}
  #allocation0 [shape = 's32[1]{0}', space=sflag, size = 0x4, scoped, tag = 'scoped memory for tile.8']
  %s0 = inlined_call_operand.vmem [shape: f32[128], index: 0, kind: input, shape index: {}]
  %s1 = inlined_call_operand.vmem [shape: f32[8,128], index: 1, kind: output, shape index: {}]
  // Predicated region
  $region2: #{tile.8} parent=0 // pred_check
    _
  $region3: #{tile.8} parent=0 // pred_check_branch
    %3 = sbr.rel (0) target = $region5
  $region4: #{tile.8} parent=0 // pred_region
    _
  $region5: #{tile.8} parent=0 // pred_fallthru
    _
  %v4 = vld [vmem:[%s0] ss:$0 sm:$0xff]
  %5 = vst [vmem:[%s1] sm:$0xff] %v4

// kernel: steady_pathway_pallas.1
$region0: #{steady_pathway_pallas.1}
  #allocation0 [shape = 'u32[]', space=smem, size = 0x4, offset = 0x4, fixed_abs, tag = 'smem constant byte address 0x4 - core index']
  #allocation1 [shape = 'u32[72,128]{1,0:T(1,128)}', space=vmem, size = 0x9000, scoped, tag = 'internal scratch']
  %s0 = inlined_call_operand.vmem [shape: f32[1,128], index: 0, kind: input, shape index: {}]
  %s1 = inlined_call_operand.vmem [shape: f32[128,1024], index: 1, kind: input, shape index: {}]
  %s2 = inlined_call_operand.vmem [shape: f32[320,1], index: 2, kind: input, shape index: {}]
  %s3 = inlined_call_operand.vmem [shape: f32[64,96], index: 3, kind: input, shape index: {}]
  %s4 = inlined_call_operand.vmem [shape: f32[128,192], index: 4, kind: input, shape index: {}]
  %s5 = inlined_call_operand.vmem [shape: f32[8,1024], index: 5, kind: input, shape index: {}]
  %s6 = inlined_call_operand.vmem [shape: f32[128,128], index: 6, kind: input, shape index: {}]
  %s7 = inlined_call_operand.vmem [shape: f32[128,128], index: 7, kind: input, shape index: {}]
  %s8 = inlined_call_operand.vmem [shape: f32[16,128], index: 8, kind: input, shape index: {}]
  %s9 = inlined_call_operand.hbm [shape: f32[8,128], index: 9, kind: output, shape index: {}]
  %s10 = sld [smem:[#allocation0]]
  $region46: #{steady_pathway_pallas.1} parent=0
    _
  %s12 = ssub.s32 1, %s10
  %s13 = scalar_select 0, %s12, %s10
  $region1: #{steady_pathway_pallas.1} parent=0
    #allocation2 [shape = 'u8[4096]{0}', space=vmem, size = 0x1000, scoped, tag = 'output window, operand 0, single buffered']
    #allocation3 [shape = 's32[1]{0}', space=sflag, size = 0x4, scoped, tag = 'scoped memory for steady_pathway_pallas.1']
    %14 = vsyncpa [#allocation3], 0
    // Predicated region
    $region2: #{steady_pathway_pallas.1} parent=1 // pred_check
      _
    $region3: #{steady_pathway_pallas.1} parent=1 // pred_check_branch
      %16 = sbr.rel (0) target = $region5
    $region4: #{steady_pathway_pallas.1} parent=1 // pred_region
      _
    $region5: #{steady_pathway_pallas.1} parent=1 // pred_fallthru
      _
    // Predicated region
    $region6: #{steady_pathway_pallas.1} parent=1 // pred_check
      _
    $region7: #{steady_pathway_pallas.1} parent=1 // pred_check_branch
      %18 = sbr.rel (0) target = $region9
    $region8: #{steady_pathway_pallas.1} parent=1 // pred_region
      _
    $region9: #{steady_pathway_pallas.1} parent=1 // pred_fallthru
      _
    // Predicated region
    $region10: #{steady_pathway_pallas.1} parent=1 // pred_check
      _
    $region11: #{steady_pathway_pallas.1} parent=1 // pred_check_branch
      %20 = sbr.rel (0) target = $region13
    $region12: #{steady_pathway_pallas.1} parent=1 // pred_region
      _
    $region13: #{steady_pathway_pallas.1} parent=1 // pred_fallthru
      _
    // Predicated region
    $region14: #{steady_pathway_pallas.1} parent=1 // pred_check
      _
    $region15: #{steady_pathway_pallas.1} parent=1 // pred_check_branch
      %22 = sbr.rel (0) target = $region17
    $region16: #{steady_pathway_pallas.1} parent=1 // pred_region
      _
    $region17: #{steady_pathway_pallas.1} parent=1 // pred_fallthru
      _
    // Predicated region
    $region18: #{steady_pathway_pallas.1} parent=1 // pred_check
      _
    $region19: #{steady_pathway_pallas.1} parent=1 // pred_check_branch
      %24 = sbr.rel (0) target = $region21
    $region20: #{steady_pathway_pallas.1} parent=1 // pred_region
      _
    $region21: #{steady_pathway_pallas.1} parent=1 // pred_fallthru
      _
    // Predicated region
    $region22: #{steady_pathway_pallas.1} parent=1 // pred_check
      _
    $region23: #{steady_pathway_pallas.1} parent=1 // pred_check_branch
      %26 = sbr.rel (0) target = $region25
    $region24: #{steady_pathway_pallas.1} parent=1 // pred_region
      _
    $region25: #{steady_pathway_pallas.1} parent=1 // pred_fallthru
      _
    // Predicated region
    $region26: #{steady_pathway_pallas.1} parent=1 // pred_check
      _
    $region27: #{steady_pathway_pallas.1} parent=1 // pred_check_branch
      %28 = sbr.rel (0) target = $region29
    $region28: #{steady_pathway_pallas.1} parent=1 // pred_region
      _
    $region29: #{steady_pathway_pallas.1} parent=1 // pred_fallthru
      _
    // Predicated region
    $region30: #{steady_pathway_pallas.1} parent=1 // pred_check
      _
    $region31: #{steady_pathway_pallas.1} parent=1 // pred_check_branch
      %30 = sbr.rel (0) target = $region33
    $region32: #{steady_pathway_pallas.1} parent=1 // pred_region
      _
    $region33: #{steady_pathway_pallas.1} parent=1 // pred_fallthru
      _
    // Predicated region
    $region34: #{steady_pathway_pallas.1} parent=1 // pred_check
      _
    $region35: #{steady_pathway_pallas.1} parent=1 // pred_check_branch
      %32 = sbr.rel (0) target = $region37
    $region36: #{steady_pathway_pallas.1} parent=1 // pred_region
      _
    $region37: #{steady_pathway_pallas.1} parent=1 // pred_fallthru
      _
    %v33 = vld [vmem:[%s0] sm:$0x1]
    %v34 = vld [vmem:[%s1] sm:$0xff]
    %v35 = vld [vmem:[%s1 + $0x8] sm:$0xff]
    %v36 = vld [vmem:[%s1 + $0x10] sm:$0xff]
    %v37 = vld [vmem:[%s1 + $0x18] sm:$0xff]
    %v38 = vld [vmem:[%s1 + $0x20] sm:$0xff]
    %v39 = vld [vmem:[%s1 + $0x28] sm:$0xff]
    %v40 = vld [vmem:[%s1 + $0x30] sm:$0xff]
    %v41 = vld [vmem:[%s1 + $0x38] sm:$0xff]
    %v42 = vld [vmem:[%s1 + $0x40] sm:$0xff]
    %v43 = vld [vmem:[%s1 + $0x48] sm:$0xff]
    %v44 = vld [vmem:[%s1 + $0x50] sm:$0xff]
    %v45 = vld [vmem:[%s1 + $0x58] sm:$0xff]
    %v46 = vld [vmem:[%s1 + $0x60] sm:$0xff]
    %v47 = vld [vmem:[%s1 + $0x68] sm:$0xff]
    %v48 = vld [vmem:[%s1 + $0x70] sm:$0xff]
    %v49 = vld [vmem:[%s1 + $0x78] sm:$0xff]
    %v50 = vld [vmem:[%s1 + $0x80] sm:$0xff]
    %v51 = vld [vmem:[%s1 + $0x88] sm:$0xff]
    %v52 = vld [vmem:[%s1 + $0x90] sm:$0xff]
    %v53 = vld [vmem:[%s1 + $0x98] sm:$0xff]
    %v54 = vld [vmem:[%s1 + $0xa0] sm:$0xff]
    %v55 = vld [vmem:[%s1 + $0xa8] sm:$0xff]
    %v56 = vld [vmem:[%s1 + $0xb0] sm:$0xff]
    %v57 = vld [vmem:[%s1 + $0xb8] sm:$0xff]
    %v58 = vld [vmem:[%s1 + $0xc0] sm:$0xff]
    %v59 = vld [vmem:[%s1 + $0xc8] sm:$0xff]
    %v60 = vld [vmem:[%s1 + $0xd0] sm:$0xff]
    %v61 = vld [vmem:[%s1 + $0xd8] sm:$0xff]
    %v62 = vld [vmem:[%s1 + $0xe0] sm:$0xff]
    %v63 = vld [vmem:[%s1 + $0xe8] sm:$0xff]
    %v64 = vld [vmem:[%s1 + $0xf0] sm:$0xff]
    %v65 = vld [vmem:[%s1 + $0xf8] sm:$0xff]
    %v66 = vld [vmem:[%s1 + $0x100] sm:$0xff]
    %v67 = vld [vmem:[%s1 + $0x108] sm:$0xff]
    %v68 = vld [vmem:[%s1 + $0x110] sm:$0xff]
    %v69 = vld [vmem:[%s1 + $0x118] sm:$0xff]
    %v70 = vld [vmem:[%s1 + $0x120] sm:$0xff]
    %v71 = vld [vmem:[%s1 + $0x128] sm:$0xff]
    %v72 = vld [vmem:[%s1 + $0x130] sm:$0xff]
    %v73 = vld [vmem:[%s1 + $0x138] sm:$0xff]
    %v74 = vld [vmem:[%s1 + $0x140] sm:$0xff]
    %v75 = vld [vmem:[%s1 + $0x148] sm:$0xff]
    %v76 = vld [vmem:[%s1 + $0x150] sm:$0xff]
    %v77 = vld [vmem:[%s1 + $0x158] sm:$0xff]
    %v78 = vld [vmem:[%s1 + $0x160] sm:$0xff]
    %v79 = vld [vmem:[%s1 + $0x168] sm:$0xff]
    %v80 = vld [vmem:[%s1 + $0x170] sm:$0xff]
    %v81 = vld [vmem:[%s1 + $0x178] sm:$0xff]
    %v82 = vld [vmem:[%s1 + $0x180] sm:$0xff]
    %v83 = vld [vmem:[%s1 + $0x188] sm:$0xff]
    %v84 = vld [vmem:[%s1 + $0x190] sm:$0xff]
    %v85 = vld [vmem:[%s1 + $0x198] sm:$0xff]
    %v86 = vld [vmem:[%s1 + $0x1a0] sm:$0xff]
    %v87 = vld [vmem:[%s1 + $0x1a8] sm:$0xff]
    %v88 = vld [vmem:[%s1 + $0x1b0] sm:$0xff]
    %v89 = vld [vmem:[%s1 + $0x1b8] sm:$0xff]
    %v90 = vld [vmem:[%s1 + $0x1c0] sm:$0xff]
    %v91 = vld [vmem:[%s1 + $0x1c8] sm:$0xff]
    %v92 = vld [vmem:[%s1 + $0x1d0] sm:$0xff]
    %v93 = vld [vmem:[%s1 + $0x1d8] sm:$0xff]
    %v94 = vld [vmem:[%s1 + $0x1e0] sm:$0xff]
    %v95 = vld [vmem:[%s1 + $0x1e8] sm:$0xff]
    %v96 = vld [vmem:[%s1 + $0x1f0] sm:$0xff]
    %v97 = vld [vmem:[%s1 + $0x1f8] sm:$0xff]
    %v98 = vld [vmem:[%s1 + $0x200] sm:$0xff]
    %v99 = vld [vmem:[%s1 + $0x208] sm:$0xff]
    %v100 = vld [vmem:[%s1 + $0x210] sm:$0xff]
    %v101 = vld [vmem:[%s1 + $0x218] sm:$0xff]
    %v102 = vld [vmem:[%s1 + $0x220] sm:$0xff]
    %v103 = vld [vmem:[%s1 + $0x228] sm:$0xff]
    %v104 = vld [vmem:[%s1 + $0x230] sm:$0xff]
    %v105 = vld [vmem:[%s1 + $0x238] sm:$0xff]
    %v106 = vld [vmem:[%s1 + $0x240] sm:$0xff]
    %v107 = vld [vmem:[%s1 + $0x248] sm:$0xff]
    %v108 = vld [vmem:[%s1 + $0x250] sm:$0xff]
    %v109 = vld [vmem:[%s1 + $0x258] sm:$0xff]
    %v110 = vld [vmem:[%s1 + $0x260] sm:$0xff]
    %v111 = vld [vmem:[%s1 + $0x268] sm:$0xff]
    %v112 = vld [vmem:[%s1 + $0x270] sm:$0xff]
    %v113 = vld [vmem:[%s1 + $0x278] sm:$0xff]
    %v114 = vld [vmem:[%s1 + $0x280] sm:$0xff]
    %v115 = vld [vmem:[%s1 + $0x288] sm:$0xff]
    %v116 = vld [vmem:[%s1 + $0x290] sm:$0xff]
    %v117 = vld [vmem:[%s1 + $0x298] sm:$0xff]
    %v118 = vld [vmem:[%s1 + $0x2a0] sm:$0xff]
    %v119 = vld [vmem:[%s1 + $0x2a8] sm:$0xff]
    %v120 = vld [vmem:[%s1 + $0x2b0] sm:$0xff]
    %v121 = vld [vmem:[%s1 + $0x2b8] sm:$0xff]
    %v122 = vld [vmem:[%s1 + $0x2c0] sm:$0xff]
    %v123 = vld [vmem:[%s1 + $0x2c8] sm:$0xff]
    %v124 = vld [vmem:[%s1 + $0x2d0] sm:$0xff]
    %v125 = vld [vmem:[%s1 + $0x2d8] sm:$0xff]
    %v126 = vld [vmem:[%s1 + $0x2e0] sm:$0xff]
    %v127 = vld [vmem:[%s1 + $0x2e8] sm:$0xff]
    %v128 = vld [vmem:[%s1 + $0x2f0] sm:$0xff]
    %v129 = vld [vmem:[%s1 + $0x2f8] sm:$0xff]
    %v130 = vld [vmem:[%s1 + $0x300] sm:$0xff]
    %v131 = vld [vmem:[%s1 + $0x308] sm:$0xff]
    %v132 = vld [vmem:[%s1 + $0x310] sm:$0xff]
    %v133 = vld [vmem:[%s1 + $0x318] sm:$0xff]
    %v134 = vld [vmem:[%s1 + $0x320] sm:$0xff]
    %v135 = vld [vmem:[%s1 + $0x328] sm:$0xff]
    %v136 = vld [vmem:[%s1 + $0x330] sm:$0xff]
    %v137 = vld [vmem:[%s1 + $0x338] sm:$0xff]
    %v138 = vld [vmem:[%s1 + $0x340] sm:$0xff]
    %v139 = vld [vmem:[%s1 + $0x348] sm:$0xff]
    %v140 = vld [vmem:[%s1 + $0x350] sm:$0xff]
    %v141 = vld [vmem:[%s1 + $0x358] sm:$0xff]
    %v142 = vld [vmem:[%s1 + $0x360] sm:$0xff]
    %v143 = vld [vmem:[%s1 + $0x368] sm:$0xff]
    %v144 = vld [vmem:[%s1 + $0x370] sm:$0xff]
    %v145 = vld [vmem:[%s1 + $0x378] sm:$0xff]
    %v146 = vld [vmem:[%s1 + $0x380] sm:$0xff]
    %v147 = vld [vmem:[%s1 + $0x388] sm:$0xff]
    %v148 = vld [vmem:[%s1 + $0x390] sm:$0xff]
    %v149 = vld [vmem:[%s1 + $0x398] sm:$0xff]
    %v150 = vld [vmem:[%s1 + $0x3a0] sm:$0xff]
    %v151 = vld [vmem:[%s1 + $0x3a8] sm:$0xff]
    %v152 = vld [vmem:[%s1 + $0x3b0] sm:$0xff]
    %v153 = vld [vmem:[%s1 + $0x3b8] sm:$0xff]
    %v154 = vld [vmem:[%s1 + $0x3c0] sm:$0xff]
    %v155 = vld [vmem:[%s1 + $0x3c8] sm:$0xff]
    %v156 = vld [vmem:[%s1 + $0x3d0] sm:$0xff]
    %v157 = vld [vmem:[%s1 + $0x3d8] sm:$0xff]
    %v158 = vld [vmem:[%s1 + $0x3e0] sm:$0xff]
    %v159 = vld [vmem:[%s1 + $0x3e8] sm:$0xff]
    %v160 = vld [vmem:[%s1 + $0x3f0] sm:$0xff]
    %v161 = vld [vmem:[%s1 + $0x3f8] sm:$0xff]
    %162 = vmatpush.msra.mxu0 %v154
    %163 = vmatpush.msra.mxu0 %v146
    %164 = vmatpush.msra.mxu0 %v138
    %165 = vmatpush.msra.mxu0 %v130
    %166 = vmatpush.msra.mxu0 %v122
    %167 = vmatpush.msra.mxu0 %v114
    %168 = vmatpush.msra.mxu0 %v106
    %169 = vmatpush.msra.mxu0 %v98
    %170 = vmatpush.msra.mxu0 %v90
    %171 = vmatpush.msra.mxu0 %v82
    %172 = vmatpush.msra.mxu0 %v74
    %173 = vmatpush.msra.mxu0 %v66
    %174 = vmatpush.msra.mxu0 %v58
    %175 = vmatpush.msra.mxu0 %v50
    %176 = vmatpush.msra.mxu0 %v42
    %177 = vmatpush.msra.mxu0 %v34
    %178 = vmatmul.f32.gmra.mxu0 %v33
    %v179 = vpop.f32.mrf.mxu0
    %v180 = vadd.f32 0.0, %v179
    %181 = vdwg.mxu0
    %182 = vmatpush.msra.mxu0 %v155
    %183 = vmatpush.msra.mxu0 %v147
    %184 = vmatpush.msra.mxu0 %v139
    %185 = vmatpush.msra.mxu0 %v131
    %186 = vmatpush.msra.mxu0 %v123
    %187 = vmatpush.msra.mxu0 %v115
    %188 = vmatpush.msra.mxu0 %v107
    %189 = vmatpush.msra.mxu0 %v99
    %190 = vmatpush.msra.mxu0 %v91
    %191 = vmatpush.msra.mxu0 %v83
    %192 = vmatpush.msra.mxu0 %v75
    %193 = vmatpush.msra.mxu0 %v67
    %194 = vmatpush.msra.mxu0 %v59
    %195 = vmatpush.msra.mxu0 %v51
    %196 = vmatpush.msra.mxu0 %v43
    %197 = vmatpush.msra.mxu0 %v35
    %198 = vmatmul.f32.gmra.mxu0 %v33
    %v199 = vpop.f32.mrf.mxu0
    %v200 = vadd.f32 0.0, %v199
    %201 = vdwg.mxu0
    %202 = vmatpush.msra.mxu0 %v156
    %203 = vmatpush.msra.mxu0 %v148
    %204 = vmatpush.msra.mxu0 %v140
    %205 = vmatpush.msra.mxu0 %v132
    %206 = vmatpush.msra.mxu0 %v124
    %207 = vmatpush.msra.mxu0 %v116
    %208 = vmatpush.msra.mxu0 %v108
    %209 = vmatpush.msra.mxu0 %v100
    %210 = vmatpush.msra.mxu0 %v92
    %211 = vmatpush.msra.mxu0 %v84
    %212 = vmatpush.msra.mxu0 %v76
    %213 = vmatpush.msra.mxu0 %v68
    %214 = vmatpush.msra.mxu0 %v60
    %215 = vmatpush.msra.mxu0 %v52
    %216 = vmatpush.msra.mxu0 %v44
    %217 = vmatpush.msra.mxu0 %v36
    %218 = vmatmul.f32.gmra.mxu0 %v33
    %v219 = vpop.f32.mrf.mxu0
    %v220 = vadd.f32 0.0, %v219
    %221 = vdwg.mxu0
    %222 = vmatpush.msra.mxu0 %v157
    %223 = vmatpush.msra.mxu0 %v149
    %224 = vmatpush.msra.mxu0 %v141
    %225 = vmatpush.msra.mxu0 %v133
    %226 = vmatpush.msra.mxu0 %v125
    %227 = vmatpush.msra.mxu0 %v117
    %228 = vmatpush.msra.mxu0 %v109
    %229 = vmatpush.msra.mxu0 %v101
    %230 = vmatpush.msra.mxu0 %v93
    %231 = vmatpush.msra.mxu0 %v85
    %232 = vmatpush.msra.mxu0 %v77
    %233 = vmatpush.msra.mxu0 %v69
    %234 = vmatpush.msra.mxu0 %v61
    %235 = vmatpush.msra.mxu0 %v53
    %236 = vmatpush.msra.mxu0 %v45
    %237 = vmatpush.msra.mxu0 %v37
    %238 = vmatmul.f32.gmra.mxu0 %v33
    %v239 = vpop.f32.mrf.mxu0
    %v240 = vadd.f32 0.0, %v239
    %241 = vdwg.mxu0
    %242 = vmatpush.msra.mxu0 %v158
    %243 = vmatpush.msra.mxu0 %v150
    %244 = vmatpush.msra.mxu0 %v142
    %245 = vmatpush.msra.mxu0 %v134
    %246 = vmatpush.msra.mxu0 %v126
    %247 = vmatpush.msra.mxu0 %v118
    %248 = vmatpush.msra.mxu0 %v110
    %249 = vmatpush.msra.mxu0 %v102
    %250 = vmatpush.msra.mxu0 %v94
    %251 = vmatpush.msra.mxu0 %v86
    %252 = vmatpush.msra.mxu0 %v78
    %253 = vmatpush.msra.mxu0 %v70
    %254 = vmatpush.msra.mxu0 %v62
    %255 = vmatpush.msra.mxu0 %v54
    %256 = vmatpush.msra.mxu0 %v46
    %257 = vmatpush.msra.mxu0 %v38
    %258 = vmatmul.f32.gmra.mxu0 %v33
    %v259 = vpop.f32.mrf.mxu0
    %v260 = vadd.f32 0.0, %v259
    %261 = vdwg.mxu0
    %262 = vmatpush.msra.mxu0 %v159
    %263 = vmatpush.msra.mxu0 %v151
    %264 = vmatpush.msra.mxu0 %v143
    %265 = vmatpush.msra.mxu0 %v135
    %266 = vmatpush.msra.mxu0 %v127
    %267 = vmatpush.msra.mxu0 %v119
    %268 = vmatpush.msra.mxu0 %v111
    %269 = vmatpush.msra.mxu0 %v103
    %270 = vmatpush.msra.mxu0 %v95
    %271 = vmatpush.msra.mxu0 %v87
    %272 = vmatpush.msra.mxu0 %v79
    %273 = vmatpush.msra.mxu0 %v71
    %274 = vmatpush.msra.mxu0 %v63
    %275 = vmatpush.msra.mxu0 %v55
    %276 = vmatpush.msra.mxu0 %v47
    %277 = vmatpush.msra.mxu0 %v39
    %278 = vmatmul.f32.gmra.mxu0 %v33
    %v279 = vpop.f32.mrf.mxu0
    %v280 = vadd.f32 0.0, %v279
    %281 = vdwg.mxu0
    %282 = vmatpush.msra.mxu0 %v160
    %283 = vmatpush.msra.mxu0 %v152
    %284 = vmatpush.msra.mxu0 %v144
    %285 = vmatpush.msra.mxu0 %v136
    %286 = vmatpush.msra.mxu0 %v128
    %287 = vmatpush.msra.mxu0 %v120
    %288 = vmatpush.msra.mxu0 %v112
    %289 = vmatpush.msra.mxu0 %v104
    %290 = vmatpush.msra.mxu0 %v96
    %291 = vmatpush.msra.mxu0 %v88
    %292 = vmatpush.msra.mxu0 %v80
    %293 = vmatpush.msra.mxu0 %v72
    %294 = vmatpush.msra.mxu0 %v64
    %295 = vmatpush.msra.mxu0 %v56
    %296 = vmatpush.msra.mxu0 %v48
    %297 = vmatpush.msra.mxu0 %v40
    %298 = vmatmul.f32.gmra.mxu0 %v33
    %v299 = vpop.f32.mrf.mxu0
    %v300 = vadd.f32 0.0, %v299
    %301 = vdwg.mxu0
    %302 = vmatpush.msra.mxu0 %v161
    %303 = vmatpush.msra.mxu0 %v153
    %304 = vmatpush.msra.mxu0 %v145
    %305 = vmatpush.msra.mxu0 %v137
    %306 = vmatpush.msra.mxu0 %v129
    %307 = vmatpush.msra.mxu0 %v121
    %308 = vmatpush.msra.mxu0 %v113
    %309 = vmatpush.msra.mxu0 %v105
    %310 = vmatpush.msra.mxu0 %v97
    %311 = vmatpush.msra.mxu0 %v89
    %312 = vmatpush.msra.mxu0 %v81
    %313 = vmatpush.msra.mxu0 %v73
    %314 = vmatpush.msra.mxu0 %v65
    %315 = vmatpush.msra.mxu0 %v57
    %316 = vmatpush.msra.mxu0 %v49
    %317 = vmatpush.msra.mxu0 %v41
    %318 = vmatmul.f32.gmra.mxu0 %v33
    %v319 = vpop.f32.mrf.mxu0
    %v320 = vadd.f32 0.0, %v319
    %321 = vdwg.mxu0
    %vm322 = vcmp.ge.f32.partialorder %v180, 0.0
    %vm323 = vcmp.ge.f32.partialorder %v200, 0.0
    %vm324 = vcmp.ge.f32.partialorder %v220, 0.0
    %vm325 = vcmp.ge.f32.partialorder %v240, 0.0
    %vm326 = vcmp.ge.f32.partialorder %v260, 0.0
    %vm327 = vcmp.ge.f32.partialorder %v280, 0.0
    %vm328 = vcmp.ge.f32.partialorder %v300, 0.0
    %vm329 = vcmp.ge.f32.partialorder %v320, 0.0
    %v330 = vmul.f32 %v180, 0.01
    %v331 = vmul.f32 %v200, 0.01
    %v332 = vmul.f32 %v220, 0.01
    %v333 = vmul.f32 %v240, 0.01
    %v334 = vmul.f32 %v260, 0.01
    %v335 = vmul.f32 %v280, 0.01
    %v336 = vmul.f32 %v300, 0.01
    %v337 = vmul.f32 %v320, 0.01
    %v338 = vsel %vm322, %v180, %v330
    %v339 = vsel %vm323, %v200, %v331
    %v340 = vsel %vm324, %v220, %v332
    %v341 = vsel %vm325, %v240, %v333
    %v342 = vsel %vm326, %v260, %v334
    %v343 = vsel %vm327, %v280, %v335
    %v344 = vsel %vm328, %v300, %v336
    %v345 = vsel %vm329, %v320, %v337
    %v346 = vlaneseq
    %v347 = vand.u32 %v346, 127
    %v348 = vadd.s32 %v347, 128
    %v349 = vadd.s32 %v347, 256
    %v350 = vadd.s32 %v347, 384
    %v351 = vadd.s32 %v347, 512
    %v352 = vadd.s32 %v347, 640
    %v353 = vadd.s32 %v347, 768
    %v354 = vadd.s32 %v347, 896
    %v355 = vand.u32 %v347, 127
    %v356 = vand.u32 %v348, 127
    %v357 = vand.u32 %v349, 127
    %v358 = vand.u32 %v350, 127
    %v359 = vand.u32 %v351, 127
    %v360 = vand.u32 %v352, 127
    %v361 = vand.u32 %v353, 127
    %v362 = vand.u32 %v354, 127
    %vm363 = vcmp.eq.s32.totalorder %v355, 0
    %vm364 = vcmp.eq.s32.totalorder %v356, 0
    %vm365 = vcmp.eq.s32.totalorder %v357, 0
    %vm366 = vcmp.eq.s32.totalorder %v358, 0
    %vm367 = vcmp.eq.s32.totalorder %v359, 0
    %vm368 = vcmp.eq.s32.totalorder %v360, 0
    %vm369 = vcmp.eq.s32.totalorder %v361, 0
    %vm370 = vcmp.eq.s32.totalorder %v362, 0
    %vm371 = vcmp.eq.s32.totalorder %v355, 127
    %vm372 = vcmp.eq.s32.totalorder %v356, 127
    %vm373 = vcmp.eq.s32.totalorder %v357, 127
    %vm374 = vcmp.eq.s32.totalorder %v358, 127
    %vm375 = vcmp.eq.s32.totalorder %v359, 127
    %vm376 = vcmp.eq.s32.totalorder %v360, 127
    %vm377 = vcmp.eq.s32.totalorder %v361, 127
    %vm378 = vcmp.eq.s32.totalorder %v362, 127
    %v379 = vld [vmem:[%s2] sm:$0xff]
    %v380 = vld [vmem:[%s2 + $0x8] sm:$0xff]
    %v381 = vld [vmem:[%s2 + $0x10] sm:$0xff]
    %v382 = vld [vmem:[%s2 + $0x18] sm:$0xff]
    %v383 = vld [vmem:[%s2 + $0x20] sm:$0xff]
    %v384 = vld [vmem:[%s2 + $0x28] sm:$0xff]
    %v385 = vld [vmem:[%s2 + $0x30] sm:$0xff]
    %v386 = vld [vmem:[%s2 + $0x38] sm:$0xff]
    %v387 = vld [vmem:[%s2 + $0x40] sm:$0xff]
    %v388 = vld [vmem:[%s2 + $0x48] sm:$0xff]
    %v389 = vld [vmem:[%s2 + $0x50] sm:$0xff]
    %v390 = vld [vmem:[%s2 + $0x58] sm:$0xff]
    %v391 = vld [vmem:[%s2 + $0x60] sm:$0xff]
    %v392 = vld [vmem:[%s2 + $0x68] sm:$0xff]
    %v393 = vld [vmem:[%s2 + $0x70] sm:$0xff]
    %v394 = vld [vmem:[%s2 + $0x78] sm:$0xff]
    %v395 = vld [vmem:[%s2 + $0x80] sm:$0xff]
    %v396 = vld [vmem:[%s2 + $0x88] sm:$0xff]
    %v397 = vld [vmem:[%s2 + $0x90] sm:$0xff]
    %v398 = vld [vmem:[%s2 + $0x98] sm:$0xff]
    %v399 = vld [vmem:[%s2 + $0xa0] sm:$0xff]
    %v400 = vld [vmem:[%s2 + $0xa8] sm:$0xff]
    %v401 = vld [vmem:[%s2 + $0xb0] sm:$0xff]
    %v402 = vld [vmem:[%s2 + $0xb8] sm:$0xff]
    %v403 = vld [vmem:[%s2 + $0xc0] sm:$0xff]
    %v404 = vld [vmem:[%s2 + $0xc8] sm:$0xff]
    %v405 = vld [vmem:[%s2 + $0xd0] sm:$0xff]
    %v406 = vld [vmem:[%s2 + $0xd8] sm:$0xff]
    %v407 = vld [vmem:[%s2 + $0xe0] sm:$0xff]
    %v408 = vld [vmem:[%s2 + $0xe8] sm:$0xff]
    %v409 = vld [vmem:[%s2 + $0xf0] sm:$0xff]
    %v410 = vld [vmem:[%s2 + $0xf8] sm:$0xff]
    %v411 = vld [vmem:[%s2 + $0x100] sm:$0xff]
    %v412 = vld [vmem:[%s2 + $0x108] sm:$0xff]
    %v413 = vld [vmem:[%s2 + $0x110] sm:$0xff]
    %v414 = vld [vmem:[%s2 + $0x118] sm:$0xff]
    %v415 = vld [vmem:[%s2 + $0x120] sm:$0xff]
    %v416 = vld [vmem:[%s2 + $0x128] sm:$0xff]
    %v417 = vld [vmem:[%s2 + $0x130] sm:$0xff]
    %v418 = vld [vmem:[%s2 + $0x138] sm:$0xff]
    %419 = vrot.lane.b32.xlu0 %v338, 1
    %v420 = vpop.permute.xlu0 %419
    %421 = vrot.lane.b32.xlu0 %v339, 1
    %v422 = vpop.permute.xlu0 %421
    %423 = vrot.lane.b32.xlu0 %v340, 1
    %v424 = vpop.permute.xlu0 %423
    %425 = vrot.lane.b32.xlu0 %v341, 1
    %v426 = vpop.permute.xlu0 %425
    %427 = vrot.lane.b32.xlu0 %v342, 1
    %v428 = vpop.permute.xlu0 %427
    %429 = vrot.lane.b32.xlu0 %v343, 1
    %v430 = vpop.permute.xlu0 %429
    %431 = vrot.lane.b32.xlu0 %v344, 1
    %v432 = vpop.permute.xlu0 %431
    %433 = vrot.lane.b32.xlu0 %v345, 1
    %v434 = vpop.permute.xlu0 %433
    %vm435 = vcmp.lt.s32.totalorder %v347, 1
    %v436 = vsel %vm435, %v432, %v434
    %v437 = vsel %vm435, %v430, %v432
    %v438 = vsel %vm435, %v428, %v430
    %v439 = vsel %vm435, %v426, %v428
    %v440 = vsel %vm435, %v424, %v426
    %v441 = vsel %vm435, %v422, %v424
    %v442 = vsel %vm435, %v420, %v422
    %v443 = vsel %vm435, %v434, %v420
    %v444 = vsel %vm363, 0.0, %v443
    %v445 = vsel %vm364, 0.0, %v442
    %v446 = vsel %vm365, 0.0, %v441
    %v447 = vsel %vm366, 0.0, %v440
    %v448 = vsel %vm367, 0.0, %v439
    %v449 = vsel %vm368, 0.0, %v438
    %v450 = vsel %vm369, 0.0, %v437
    %v451 = vsel %vm370, 0.0, %v436
    %453 = vset.pattern.permute.xlu0 0
    %454 = vperm.xlu0 %453, %v379
    %v455 = vpop.permute.xlu0 %454
    %458 = vset.pattern.permute.xlu0 0
    %459 = vperm.xlu0 %458, %v380
    %v460 = vpop.permute.xlu0 %459
    %463 = vset.pattern.permute.xlu0 0
    %464 = vperm.xlu0 %463, %v381
    %v465 = vpop.permute.xlu0 %464
    %468 = vset.pattern.permute.xlu0 0
    %469 = vperm.xlu0 %468, %v382
    %v470 = vpop.permute.xlu0 %469
    %v472 = vperm.slane %v444, 0
    %v473 = vperm.slane %v445, 0
    %v474 = vperm.slane %v446, 0
    %v475 = vperm.slane %v447, 0
    %v476 = vperm.slane %v448, 0
    %v477 = vperm.slane %v449, 0
    %v478 = vperm.slane %v450, 0
    %v479 = vperm.slane %v451, 0
    %v480 = vmul.f32 %v455, %v472
    %v481 = vmul.f32 %v455, %v473
    %v482 = vmul.f32 %v455, %v474
    %v483 = vmul.f32 %v455, %v475
    %v484 = vmul.f32 %v455, %v476
    %v485 = vmul.f32 %v455, %v477
    %v486 = vmul.f32 %v455, %v478
    %v487 = vmul.f32 %v455, %v479
    %v488 = vmul.f32 %v460, %v472
    %v489 = vmul.f32 %v460, %v473
    %v490 = vmul.f32 %v460, %v474
    %v491 = vmul.f32 %v460, %v475
    %v492 = vmul.f32 %v460, %v476
    %v493 = vmul.f32 %v460, %v477
    %v494 = vmul.f32 %v460, %v478
    %v495 = vmul.f32 %v460, %v479
    %v496 = vmul.f32 %v465, %v472
    %v497 = vmul.f32 %v465, %v473
    %v498 = vmul.f32 %v465, %v474
    %v499 = vmul.f32 %v465, %v475
    %v500 = vmul.f32 %v465, %v476
    %v501 = vmul.f32 %v465, %v477
    %v502 = vmul.f32 %v465, %v478
    %v503 = vmul.f32 %v465, %v479
    %v504 = vmul.f32 %v470, %v472
    %v505 = vmul.f32 %v470, %v473
    %v506 = vmul.f32 %v470, %v474
    %v507 = vmul.f32 %v470, %v475
    %v508 = vmul.f32 %v470, %v476
    %v509 = vmul.f32 %v470, %v477
    %v510 = vmul.f32 %v470, %v478
    %v511 = vmul.f32 %v470, %v479
    %513 = vset.pattern.permute.xlu0 0
    %514 = vperm.xlu0 %513, %v383
    %v515 = vpop.permute.xlu0 %514
    %518 = vset.pattern.permute.xlu0 0
    %519 = vperm.xlu0 %518, %v384
    %v520 = vpop.permute.xlu0 %519
    %523 = vset.pattern.permute.xlu0 0
    %524 = vperm.xlu0 %523, %v385
    %v525 = vpop.permute.xlu0 %524
    %528 = vset.pattern.permute.xlu0 0
    %529 = vperm.xlu0 %528, %v386
    %v530 = vpop.permute.xlu0 %529
    %v532 = vperm.slane %v338, 0
    %v533 = vperm.slane %v339, 0
    %v534 = vperm.slane %v340, 0
    %v535 = vperm.slane %v341, 0
    %v536 = vperm.slane %v342, 0
    %v537 = vperm.slane %v343, 0
    %v538 = vperm.slane %v344, 0
    %v539 = vperm.slane %v345, 0
    %v540 = vmul.f32 %v515, %v532
    %v541 = vmul.f32 %v515, %v533
    %v542 = vmul.f32 %v515, %v534
    %v543 = vmul.f32 %v515, %v535
    %v544 = vmul.f32 %v515, %v536
    %v545 = vmul.f32 %v515, %v537
    %v546 = vmul.f32 %v515, %v538
    %v547 = vmul.f32 %v515, %v539
    %v548 = vmul.f32 %v520, %v532
    %v549 = vmul.f32 %v520, %v533
    %v550 = vmul.f32 %v520, %v534
    %v551 = vmul.f32 %v520, %v535
    %v552 = vmul.f32 %v520, %v536
    %v553 = vmul.f32 %v520, %v537
    %v554 = vmul.f32 %v520, %v538
    %v555 = vmul.f32 %v520, %v539
    %v556 = vmul.f32 %v525, %v532
    %v557 = vmul.f32 %v525, %v533
    %v558 = vmul.f32 %v525, %v534
    %v559 = vmul.f32 %v525, %v535
    %v560 = vmul.f32 %v525, %v536
    %v561 = vmul.f32 %v525, %v537
    %v562 = vmul.f32 %v525, %v538
    %v563 = vmul.f32 %v525, %v539
    %v564 = vmul.f32 %v530, %v532
    %v565 = vmul.f32 %v530, %v533
    %v566 = vmul.f32 %v530, %v534
    %v567 = vmul.f32 %v530, %v535
    %v568 = vmul.f32 %v530, %v536
    %v569 = vmul.f32 %v530, %v537
    %v570 = vmul.f32 %v530, %v538
    %v571 = vmul.f32 %v530, %v539
    %v572 = vadd.f32 %v480, %v540
    %v573 = vadd.f32 %v481, %v541
    %v574 = vadd.f32 %v482, %v542
    %v575 = vadd.f32 %v483, %v543
    %v576 = vadd.f32 %v484, %v544
    %v577 = vadd.f32 %v485, %v545
    %v578 = vadd.f32 %v486, %v546
    %v579 = vadd.f32 %v487, %v547
    %v580 = vadd.f32 %v488, %v548
    %v581 = vadd.f32 %v489, %v549
    %v582 = vadd.f32 %v490, %v550
    %v583 = vadd.f32 %v491, %v551
    %v584 = vadd.f32 %v492, %v552
    %v585 = vadd.f32 %v493, %v553
    %v586 = vadd.f32 %v494, %v554
    %v587 = vadd.f32 %v495, %v555
    %v588 = vadd.f32 %v496, %v556
    %v589 = vadd.f32 %v497, %v557
    %v590 = vadd.f32 %v498, %v558
    %v591 = vadd.f32 %v499, %v559
    %v592 = vadd.f32 %v500, %v560
    %v593 = vadd.f32 %v501, %v561
    %v594 = vadd.f32 %v502, %v562
    %v595 = vadd.f32 %v503, %v563
    %v596 = vadd.f32 %v504, %v564
    %v597 = vadd.f32 %v505, %v565
    %v598 = vadd.f32 %v506, %v566
    %v599 = vadd.f32 %v507, %v567
    %v600 = vadd.f32 %v508, %v568
    %v601 = vadd.f32 %v509, %v569
    %v602 = vadd.f32 %v510, %v570
    %v603 = vadd.f32 %v511, %v571
    %604 = vrot.lane.b32.xlu0 %v338, 127
    %v605 = vpop.permute.xlu0 %604
    %606 = vrot.lane.b32.xlu0 %v339, 127
    %v607 = vpop.permute.xlu0 %606
    %608 = vrot.lane.b32.xlu0 %v340, 127
    %v609 = vpop.permute.xlu0 %608
    %610 = vrot.lane.b32.xlu0 %v341, 127
    %v611 = vpop.permute.xlu0 %610
    %612 = vrot.lane.b32.xlu0 %v342, 127
    %v613 = vpop.permute.xlu0 %612
    %614 = vrot.lane.b32.xlu0 %v343, 127
    %v615 = vpop.permute.xlu0 %614
    %616 = vrot.lane.b32.xlu0 %v344, 127
    %v617 = vpop.permute.xlu0 %616
    %618 = vrot.lane.b32.xlu0 %v345, 127
    %v619 = vpop.permute.xlu0 %618
    %vm620 = vcmp.lt.s32.totalorder %v347, 127
    %v621 = vsel %vm620, %v617, %v619
    %v622 = vsel %vm620, %v615, %v617
    %v623 = vsel %vm620, %v613, %v615
    %v624 = vsel %vm620, %v611, %v613
    %v625 = vsel %vm620, %v609, %v611
    %v626 = vsel %vm620, %v607, %v609
    %v627 = vsel %vm620, %v605, %v607
    %v628 = vsel %vm620, %v619, %v605
    %v629 = vsel %vm371, 0.0, %v627
    %v630 = vsel %vm372, 0.0, %v626
    %v631 = vsel %vm373, 0.0, %v625
    %v632 = vsel %vm374, 0.0, %v624
    %v633 = vsel %vm375, 0.0, %v623
    %v634 = vsel %vm376, 0.0, %v622
    %v635 = vsel %vm377, 0.0, %v621
    %v636 = vsel %vm378, 0.0, %v628
    %638 = vset.pattern.permute.xlu0 0
    %639 = vperm.xlu0 %638, %v387
    %v640 = vpop.permute.xlu0 %639
    %643 = vset.pattern.permute.xlu0 0
    %644 = vperm.xlu0 %643, %v388
    %v645 = vpop.permute.xlu0 %644
    %648 = vset.pattern.permute.xlu0 0
    %649 = vperm.xlu0 %648, %v389
    %v650 = vpop.permute.xlu0 %649
    %653 = vset.pattern.permute.xlu0 0
    %654 = vperm.xlu0 %653, %v390
    %v655 = vpop.permute.xlu0 %654
    %v657 = vperm.slane %v629, 0
    %v658 = vperm.slane %v630, 0
    %v659 = vperm.slane %v631, 0
    %v660 = vperm.slane %v632, 0
    %v661 = vperm.slane %v633, 0
    %v662 = vperm.slane %v634, 0
    %v663 = vperm.slane %v635, 0
    %v664 = vperm.slane %v636, 0
    %v665 = vmul.f32 %v640, %v657
    %v666 = vmul.f32 %v640, %v658
    %v667 = vmul.f32 %v640, %v659
    %v668 = vmul.f32 %v640, %v660
    %v669 = vmul.f32 %v640, %v661
    %v670 = vmul.f32 %v640, %v662
    %v671 = vmul.f32 %v640, %v663
    %v672 = vmul.f32 %v640, %v664
    %v673 = vmul.f32 %v645, %v657
    %v674 = vmul.f32 %v645, %v658
    %v675 = vmul.f32 %v645, %v659
    %v676 = vmul.f32 %v645, %v660
    %v677 = vmul.f32 %v645, %v661
    %v678 = vmul.f32 %v645, %v662
    %v679 = vmul.f32 %v645, %v663
    %v680 = vmul.f32 %v645, %v664
    %v681 = vmul.f32 %v650, %v657
    %v682 = vmul.f32 %v650, %v658
    %v683 = vmul.f32 %v650, %v659
    %v684 = vmul.f32 %v650, %v660
    %v685 = vmul.f32 %v650, %v661
    %v686 = vmul.f32 %v650, %v662
    %v687 = vmul.f32 %v650, %v663
    %v688 = vmul.f32 %v650, %v664
    %v689 = vmul.f32 %v655, %v657
    %v690 = vmul.f32 %v655, %v658
    %v691 = vmul.f32 %v655, %v659
    %v692 = vmul.f32 %v655, %v660
    %v693 = vmul.f32 %v655, %v661
    %v694 = vmul.f32 %v655, %v662
    %v695 = vmul.f32 %v655, %v663
    %v696 = vmul.f32 %v655, %v664
    %v697 = vadd.f32 %v572, %v665
    %v698 = vadd.f32 %v573, %v666
    %v699 = vadd.f32 %v574, %v667
    %v700 = vadd.f32 %v575, %v668
    %v701 = vadd.f32 %v576, %v669
    %v702 = vadd.f32 %v577, %v670
    %v703 = vadd.f32 %v578, %v671
    %v704 = vadd.f32 %v579, %v672
    %v705 = vadd.f32 %v580, %v673
    %v706 = vadd.f32 %v581, %v674
    %v707 = vadd.f32 %v582, %v675
    %v708 = vadd.f32 %v583, %v676
    %v709 = vadd.f32 %v584, %v677
    %v710 = vadd.f32 %v585, %v678
    %v711 = vadd.f32 %v586, %v679
    %v712 = vadd.f32 %v587, %v680
    %v713 = vadd.f32 %v588, %v681
    %v714 = vadd.f32 %v589, %v682
    %v715 = vadd.f32 %v590, %v683
    %v716 = vadd.f32 %v591, %v684
    %v717 = vadd.f32 %v592, %v685
    %v718 = vadd.f32 %v593, %v686
    %v719 = vadd.f32 %v594, %v687
    %v720 = vadd.f32 %v595, %v688
    %v721 = vadd.f32 %v596, %v689
    %v722 = vadd.f32 %v597, %v690
    %v723 = vadd.f32 %v598, %v691
    %v724 = vadd.f32 %v599, %v692
    %v725 = vadd.f32 %v600, %v693
    %v726 = vadd.f32 %v601, %v694
    %v727 = vadd.f32 %v602, %v695
    %v728 = vadd.f32 %v603, %v696
    %730 = vset.pattern.permute.xlu0 0
    %731 = vperm.xlu0 %730, %v391
    %v732 = vpop.permute.xlu0 %731
    %735 = vset.pattern.permute.xlu0 0
    %736 = vperm.xlu0 %735, %v392
    %v737 = vpop.permute.xlu0 %736
    %740 = vset.pattern.permute.xlu0 0
    %741 = vperm.xlu0 %740, %v393
    %v742 = vpop.permute.xlu0 %741
    %745 = vset.pattern.permute.xlu0 0
    %746 = vperm.xlu0 %745, %v394
    %v747 = vpop.permute.xlu0 %746
    %v749 = vadd.f32 %v697, %v732
    %v750 = vadd.f32 %v698, %v732
    %v751 = vadd.f32 %v699, %v732
    %v752 = vadd.f32 %v700, %v732
    %v753 = vadd.f32 %v701, %v732
    %v754 = vadd.f32 %v702, %v732
    %v755 = vadd.f32 %v703, %v732
    %v756 = vadd.f32 %v704, %v732
    %v757 = vadd.f32 %v705, %v737
    %v758 = vadd.f32 %v706, %v737
    %v759 = vadd.f32 %v707, %v737
    %v760 = vadd.f32 %v708, %v737
    %v761 = vadd.f32 %v709, %v737
    %v762 = vadd.f32 %v710, %v737
    %v763 = vadd.f32 %v711, %v737
    %v764 = vadd.f32 %v712, %v737
    %v765 = vadd.f32 %v713, %v742
    %v766 = vadd.f32 %v714, %v742
    %v767 = vadd.f32 %v715, %v742
    %v768 = vadd.f32 %v716, %v742
    %v769 = vadd.f32 %v717, %v742
    %v770 = vadd.f32 %v718, %v742
    %v771 = vadd.f32 %v719, %v742
    %v772 = vadd.f32 %v720, %v742
    %v773 = vadd.f32 %v721, %v747
    %v774 = vadd.f32 %v722, %v747
    %v775 = vadd.f32 %v723, %v747
    %v776 = vadd.f32 %v724, %v747
    %v777 = vadd.f32 %v725, %v747
    %v778 = vadd.f32 %v726, %v747
    %v779 = vadd.f32 %v727, %v747
    %v780 = vadd.f32 %v728, %v747
    %vm781 = vcmp.ge.f32.partialorder %v749, 0.0
    %vm782 = vcmp.ge.f32.partialorder %v750, 0.0
    %vm783 = vcmp.ge.f32.partialorder %v751, 0.0
    %vm784 = vcmp.ge.f32.partialorder %v752, 0.0
    %vm785 = vcmp.ge.f32.partialorder %v753, 0.0
    %vm786 = vcmp.ge.f32.partialorder %v754, 0.0
    %vm787 = vcmp.ge.f32.partialorder %v755, 0.0
    %vm788 = vcmp.ge.f32.partialorder %v756, 0.0
    %vm789 = vcmp.ge.f32.partialorder %v757, 0.0
    %vm790 = vcmp.ge.f32.partialorder %v758, 0.0
    %vm791 = vcmp.ge.f32.partialorder %v759, 0.0
    %vm792 = vcmp.ge.f32.partialorder %v760, 0.0
    %vm793 = vcmp.ge.f32.partialorder %v761, 0.0
    %vm794 = vcmp.ge.f32.partialorder %v762, 0.0
    %vm795 = vcmp.ge.f32.partialorder %v763, 0.0
    %vm796 = vcmp.ge.f32.partialorder %v764, 0.0
    %vm797 = vcmp.ge.f32.partialorder %v765, 0.0
    %vm798 = vcmp.ge.f32.partialorder %v766, 0.0
    %vm799 = vcmp.ge.f32.partialorder %v767, 0.0
    %vm800 = vcmp.ge.f32.partialorder %v768, 0.0
    %vm801 = vcmp.ge.f32.partialorder %v769, 0.0
    %vm802 = vcmp.ge.f32.partialorder %v770, 0.0
    %vm803 = vcmp.ge.f32.partialorder %v771, 0.0
    %vm804 = vcmp.ge.f32.partialorder %v772, 0.0
    %vm805 = vcmp.ge.f32.partialorder %v773, 0.0
    %vm806 = vcmp.ge.f32.partialorder %v774, 0.0
    %vm807 = vcmp.ge.f32.partialorder %v775, 0.0
    %vm808 = vcmp.ge.f32.partialorder %v776, 0.0
    %vm809 = vcmp.ge.f32.partialorder %v777, 0.0
    %vm810 = vcmp.ge.f32.partialorder %v778, 0.0
    %vm811 = vcmp.ge.f32.partialorder %v779, 0.0
    %vm812 = vcmp.ge.f32.partialorder %v780, 0.0
    %v813 = vmul.f32 %v749, 0.01
    %v814 = vmul.f32 %v750, 0.01
    %v815 = vmul.f32 %v751, 0.01
    %v816 = vmul.f32 %v752, 0.01
    %v817 = vmul.f32 %v753, 0.01
    %v818 = vmul.f32 %v754, 0.01
    %v819 = vmul.f32 %v755, 0.01
    %v820 = vmul.f32 %v756, 0.01
    %v821 = vmul.f32 %v757, 0.01
    %v822 = vmul.f32 %v758, 0.01
    %v823 = vmul.f32 %v759, 0.01
    %v824 = vmul.f32 %v760, 0.01
    %v825 = vmul.f32 %v761, 0.01
    %v826 = vmul.f32 %v762, 0.01
    %v827 = vmul.f32 %v763, 0.01
    %v828 = vmul.f32 %v764, 0.01
    %v829 = vmul.f32 %v765, 0.01
    %v830 = vmul.f32 %v766, 0.01
    %v831 = vmul.f32 %v767, 0.01
    %v832 = vmul.f32 %v768, 0.01
    %v833 = vmul.f32 %v769, 0.01
    %v834 = vmul.f32 %v770, 0.01
    %v835 = vmul.f32 %v771, 0.01
    %v836 = vmul.f32 %v772, 0.01
    %v837 = vmul.f32 %v773, 0.01
    %v838 = vmul.f32 %v774, 0.01
    %v839 = vmul.f32 %v775, 0.01
    %v840 = vmul.f32 %v776, 0.01
    %v841 = vmul.f32 %v777, 0.01
    %v842 = vmul.f32 %v778, 0.01
    %v843 = vmul.f32 %v779, 0.01
    %v844 = vmul.f32 %v780, 0.01
    %v845 = vsel %vm781, %v749, %v813
    %v846 = vsel %vm782, %v750, %v814
    %v847 = vsel %vm783, %v751, %v815
    %v848 = vsel %vm784, %v752, %v816
    %v849 = vsel %vm785, %v753, %v817
    %v850 = vsel %vm786, %v754, %v818
    %v851 = vsel %vm787, %v755, %v819
    %v852 = vsel %vm788, %v756, %v820
    %v853 = vsel %vm789, %v757, %v821
    %v854 = vsel %vm790, %v758, %v822
    %v855 = vsel %vm791, %v759, %v823
    %v856 = vsel %vm792, %v760, %v824
    %v857 = vsel %vm793, %v761, %v825
    %v858 = vsel %vm794, %v762, %v826
    %v859 = vsel %vm795, %v763, %v827
    %v860 = vsel %vm796, %v764, %v828
    %v861 = vsel %vm797, %v765, %v829
    %v862 = vsel %vm798, %v766, %v830
    %v863 = vsel %vm799, %v767, %v831
    %v864 = vsel %vm800, %v768, %v832
    %v865 = vsel %vm801, %v769, %v833
    %v866 = vsel %vm802, %v770, %v834
    %v867 = vsel %vm803, %v771, %v835
    %v868 = vsel %vm804, %v772, %v836
    %v869 = vsel %vm805, %v773, %v837
    %v870 = vsel %vm806, %v774, %v838
    %v871 = vsel %vm807, %v775, %v839
    %v872 = vsel %vm808, %v776, %v840
    %v873 = vsel %vm809, %v777, %v841
    %v874 = vsel %vm810, %v778, %v842
    %v875 = vsel %vm811, %v779, %v843
    %v876 = vsel %vm812, %v780, %v844
    %877 = vrot.lane.b32.xlu0 %v845, 1
    %v878 = vpop.permute.xlu0 %877
    %879 = vrot.lane.b32.xlu0 %v853, 1
    %v880 = vpop.permute.xlu0 %879
    %881 = vrot.lane.b32.xlu0 %v861, 1
    %v882 = vpop.permute.xlu0 %881
    %883 = vrot.lane.b32.xlu0 %v869, 1
    %v884 = vpop.permute.xlu0 %883
    %885 = vrot.lane.b32.xlu0 %v846, 1
    %v886 = vpop.permute.xlu0 %885
    %887 = vrot.lane.b32.xlu0 %v854, 1
    %v888 = vpop.permute.xlu0 %887
    %889 = vrot.lane.b32.xlu0 %v862, 1
    %v890 = vpop.permute.xlu0 %889
    %891 = vrot.lane.b32.xlu0 %v870, 1
    %v892 = vpop.permute.xlu0 %891
    %893 = vrot.lane.b32.xlu0 %v847, 1
    %v894 = vpop.permute.xlu0 %893
    %895 = vrot.lane.b32.xlu0 %v855, 1
    %v896 = vpop.permute.xlu0 %895
    %897 = vrot.lane.b32.xlu0 %v863, 1
    %v898 = vpop.permute.xlu0 %897
    %899 = vrot.lane.b32.xlu0 %v871, 1
    %v900 = vpop.permute.xlu0 %899
    %901 = vrot.lane.b32.xlu0 %v848, 1
    %v902 = vpop.permute.xlu0 %901
    %903 = vrot.lane.b32.xlu0 %v856, 1
    %v904 = vpop.permute.xlu0 %903
    %905 = vrot.lane.b32.xlu0 %v864, 1
    %v906 = vpop.permute.xlu0 %905
    %907 = vrot.lane.b32.xlu0 %v872, 1
    %v908 = vpop.permute.xlu0 %907
    %909 = vrot.lane.b32.xlu0 %v849, 1
    %v910 = vpop.permute.xlu0 %909
    %911 = vrot.lane.b32.xlu0 %v857, 1
    %v912 = vpop.permute.xlu0 %911
    %913 = vrot.lane.b32.xlu0 %v865, 1
    %v914 = vpop.permute.xlu0 %913
    %915 = vrot.lane.b32.xlu0 %v873, 1
    %v916 = vpop.permute.xlu0 %915
    %917 = vrot.lane.b32.xlu0 %v850, 1
    %v918 = vpop.permute.xlu0 %917
    %919 = vrot.lane.b32.xlu0 %v858, 1
    %v920 = vpop.permute.xlu0 %919
    %921 = vrot.lane.b32.xlu0 %v866, 1
    %v922 = vpop.permute.xlu0 %921
    %923 = vrot.lane.b32.xlu0 %v874, 1
    %v924 = vpop.permute.xlu0 %923
    %925 = vrot.lane.b32.xlu0 %v851, 1
    %v926 = vpop.permute.xlu0 %925
    %927 = vrot.lane.b32.xlu0 %v859, 1
    %v928 = vpop.permute.xlu0 %927
    %929 = vrot.lane.b32.xlu0 %v867, 1
    %v930 = vpop.permute.xlu0 %929
    %931 = vrot.lane.b32.xlu0 %v875, 1
    %v932 = vpop.permute.xlu0 %931
    %933 = vrot.lane.b32.xlu0 %v852, 1
    %v934 = vpop.permute.xlu0 %933
    %935 = vrot.lane.b32.xlu0 %v860, 1
    %v936 = vpop.permute.xlu0 %935
    %937 = vrot.lane.b32.xlu0 %v868, 1
    %v938 = vpop.permute.xlu0 %937
    %939 = vrot.lane.b32.xlu0 %v876, 1
    %v940 = vpop.permute.xlu0 %939
    %v941 = vsel %vm435, %v926, %v934
    %v942 = vsel %vm435, %v928, %v936
    %v943 = vsel %vm435, %v930, %v938
    %v944 = vsel %vm435, %v932, %v940
    %v945 = vsel %vm435, %v918, %v926
    %v946 = vsel %vm435, %v920, %v928
    %v947 = vsel %vm435, %v922, %v930
    %v948 = vsel %vm435, %v924, %v932
    %v949 = vsel %vm435, %v910, %v918
    %v950 = vsel %vm435, %v912, %v920
    %v951 = vsel %vm435, %v914, %v922
    %v952 = vsel %vm435, %v916, %v924
    %v953 = vsel %vm435, %v902, %v910
    %v954 = vsel %vm435, %v904, %v912
    %v955 = vsel %vm435, %v906, %v914
    %v956 = vsel %vm435, %v908, %v916
    %v957 = vsel %vm435, %v894, %v902
    %v958 = vsel %vm435, %v896, %v904
    %v959 = vsel %vm435, %v898, %v906
    %v960 = vsel %vm435, %v900, %v908
    %v961 = vsel %vm435, %v886, %v894
    %v962 = vsel %vm435, %v888, %v896
    %v963 = vsel %vm435, %v890, %v898
    %v964 = vsel %vm435, %v892, %v900
    %v965 = vsel %vm435, %v878, %v886
    %v966 = vsel %vm435, %v880, %v888
    %v967 = vsel %vm435, %v882, %v890
    %v968 = vsel %vm435, %v884, %v892
    %v969 = vsel %vm435, %v934, %v878
    %v970 = vsel %vm435, %v936, %v880
    %v971 = vsel %vm435, %v938, %v882
    %v972 = vsel %vm435, %v940, %v884
    %v973 = vsel %vm363, 1, 0
    %v974 = vsel %vm364, 1, 0
    %v975 = vsel %vm365, 1, 0
    %v976 = vsel %vm366, 1, 0
    %v977 = vsel %vm367, 1, 0
    %v978 = vsel %vm368, 1, 0
    %v979 = vsel %vm369, 1, 0
    %v980 = vsel %vm370, 1, 0
    %vm981 = vcmp.eq.s32.totalorder %v973, 1
    %vm982 = vcmp.eq.s32.totalorder %v974, 1
    %vm983 = vcmp.eq.s32.totalorder %v975, 1
    %vm984 = vcmp.eq.s32.totalorder %v976, 1
    %vm985 = vcmp.eq.s32.totalorder %v977, 1
    %vm986 = vcmp.eq.s32.totalorder %v978, 1
    %vm987 = vcmp.eq.s32.totalorder %v979, 1
    %vm988 = vcmp.eq.s32.totalorder %v980, 1
    %v989 = vsel %vm981, 0.0, %v969
    %v990 = vsel %vm982, 0.0, %v965
    %v991 = vsel %vm983, 0.0, %v961
    %v992 = vsel %vm984, 0.0, %v957
    %v993 = vsel %vm985, 0.0, %v953
    %v994 = vsel %vm986, 0.0, %v949
    %v995 = vsel %vm987, 0.0, %v945
    %v996 = vsel %vm988, 0.0, %v941
    %v997 = vsel %vm981, 0.0, %v970
    %v998 = vsel %vm982, 0.0, %v966
    %v999 = vsel %vm983, 0.0, %v962
    %v1000 = vsel %vm984, 0.0, %v958
    %v1001 = vsel %vm985, 0.0, %v954
    %v1002 = vsel %vm986, 0.0, %v950
    %v1003 = vsel %vm987, 0.0, %v946
    %v1004 = vsel %vm988, 0.0, %v942
    %v1005 = vsel %vm981, 0.0, %v971
    %v1006 = vsel %vm982, 0.0, %v967
    %v1007 = vsel %vm983, 0.0, %v963
    %v1008 = vsel %vm984, 0.0, %v959
    %v1009 = vsel %vm985, 0.0, %v955
    %v1010 = vsel %vm986, 0.0, %v951
    %v1011 = vsel %vm987, 0.0, %v947
    %v1012 = vsel %vm988, 0.0, %v943
    %v1013 = vsel %vm981, 0.0, %v972
    %v1014 = vsel %vm982, 0.0, %v968
    %v1015 = vsel %vm983, 0.0, %v964
    %v1016 = vsel %vm984, 0.0, %v960
    %v1017 = vsel %vm985, 0.0, %v956
    %v1018 = vsel %vm986, 0.0, %v952
    %v1019 = vsel %vm987, 0.0, %v948
    %v1020 = vsel %vm988, 0.0, %v944
    %1021 = vrot.lane.b32.xlu0 %v845, 127
    %v1022 = vpop.permute.xlu0 %1021
    %1023 = vrot.lane.b32.xlu0 %v853, 127
    %v1024 = vpop.permute.xlu0 %1023
    %1025 = vrot.lane.b32.xlu0 %v861, 127
    %v1026 = vpop.permute.xlu0 %1025
    %1027 = vrot.lane.b32.xlu0 %v869, 127
    %v1028 = vpop.permute.xlu0 %1027
    %1029 = vrot.lane.b32.xlu0 %v846, 127
    %v1030 = vpop.permute.xlu0 %1029
    %1031 = vrot.lane.b32.xlu0 %v854, 127
    %v1032 = vpop.permute.xlu0 %1031
    %1033 = vrot.lane.b32.xlu0 %v862, 127
    %v1034 = vpop.permute.xlu0 %1033
    %1035 = vrot.lane.b32.xlu0 %v870, 127
    %v1036 = vpop.permute.xlu0 %1035
    %1037 = vrot.lane.b32.xlu0 %v847, 127
    %v1038 = vpop.permute.xlu0 %1037
    %1039 = vrot.lane.b32.xlu0 %v855, 127
    %v1040 = vpop.permute.xlu0 %1039
    %1041 = vrot.lane.b32.xlu0 %v863, 127
    %v1042 = vpop.permute.xlu0 %1041
    %1043 = vrot.lane.b32.xlu0 %v871, 127
    %v1044 = vpop.permute.xlu0 %1043
    %1045 = vrot.lane.b32.xlu0 %v848, 127
    %v1046 = vpop.permute.xlu0 %1045
    %1047 = vrot.lane.b32.xlu0 %v856, 127
    %v1048 = vpop.permute.xlu0 %1047
    %1049 = vrot.lane.b32.xlu0 %v864, 127
    %v1050 = vpop.permute.xlu0 %1049
    %1051 = vrot.lane.b32.xlu0 %v872, 127
    %v1052 = vpop.permute.xlu0 %1051
    %1053 = vrot.lane.b32.xlu0 %v849, 127
    %v1054 = vpop.permute.xlu0 %1053
    %1055 = vrot.lane.b32.xlu0 %v857, 127
    %v1056 = vpop.permute.xlu0 %1055
    %1057 = vrot.lane.b32.xlu0 %v865, 127
    %v1058 = vpop.permute.xlu0 %1057
    %1059 = vrot.lane.b32.xlu0 %v873, 127
    %v1060 = vpop.permute.xlu0 %1059
    %1061 = vrot.lane.b32.xlu0 %v850, 127
    %v1062 = vpop.permute.xlu0 %1061
    %1063 = vrot.lane.b32.xlu0 %v858, 127
    %v1064 = vpop.permute.xlu0 %1063
    %1065 = vrot.lane.b32.xlu0 %v866, 127
    %v1066 = vpop.permute.xlu0 %1065
    %1067 = vrot.lane.b32.xlu0 %v874, 127
    %v1068 = vpop.permute.xlu0 %1067
    %1069 = vrot.lane.b32.xlu0 %v851, 127
    %v1070 = vpop.permute.xlu0 %1069
    %1071 = vrot.lane.b32.xlu0 %v859, 127
    %v1072 = vpop.permute.xlu0 %1071
    %1073 = vrot.lane.b32.xlu0 %v867, 127
    %v1074 = vpop.permute.xlu0 %1073
    %1075 = vrot.lane.b32.xlu0 %v875, 127
    %v1076 = vpop.permute.xlu0 %1075
    %1077 = vrot.lane.b32.xlu0 %v852, 127
    %v1078 = vpop.permute.xlu0 %1077
    %1079 = vrot.lane.b32.xlu0 %v860, 127
    %v1080 = vpop.permute.xlu0 %1079
    %1081 = vrot.lane.b32.xlu0 %v868, 127
    %v1082 = vpop.permute.xlu0 %1081
    %1083 = vrot.lane.b32.xlu0 %v876, 127
    %v1084 = vpop.permute.xlu0 %1083
    %v1085 = vsel %vm620, %v1070, %v1078
    %v1086 = vsel %vm620, %v1072, %v1080
    %v1087 = vsel %vm620, %v1074, %v1082
    %v1088 = vsel %vm620, %v1076, %v1084
    %v1089 = vsel %vm620, %v1062, %v1070
    %v1090 = vsel %vm620, %v1064, %v1072
    %v1091 = vsel %vm620, %v1066, %v1074
    %v1092 = vsel %vm620, %v1068, %v1076
    %v1093 = vsel %vm620, %v1054, %v1062
    %v1094 = vsel %vm620, %v1056, %v1064
    %v1095 = vsel %vm620, %v1058, %v1066
    %v1096 = vsel %vm620, %v1060, %v1068
    %v1097 = vsel %vm620, %v1046, %v1054
    %v1098 = vsel %vm620, %v1048, %v1056
    %v1099 = vsel %vm620, %v1050, %v1058
    %v1100 = vsel %vm620, %v1052, %v1060
    %v1101 = vsel %vm620, %v1038, %v1046
    %v1102 = vsel %vm620, %v1040, %v1048
    %v1103 = vsel %vm620, %v1042, %v1050
    %v1104 = vsel %vm620, %v1044, %v1052
    %v1105 = vsel %vm620, %v1030, %v1038
    %v1106 = vsel %vm620, %v1032, %v1040
    %v1107 = vsel %vm620, %v1034, %v1042
    %v1108 = vsel %vm620, %v1036, %v1044
    %v1109 = vsel %vm620, %v1022, %v1030
    %v1110 = vsel %vm620, %v1024, %v1032
    %v1111 = vsel %vm620, %v1026, %v1034
    %v1112 = vsel %vm620, %v1028, %v1036
    %v1113 = vsel %vm620, %v1078, %v1022
    %v1114 = vsel %vm620, %v1080, %v1024
    %v1115 = vsel %vm620, %v1082, %v1026
    %v1116 = vsel %vm620, %v1084, %v1028
    %v1117 = vsel %vm371, 1, 0
    %v1118 = vsel %vm372, 1, 0
    %v1119 = vsel %vm373, 1, 0
    %v1120 = vsel %vm374, 1, 0
    %v1121 = vsel %vm375, 1, 0
    %v1122 = vsel %vm376, 1, 0
    %v1123 = vsel %vm377, 1, 0
    %v1124 = vsel %vm378, 1, 0
    %vm1125 = vcmp.eq.s32.totalorder %v1117, 1
    %vm1126 = vcmp.eq.s32.totalorder %v1118, 1
    %vm1127 = vcmp.eq.s32.totalorder %v1119, 1
    %vm1128 = vcmp.eq.s32.totalorder %v1120, 1
    %vm1129 = vcmp.eq.s32.totalorder %v1121, 1
    %vm1130 = vcmp.eq.s32.totalorder %v1122, 1
    %vm1131 = vcmp.eq.s32.totalorder %v1123, 1
    %vm1132 = vcmp.eq.s32.totalorder %v1124, 1
    %v1133 = vsel %vm1125, 0.0, %v1109
    %v1134 = vsel %vm1126, 0.0, %v1105
    %v1135 = vsel %vm1127, 0.0, %v1101
    %v1136 = vsel %vm1128, 0.0, %v1097
    %v1137 = vsel %vm1129, 0.0, %v1093
    %v1138 = vsel %vm1130, 0.0, %v1089
    %v1139 = vsel %vm1131, 0.0, %v1085
    %v1140 = vsel %vm1132, 0.0, %v1113
    %v1141 = vsel %vm1125, 0.0, %v1110
    %v1142 = vsel %vm1126, 0.0, %v1106
    %v1143 = vsel %vm1127, 0.0, %v1102
    %v1144 = vsel %vm1128, 0.0, %v1098
    %v1145 = vsel %vm1129, 0.0, %v1094
    %v1146 = vsel %vm1130, 0.0, %v1090
    %v1147 = vsel %vm1131, 0.0, %v1086
    %v1148 = vsel %vm1132, 0.0, %v1114
    %v1149 = vsel %vm1125, 0.0, %v1111
    %v1150 = vsel %vm1126, 0.0, %v1107
    %v1151 = vsel %vm1127, 0.0, %v1103
    %v1152 = vsel %vm1128, 0.0, %v1099
    %v1153 = vsel %vm1129, 0.0, %v1095
    %v1154 = vsel %vm1130, 0.0, %v1091
    %v1155 = vsel %vm1131, 0.0, %v1087
    %v1156 = vsel %vm1132, 0.0, %v1115
    %v1157 = vsel %vm1125, 0.0, %v1112
    %v1158 = vsel %vm1126, 0.0, %v1108
    %v1159 = vsel %vm1127, 0.0, %v1104
    %v1160 = vsel %vm1128, 0.0, %v1100
    %v1161 = vsel %vm1129, 0.0, %v1096
    %v1162 = vsel %vm1130, 0.0, %v1092
    %v1163 = vsel %vm1131, 0.0, %v1088
    %v1164 = vsel %vm1132, 0.0, %v1116
    %v1165 = vld [vmem:[%s3] sm:$0xff]
    %v1166 = vld [vmem:[%s3 + $0x8] sm:$0xff]
    %v1167 = vld [vmem:[%s3 + $0x10] sm:$0xff]
    %v1168 = vld [vmem:[%s3 + $0x18] sm:$0xff]
    %v1169 = vld [vmem:[%s3 + $0x20] sm:$0xff]
    %v1170 = vld [vmem:[%s3 + $0x28] sm:$0xff]
    %v1171 = vld [vmem:[%s3 + $0x30] sm:$0xff]
    %v1172 = vld [vmem:[%s3 + $0x38] sm:$0xff]
    %1174 = vset.pattern.permute.xlu0 0
    %1175 = vperm.xlu0 %1174, %v395
    %v1176 = vpop.permute.xlu0 %1175
    %1179 = vset.pattern.permute.xlu0 0
    %1180 = vperm.xlu0 %1179, %v396
    %v1181 = vpop.permute.xlu0 %1180
    %1184 = vset.pattern.permute.xlu0 0
    %1185 = vperm.xlu0 %1184, %v397
    %v1186 = vpop.permute.xlu0 %1185
    %1189 = vset.pattern.permute.xlu0 0
    %1190 = vperm.xlu0 %1189, %v398
    %v1191 = vpop.permute.xlu0 %1190
    %1194 = vset.pattern.permute.xlu0 0
    %1195 = vperm.xlu0 %1194, %v399
    %v1196 = vpop.permute.xlu0 %1195
    %1199 = vset.pattern.permute.xlu0 0
    %1200 = vperm.xlu0 %1199, %v400
    %v1201 = vpop.permute.xlu0 %1200
    %1204 = vset.pattern.permute.xlu0 0
    %1205 = vperm.xlu0 %1204, %v401
    %v1206 = vpop.permute.xlu0 %1205
    %1209 = vset.pattern.permute.xlu0 0
    %1210 = vperm.xlu0 %1209, %v402
    %v1211 = vpop.permute.xlu0 %1210
    %vm1213 = vcmask 785408
    %v1215 = vsel %vm1213, %v1165, 0
    %v1218 = vsel %vm1213, %v1166, 0
    %v1221 = vsel %vm1213, %v1167, 0
    %v1224 = vsel %vm1213, %v1168, 0
    %v1227 = vsel %vm1213, %v1169, 0
    %v1230 = vsel %vm1213, %v1170, 0
    %v1233 = vsel %vm1213, %v1171, 0
    %v1236 = vsel %vm1213, %v1172, 0
    %1238 = vmatpush.msra.mxu0 0.0
    %1239 = vmatpush.msra.mxu0 0.0
    %1240 = vmatpush.msra.mxu0 0.0
    %1241 = vmatpush.msra.mxu0 0.0
    %1242 = vmatpush.msra.mxu0 %v1157
    %1243 = vmatpush.msra.mxu0 %v1149
    %1244 = vmatpush.msra.mxu0 %v1141
    %1245 = vmatpush.msra.mxu0 %v1133
    %1246 = vmatpush.msra.mxu0 %v869
    %1247 = vmatpush.msra.mxu0 %v861
    %1248 = vmatpush.msra.mxu0 %v853
    %1249 = vmatpush.msra.mxu0 %v845
    %1250 = vmatpush.msra.mxu0 %v1013
    %1251 = vmatpush.msra.mxu0 %v1005
    %1252 = vmatpush.msra.mxu0 %v997
    %1253 = vmatpush.msra.mxu0 %v989
    %1254 = vmatmul.f32.gmra.mxu0 %v1215
    %v1255 = vpop.f32.mrf.mxu0
    %v1256 = vadd.f32 %v1176, %v1255
    %1257 = vmatmul.f32.gmra.mxu0 %v1218
    %v1258 = vpop.f32.mrf.mxu0
    %v1259 = vadd.f32 %v1181, %v1258
    %1260 = vmatmul.f32.gmra.mxu0 %v1221
    %v1261 = vpop.f32.mrf.mxu0
    %v1262 = vadd.f32 %v1186, %v1261
    %1263 = vmatmul.f32.gmra.mxu0 %v1224
    %v1264 = vpop.f32.mrf.mxu0
    %v1265 = vadd.f32 %v1191, %v1264
    %1266 = vmatmul.f32.gmra.mxu0 %v1227
    %v1267 = vpop.f32.mrf.mxu0
    %v1268 = vadd.f32 %v1196, %v1267
    %1269 = vmatmul.f32.gmra.mxu0 %v1230
    %v1270 = vpop.f32.mrf.mxu0
    %v1271 = vadd.f32 %v1201, %v1270
    %1272 = vmatmul.f32.gmra.mxu0 %v1233
    %v1273 = vpop.f32.mrf.mxu0
    %v1274 = vadd.f32 %v1206, %v1273
    %1275 = vmatmul.f32.gmra.mxu0 %v1236
    %v1276 = vpop.f32.mrf.mxu0
    %v1277 = vadd.f32 %v1211, %v1276
    %1278 = vdwg.mxu0
    %1279 = vmatpush.msra.mxu0 0.0
    %1280 = vmatpush.msra.mxu0 0.0
    %1281 = vmatpush.msra.mxu0 0.0
    %1282 = vmatpush.msra.mxu0 0.0
    %1283 = vmatpush.msra.mxu0 %v1158
    %1284 = vmatpush.msra.mxu0 %v1150
    %1285 = vmatpush.msra.mxu0 %v1142
    %1286 = vmatpush.msra.mxu0 %v1134
    %1287 = vmatpush.msra.mxu0 %v870
    %1288 = vmatpush.msra.mxu0 %v862
    %1289 = vmatpush.msra.mxu0 %v854
    %1290 = vmatpush.msra.mxu0 %v846
    %1291 = vmatpush.msra.mxu0 %v1014
    %1292 = vmatpush.msra.mxu0 %v1006
    %1293 = vmatpush.msra.mxu0 %v998
    %1294 = vmatpush.msra.mxu0 %v990
    %1295 = vmatmul.f32.gmra.mxu0 %v1215
    %v1296 = vpop.f32.mrf.mxu0
    %v1297 = vadd.f32 %v1176, %v1296
    %1298 = vmatmul.f32.gmra.mxu0 %v1218
    %v1299 = vpop.f32.mrf.mxu0
    %v1300 = vadd.f32 %v1181, %v1299
    %1301 = vmatmul.f32.gmra.mxu0 %v1221
    %v1302 = vpop.f32.mrf.mxu0
    %v1303 = vadd.f32 %v1186, %v1302
    %1304 = vmatmul.f32.gmra.mxu0 %v1224
    %v1305 = vpop.f32.mrf.mxu0
    %v1306 = vadd.f32 %v1191, %v1305
    %1307 = vmatmul.f32.gmra.mxu0 %v1227
    %v1308 = vpop.f32.mrf.mxu0
    %v1309 = vadd.f32 %v1196, %v1308
    %1310 = vmatmul.f32.gmra.mxu0 %v1230
    %v1311 = vpop.f32.mrf.mxu0
    %v1312 = vadd.f32 %v1201, %v1311
    %1313 = vmatmul.f32.gmra.mxu0 %v1233
    %v1314 = vpop.f32.mrf.mxu0
    %v1315 = vadd.f32 %v1206, %v1314
    %1316 = vmatmul.f32.gmra.mxu0 %v1236
    %v1317 = vpop.f32.mrf.mxu0
    %v1318 = vadd.f32 %v1211, %v1317
    %1319 = vdwg.mxu0
    %1320 = vmatpush.msra.mxu0 0.0
    %1321 = vmatpush.msra.mxu0 0.0
    %1322 = vmatpush.msra.mxu0 0.0
    %1323 = vmatpush.msra.mxu0 0.0
    %1324 = vmatpush.msra.mxu0 %v1159
    %1325 = vmatpush.msra.mxu0 %v1151
    %1326 = vmatpush.msra.mxu0 %v1143
    %1327 = vmatpush.msra.mxu0 %v1135
    %1328 = vmatpush.msra.mxu0 %v871
    %1329 = vmatpush.msra.mxu0 %v863
    %1330 = vmatpush.msra.mxu0 %v855
    %1331 = vmatpush.msra.mxu0 %v847
    %1332 = vmatpush.msra.mxu0 %v1015
    %1333 = vmatpush.msra.mxu0 %v1007
    %1334 = vmatpush.msra.mxu0 %v999
    %1335 = vmatpush.msra.mxu0 %v991
    %1336 = vmatmul.f32.gmra.mxu0 %v1215
    %v1337 = vpop.f32.mrf.mxu0
    %v1338 = vadd.f32 %v1176, %v1337
    %1339 = vmatmul.f32.gmra.mxu0 %v1218
    %v1340 = vpop.f32.mrf.mxu0
    %v1341 = vadd.f32 %v1181, %v1340
    %1342 = vmatmul.f32.gmra.mxu0 %v1221
    %v1343 = vpop.f32.mrf.mxu0
    %v1344 = vadd.f32 %v1186, %v1343
    %1345 = vmatmul.f32.gmra.mxu0 %v1224
    %v1346 = vpop.f32.mrf.mxu0
    %v1347 = vadd.f32 %v1191, %v1346
    %1348 = vmatmul.f32.gmra.mxu0 %v1227
    %v1349 = vpop.f32.mrf.mxu0
    %v1350 = vadd.f32 %v1196, %v1349
    %1351 = vmatmul.f32.gmra.mxu0 %v1230
    %v1352 = vpop.f32.mrf.mxu0
    %v1353 = vadd.f32 %v1201, %v1352
    %1354 = vmatmul.f32.gmra.mxu0 %v1233
    %v1355 = vpop.f32.mrf.mxu0
    %v1356 = vadd.f32 %v1206, %v1355
    %1357 = vmatmul.f32.gmra.mxu0 %v1236
    %v1358 = vpop.f32.mrf.mxu0
    %v1359 = vadd.f32 %v1211, %v1358
    %1360 = vdwg.mxu0
    %1361 = vmatpush.msra.mxu0 0.0
    %1362 = vmatpush.msra.mxu0 0.0
    %1363 = vmatpush.msra.mxu0 0.0
    %1364 = vmatpush.msra.mxu0 0.0
    %1365 = vmatpush.msra.mxu0 %v1160
    %1366 = vmatpush.msra.mxu0 %v1152
    %1367 = vmatpush.msra.mxu0 %v1144
    %1368 = vmatpush.msra.mxu0 %v1136
    %1369 = vmatpush.msra.mxu0 %v872
    %1370 = vmatpush.msra.mxu0 %v864
    %1371 = vmatpush.msra.mxu0 %v856
    %1372 = vmatpush.msra.mxu0 %v848
    %1373 = vmatpush.msra.mxu0 %v1016
    %1374 = vmatpush.msra.mxu0 %v1008
    %1375 = vmatpush.msra.mxu0 %v1000
    %1376 = vmatpush.msra.mxu0 %v992
    %1377 = vmatmul.f32.gmra.mxu0 %v1215
    %v1378 = vpop.f32.mrf.mxu0
    %v1379 = vadd.f32 %v1176, %v1378
    %1380 = vmatmul.f32.gmra.mxu0 %v1218
    %v1381 = vpop.f32.mrf.mxu0
    %v1382 = vadd.f32 %v1181, %v1381
    %1383 = vmatmul.f32.gmra.mxu0 %v1221
    %v1384 = vpop.f32.mrf.mxu0
    %v1385 = vadd.f32 %v1186, %v1384
    %1386 = vmatmul.f32.gmra.mxu0 %v1224
    %v1387 = vpop.f32.mrf.mxu0
    %v1388 = vadd.f32 %v1191, %v1387
    %1389 = vmatmul.f32.gmra.mxu0 %v1227
    %v1390 = vpop.f32.mrf.mxu0
    %v1391 = vadd.f32 %v1196, %v1390
    %1392 = vmatmul.f32.gmra.mxu0 %v1230
    %v1393 = vpop.f32.mrf.mxu0
    %v1394 = vadd.f32 %v1201, %v1393
    %1395 = vmatmul.f32.gmra.mxu0 %v1233
    %v1396 = vpop.f32.mrf.mxu0
    %v1397 = vadd.f32 %v1206, %v1396
    %1398 = vmatmul.f32.gmra.mxu0 %v1236
    %v1399 = vpop.f32.mrf.mxu0
    %v1400 = vadd.f32 %v1211, %v1399
    %1401 = vdwg.mxu0
    %1402 = vmatpush.msra.mxu0 0.0
    %1403 = vmatpush.msra.mxu0 0.0
    %1404 = vmatpush.msra.mxu0 0.0
    %1405 = vmatpush.msra.mxu0 0.0
    %1406 = vmatpush.msra.mxu0 %v1161
    %1407 = vmatpush.msra.mxu0 %v1153
    %1408 = vmatpush.msra.mxu0 %v1145
    %1409 = vmatpush.msra.mxu0 %v1137
    %1410 = vmatpush.msra.mxu0 %v873
    %1411 = vmatpush.msra.mxu0 %v865
    %1412 = vmatpush.msra.mxu0 %v857
    %1413 = vmatpush.msra.mxu0 %v849
    %1414 = vmatpush.msra.mxu0 %v1017
    %1415 = vmatpush.msra.mxu0 %v1009
    %1416 = vmatpush.msra.mxu0 %v1001
    %1417 = vmatpush.msra.mxu0 %v993
    %1418 = vmatmul.f32.gmra.mxu0 %v1215
    %v1419 = vpop.f32.mrf.mxu0
    %v1420 = vadd.f32 %v1176, %v1419
    %1421 = vmatmul.f32.gmra.mxu0 %v1218
    %v1422 = vpop.f32.mrf.mxu0
    %v1423 = vadd.f32 %v1181, %v1422
    %1424 = vmatmul.f32.gmra.mxu0 %v1221
    %v1425 = vpop.f32.mrf.mxu0
    %v1426 = vadd.f32 %v1186, %v1425
    %1427 = vmatmul.f32.gmra.mxu0 %v1224
    %v1428 = vpop.f32.mrf.mxu0
    %v1429 = vadd.f32 %v1191, %v1428
    %1430 = vmatmul.f32.gmra.mxu0 %v1227
    %v1431 = vpop.f32.mrf.mxu0
    %v1432 = vadd.f32 %v1196, %v1431
    %1433 = vmatmul.f32.gmra.mxu0 %v1230
    %v1434 = vpop.f32.mrf.mxu0
    %v1435 = vadd.f32 %v1201, %v1434
    %1436 = vmatmul.f32.gmra.mxu0 %v1233
    %v1437 = vpop.f32.mrf.mxu0
    %v1438 = vadd.f32 %v1206, %v1437
    %1439 = vmatmul.f32.gmra.mxu0 %v1236
    %v1440 = vpop.f32.mrf.mxu0
    %v1441 = vadd.f32 %v1211, %v1440
    %1442 = vdwg.mxu0
    %1443 = vmatpush.msra.mxu0 0.0
    %1444 = vmatpush.msra.mxu0 0.0
    %1445 = vmatpush.msra.mxu0 0.0
    %1446 = vmatpush.msra.mxu0 0.0
    %1447 = vmatpush.msra.mxu0 %v1162
    %1448 = vmatpush.msra.mxu0 %v1154
    %1449 = vmatpush.msra.mxu0 %v1146
    %1450 = vmatpush.msra.mxu0 %v1138
    %1451 = vmatpush.msra.mxu0 %v874
    %1452 = vmatpush.msra.mxu0 %v866
    %1453 = vmatpush.msra.mxu0 %v858
    %1454 = vmatpush.msra.mxu0 %v850
    %1455 = vmatpush.msra.mxu0 %v1018
    %1456 = vmatpush.msra.mxu0 %v1010
    %1457 = vmatpush.msra.mxu0 %v1002
    %1458 = vmatpush.msra.mxu0 %v994
    %1459 = vmatmul.f32.gmra.mxu0 %v1215
    %v1460 = vpop.f32.mrf.mxu0
    %v1461 = vadd.f32 %v1176, %v1460
    %1462 = vmatmul.f32.gmra.mxu0 %v1218
    %v1463 = vpop.f32.mrf.mxu0
    %v1464 = vadd.f32 %v1181, %v1463
    %1465 = vmatmul.f32.gmra.mxu0 %v1221
    %v1466 = vpop.f32.mrf.mxu0
    %v1467 = vadd.f32 %v1186, %v1466
    %1468 = vmatmul.f32.gmra.mxu0 %v1224
    %v1469 = vpop.f32.mrf.mxu0
    %v1470 = vadd.f32 %v1191, %v1469
    %1471 = vmatmul.f32.gmra.mxu0 %v1227
    %v1472 = vpop.f32.mrf.mxu0
    %v1473 = vadd.f32 %v1196, %v1472
    %1474 = vmatmul.f32.gmra.mxu0 %v1230
    %v1475 = vpop.f32.mrf.mxu0
    %v1476 = vadd.f32 %v1201, %v1475
    %1477 = vmatmul.f32.gmra.mxu0 %v1233
    %v1478 = vpop.f32.mrf.mxu0
    %v1479 = vadd.f32 %v1206, %v1478
    %1480 = vmatmul.f32.gmra.mxu0 %v1236
    %v1481 = vpop.f32.mrf.mxu0
    %v1482 = vadd.f32 %v1211, %v1481
    %1483 = vdwg.mxu0
    %1484 = vmatpush.msra.mxu0 0.0
    %1485 = vmatpush.msra.mxu0 0.0
    %1486 = vmatpush.msra.mxu0 0.0
    %1487 = vmatpush.msra.mxu0 0.0
    %1488 = vmatpush.msra.mxu0 %v1163
    %1489 = vmatpush.msra.mxu0 %v1155
    %1490 = vmatpush.msra.mxu0 %v1147
    %1491 = vmatpush.msra.mxu0 %v1139
    %1492 = vmatpush.msra.mxu0 %v875
    %1493 = vmatpush.msra.mxu0 %v867
    %1494 = vmatpush.msra.mxu0 %v859
    %1495 = vmatpush.msra.mxu0 %v851
    %1496 = vmatpush.msra.mxu0 %v1019
    %1497 = vmatpush.msra.mxu0 %v1011
    %1498 = vmatpush.msra.mxu0 %v1003
    %1499 = vmatpush.msra.mxu0 %v995
    %1500 = vmatmul.f32.gmra.mxu0 %v1215
    %v1501 = vpop.f32.mrf.mxu0
    %v1502 = vadd.f32 %v1176, %v1501
    %1503 = vmatmul.f32.gmra.mxu0 %v1218
    %v1504 = vpop.f32.mrf.mxu0
    %v1505 = vadd.f32 %v1181, %v1504
    %1506 = vmatmul.f32.gmra.mxu0 %v1221
    %v1507 = vpop.f32.mrf.mxu0
    %v1508 = vadd.f32 %v1186, %v1507
    %1509 = vmatmul.f32.gmra.mxu0 %v1224
    %v1510 = vpop.f32.mrf.mxu0
    %v1511 = vadd.f32 %v1191, %v1510
    %1512 = vmatmul.f32.gmra.mxu0 %v1227
    %v1513 = vpop.f32.mrf.mxu0
    %v1514 = vadd.f32 %v1196, %v1513
    %1515 = vmatmul.f32.gmra.mxu0 %v1230
    %v1516 = vpop.f32.mrf.mxu0
    %v1517 = vadd.f32 %v1201, %v1516
    %1518 = vmatmul.f32.gmra.mxu0 %v1233
    %v1519 = vpop.f32.mrf.mxu0
    %v1520 = vadd.f32 %v1206, %v1519
    %1521 = vmatmul.f32.gmra.mxu0 %v1236
    %v1522 = vpop.f32.mrf.mxu0
    %v1523 = vadd.f32 %v1211, %v1522
    %1524 = vdwg.mxu0
    %1525 = vmatpush.msra.mxu0 0.0
    %1526 = vmatpush.msra.mxu0 0.0
    %1527 = vmatpush.msra.mxu0 0.0
    %1528 = vmatpush.msra.mxu0 0.0
    %1529 = vmatpush.msra.mxu0 %v1164
    %1530 = vmatpush.msra.mxu0 %v1156
    %1531 = vmatpush.msra.mxu0 %v1148
    %1532 = vmatpush.msra.mxu0 %v1140
    %1533 = vmatpush.msra.mxu0 %v876
    %1534 = vmatpush.msra.mxu0 %v868
    %1535 = vmatpush.msra.mxu0 %v860
    %1536 = vmatpush.msra.mxu0 %v852
    %1537 = vmatpush.msra.mxu0 %v1020
    %1538 = vmatpush.msra.mxu0 %v1012
    %1539 = vmatpush.msra.mxu0 %v1004
    %1540 = vmatpush.msra.mxu0 %v996
    %1541 = vmatmul.f32.gmra.mxu0 %v1215
    %v1542 = vpop.f32.mrf.mxu0
    %v1543 = vadd.f32 %v1176, %v1542
    %1544 = vmatmul.f32.gmra.mxu0 %v1218
    %v1545 = vpop.f32.mrf.mxu0
    %v1546 = vadd.f32 %v1181, %v1545
    %1547 = vmatmul.f32.gmra.mxu0 %v1221
    %v1548 = vpop.f32.mrf.mxu0
    %v1549 = vadd.f32 %v1186, %v1548
    %1550 = vmatmul.f32.gmra.mxu0 %v1224
    %v1551 = vpop.f32.mrf.mxu0
    %v1552 = vadd.f32 %v1191, %v1551
    %1553 = vmatmul.f32.gmra.mxu0 %v1227
    %v1554 = vpop.f32.mrf.mxu0
    %v1555 = vadd.f32 %v1196, %v1554
    %1556 = vmatmul.f32.gmra.mxu0 %v1230
    %v1557 = vpop.f32.mrf.mxu0
    %v1558 = vadd.f32 %v1201, %v1557
    %1559 = vmatmul.f32.gmra.mxu0 %v1233
    %v1560 = vpop.f32.mrf.mxu0
    %v1561 = vadd.f32 %v1206, %v1560
    %1562 = vmatmul.f32.gmra.mxu0 %v1236
    %v1563 = vpop.f32.mrf.mxu0
    %v1564 = vadd.f32 %v1211, %v1563
    %1565 = vdwg.mxu0
    %vm1566 = vcmp.ge.f32.partialorder %v1256, 0.0
    %vm1567 = vcmp.ge.f32.partialorder %v1297, 0.0
    %vm1568 = vcmp.ge.f32.partialorder %v1338, 0.0
    %vm1569 = vcmp.ge.f32.partialorder %v1379, 0.0
    %vm1570 = vcmp.ge.f32.partialorder %v1420, 0.0
    %vm1571 = vcmp.ge.f32.partialorder %v1461, 0.0
    %vm1572 = vcmp.ge.f32.partialorder %v1502, 0.0
    %vm1573 = vcmp.ge.f32.partialorder %v1543, 0.0
    %vm1574 = vcmp.ge.f32.partialorder %v1259, 0.0
    %vm1575 = vcmp.ge.f32.partialorder %v1300, 0.0
    %vm1576 = vcmp.ge.f32.partialorder %v1341, 0.0
    %vm1577 = vcmp.ge.f32.partialorder %v1382, 0.0
    %vm1578 = vcmp.ge.f32.partialorder %v1423, 0.0
    %vm1579 = vcmp.ge.f32.partialorder %v1464, 0.0
    %vm1580 = vcmp.ge.f32.partialorder %v1505, 0.0
    %vm1581 = vcmp.ge.f32.partialorder %v1546, 0.0
    %vm1582 = vcmp.ge.f32.partialorder %v1262, 0.0
    %vm1583 = vcmp.ge.f32.partialorder %v1303, 0.0
    %vm1584 = vcmp.ge.f32.partialorder %v1344, 0.0
    %vm1585 = vcmp.ge.f32.partialorder %v1385, 0.0
    %vm1586 = vcmp.ge.f32.partialorder %v1426, 0.0
    %vm1587 = vcmp.ge.f32.partialorder %v1467, 0.0
    %vm1588 = vcmp.ge.f32.partialorder %v1508, 0.0
    %vm1589 = vcmp.ge.f32.partialorder %v1549, 0.0
    %vm1590 = vcmp.ge.f32.partialorder %v1265, 0.0
    %vm1591 = vcmp.ge.f32.partialorder %v1306, 0.0
    %vm1592 = vcmp.ge.f32.partialorder %v1347, 0.0
    %vm1593 = vcmp.ge.f32.partialorder %v1388, 0.0
    %vm1594 = vcmp.ge.f32.partialorder %v1429, 0.0
    %vm1595 = vcmp.ge.f32.partialorder %v1470, 0.0
    %vm1596 = vcmp.ge.f32.partialorder %v1511, 0.0
    %vm1597 = vcmp.ge.f32.partialorder %v1552, 0.0
    %vm1598 = vcmp.ge.f32.partialorder %v1268, 0.0
    %vm1599 = vcmp.ge.f32.partialorder %v1309, 0.0
    %vm1600 = vcmp.ge.f32.partialorder %v1350, 0.0
    %vm1601 = vcmp.ge.f32.partialorder %v1391, 0.0
    %vm1602 = vcmp.ge.f32.partialorder %v1432, 0.0
    %vm1603 = vcmp.ge.f32.partialorder %v1473, 0.0
    %vm1604 = vcmp.ge.f32.partialorder %v1514, 0.0
    %vm1605 = vcmp.ge.f32.partialorder %v1555, 0.0
    %vm1606 = vcmp.ge.f32.partialorder %v1271, 0.0
    %vm1607 = vcmp.ge.f32.partialorder %v1312, 0.0
    %vm1608 = vcmp.ge.f32.partialorder %v1353, 0.0
    %vm1609 = vcmp.ge.f32.partialorder %v1394, 0.0
    %vm1610 = vcmp.ge.f32.partialorder %v1435, 0.0
    %vm1611 = vcmp.ge.f32.partialorder %v1476, 0.0
    %vm1612 = vcmp.ge.f32.partialorder %v1517, 0.0
    %vm1613 = vcmp.ge.f32.partialorder %v1558, 0.0
    %vm1614 = vcmp.ge.f32.partialorder %v1274, 0.0
    %vm1615 = vcmp.ge.f32.partialorder %v1315, 0.0
    %vm1616 = vcmp.ge.f32.partialorder %v1356, 0.0
    %vm1617 = vcmp.ge.f32.partialorder %v1397, 0.0
    %vm1618 = vcmp.ge.f32.partialorder %v1438, 0.0
    %vm1619 = vcmp.ge.f32.partialorder %v1479, 0.0
    %vm1620 = vcmp.ge.f32.partialorder %v1520, 0.0
    %vm1621 = vcmp.ge.f32.partialorder %v1561, 0.0
    %vm1622 = vcmp.ge.f32.partialorder %v1277, 0.0
    %vm1623 = vcmp.ge.f32.partialorder %v1318, 0.0
    %vm1624 = vcmp.ge.f32.partialorder %v1359, 0.0
    %vm1625 = vcmp.ge.f32.partialorder %v1400, 0.0
    %vm1626 = vcmp.ge.f32.partialorder %v1441, 0.0
    %vm1627 = vcmp.ge.f32.partialorder %v1482, 0.0
    %vm1628 = vcmp.ge.f32.partialorder %v1523, 0.0
    %vm1629 = vcmp.ge.f32.partialorder %v1564, 0.0
    %v1630 = vmul.f32 %v1256, 0.01
    %v1631 = vmul.f32 %v1297, 0.01
    %v1632 = vmul.f32 %v1338, 0.01
    %v1633 = vmul.f32 %v1379, 0.01
    %v1634 = vmul.f32 %v1420, 0.01
    %v1635 = vmul.f32 %v1461, 0.01
    %v1636 = vmul.f32 %v1502, 0.01
    %v1637 = vmul.f32 %v1543, 0.01
    %v1638 = vmul.f32 %v1259, 0.01
    %v1639 = vmul.f32 %v1300, 0.01
    %v1640 = vmul.f32 %v1341, 0.01
    %v1641 = vmul.f32 %v1382, 0.01
    %v1642 = vmul.f32 %v1423, 0.01
    %v1643 = vmul.f32 %v1464, 0.01
    %v1644 = vmul.f32 %v1505, 0.01
    %v1645 = vmul.f32 %v1546, 0.01
    %v1646 = vmul.f32 %v1262, 0.01
    %v1647 = vmul.f32 %v1303, 0.01
    %v1648 = vmul.f32 %v1344, 0.01
    %v1649 = vmul.f32 %v1385, 0.01
    %v1650 = vmul.f32 %v1426, 0.01
    %v1651 = vmul.f32 %v1467, 0.01
    %v1652 = vmul.f32 %v1508, 0.01
    %v1653 = vmul.f32 %v1549, 0.01
    %v1654 = vmul.f32 %v1265, 0.01
    %v1655 = vmul.f32 %v1306, 0.01
    %v1656 = vmul.f32 %v1347, 0.01
    %v1657 = vmul.f32 %v1388, 0.01
    %v1658 = vmul.f32 %v1429, 0.01
    %v1659 = vmul.f32 %v1470, 0.01
    %v1660 = vmul.f32 %v1511, 0.01
    %v1661 = vmul.f32 %v1552, 0.01
    %v1662 = vmul.f32 %v1268, 0.01
    %v1663 = vmul.f32 %v1309, 0.01
    %v1664 = vmul.f32 %v1350, 0.01
    %v1665 = vmul.f32 %v1391, 0.01
    %v1666 = vmul.f32 %v1432, 0.01
    %v1667 = vmul.f32 %v1473, 0.01
    %v1668 = vmul.f32 %v1514, 0.01
    %v1669 = vmul.f32 %v1555, 0.01
    %v1670 = vmul.f32 %v1271, 0.01
    %v1671 = vmul.f32 %v1312, 0.01
    %v1672 = vmul.f32 %v1353, 0.01
    %v1673 = vmul.f32 %v1394, 0.01
    %v1674 = vmul.f32 %v1435, 0.01
    %v1675 = vmul.f32 %v1476, 0.01
    %v1676 = vmul.f32 %v1517, 0.01
    %v1677 = vmul.f32 %v1558, 0.01
    %v1678 = vmul.f32 %v1274, 0.01
    %v1679 = vmul.f32 %v1315, 0.01
    %v1680 = vmul.f32 %v1356, 0.01
    %v1681 = vmul.f32 %v1397, 0.01
    %v1682 = vmul.f32 %v1438, 0.01
    %v1683 = vmul.f32 %v1479, 0.01
    %v1684 = vmul.f32 %v1520, 0.01
    %v1685 = vmul.f32 %v1561, 0.01
    %v1686 = vmul.f32 %v1277, 0.01
    %v1687 = vmul.f32 %v1318, 0.01
    %v1688 = vmul.f32 %v1359, 0.01
    %v1689 = vmul.f32 %v1400, 0.01
    %v1690 = vmul.f32 %v1441, 0.01
    %v1691 = vmul.f32 %v1482, 0.01
    %v1692 = vmul.f32 %v1523, 0.01
    %v1693 = vmul.f32 %v1564, 0.01
    %v1694 = vsel %vm1566, %v1256, %v1630
    %v1695 = vsel %vm1567, %v1297, %v1631
    %v1696 = vsel %vm1568, %v1338, %v1632
    %v1697 = vsel %vm1569, %v1379, %v1633
    %v1698 = vsel %vm1570, %v1420, %v1634
    %v1699 = vsel %vm1571, %v1461, %v1635
    %v1700 = vsel %vm1572, %v1502, %v1636
    %v1701 = vsel %vm1573, %v1543, %v1637
    %v1702 = vsel %vm1574, %v1259, %v1638
    %v1703 = vsel %vm1575, %v1300, %v1639
    %v1704 = vsel %vm1576, %v1341, %v1640
    %v1705 = vsel %vm1577, %v1382, %v1641
    %v1706 = vsel %vm1578, %v1423, %v1642
    %v1707 = vsel %vm1579, %v1464, %v1643
    %v1708 = vsel %vm1580, %v1505, %v1644
    %v1709 = vsel %vm1581, %v1546, %v1645
    %v1710 = vsel %vm1582, %v1262, %v1646
    %v1711 = vsel %vm1583, %v1303, %v1647
    %v1712 = vsel %vm1584, %v1344, %v1648
    %v1713 = vsel %vm1585, %v1385, %v1649
    %v1714 = vsel %vm1586, %v1426, %v1650
    %v1715 = vsel %vm1587, %v1467, %v1651
    %v1716 = vsel %vm1588, %v1508, %v1652
    %v1717 = vsel %vm1589, %v1549, %v1653
    %v1718 = vsel %vm1590, %v1265, %v1654
    %v1719 = vsel %vm1591, %v1306, %v1655
    %v1720 = vsel %vm1592, %v1347, %v1656
    %v1721 = vsel %vm1593, %v1388, %v1657
    %v1722 = vsel %vm1594, %v1429, %v1658
    %v1723 = vsel %vm1595, %v1470, %v1659
    %v1724 = vsel %vm1596, %v1511, %v1660
    %v1725 = vsel %vm1597, %v1552, %v1661
    %v1726 = vsel %vm1598, %v1268, %v1662
    %v1727 = vsel %vm1599, %v1309, %v1663
    %v1728 = vsel %vm1600, %v1350, %v1664
    %v1729 = vsel %vm1601, %v1391, %v1665
    %v1730 = vsel %vm1602, %v1432, %v1666
    %v1731 = vsel %vm1603, %v1473, %v1667
    %v1732 = vsel %vm1604, %v1514, %v1668
    %v1733 = vsel %vm1605, %v1555, %v1669
    %v1734 = vsel %vm1606, %v1271, %v1670
    %v1735 = vsel %vm1607, %v1312, %v1671
    %v1736 = vsel %vm1608, %v1353, %v1672
    %v1737 = vsel %vm1609, %v1394, %v1673
    %v1738 = vsel %vm1610, %v1435, %v1674
    %v1739 = vsel %vm1611, %v1476, %v1675
    %v1740 = vsel %vm1612, %v1517, %v1676
    %v1741 = vsel %vm1613, %v1558, %v1677
    %v1742 = vsel %vm1614, %v1274, %v1678
    %v1743 = vsel %vm1615, %v1315, %v1679
    %v1744 = vsel %vm1616, %v1356, %v1680
    %v1745 = vsel %vm1617, %v1397, %v1681
    %v1746 = vsel %vm1618, %v1438, %v1682
    %v1747 = vsel %vm1619, %v1479, %v1683
    %v1748 = vsel %vm1620, %v1520, %v1684
    %v1749 = vsel %vm1621, %v1561, %v1685
    %v1750 = vsel %vm1622, %v1277, %v1686
    %v1751 = vsel %vm1623, %v1318, %v1687
    %v1752 = vsel %vm1624, %v1359, %v1688
    %v1753 = vsel %vm1625, %v1400, %v1689
    %v1754 = vsel %vm1626, %v1441, %v1690
    %v1755 = vsel %vm1627, %v1482, %v1691
    %v1756 = vsel %vm1628, %v1523, %v1692
    %v1757 = vsel %vm1629, %v1564, %v1693
    %1758 = vrot.lane.b32.xlu0 %v1694, 1
    %v1759 = vpop.permute.xlu0 %1758
    %1760 = vrot.lane.b32.xlu0 %v1702, 1
    %v1761 = vpop.permute.xlu0 %1760
    %1762 = vrot.lane.b32.xlu0 %v1710, 1
    %v1763 = vpop.permute.xlu0 %1762
    %1764 = vrot.lane.b32.xlu0 %v1718, 1
    %v1765 = vpop.permute.xlu0 %1764
    %1766 = vrot.lane.b32.xlu0 %v1726, 1
    %v1767 = vpop.permute.xlu0 %1766
    %1768 = vrot.lane.b32.xlu0 %v1734, 1
    %v1769 = vpop.permute.xlu0 %1768
    %1770 = vrot.lane.b32.xlu0 %v1742, 1
    %v1771 = vpop.permute.xlu0 %1770
    %1772 = vrot.lane.b32.xlu0 %v1750, 1
    %v1773 = vpop.permute.xlu0 %1772
    %1774 = vrot.lane.b32.xlu0 %v1695, 1
    %v1775 = vpop.permute.xlu0 %1774
    %1776 = vrot.lane.b32.xlu0 %v1703, 1
    %v1777 = vpop.permute.xlu0 %1776
    %1778 = vrot.lane.b32.xlu0 %v1711, 1
    %v1779 = vpop.permute.xlu0 %1778
    %1780 = vrot.lane.b32.xlu0 %v1719, 1
    %v1781 = vpop.permute.xlu0 %1780
    %1782 = vrot.lane.b32.xlu0 %v1727, 1
    %v1783 = vpop.permute.xlu0 %1782
    %1784 = vrot.lane.b32.xlu0 %v1735, 1
    %v1785 = vpop.permute.xlu0 %1784
    %1786 = vrot.lane.b32.xlu0 %v1743, 1
    %v1787 = vpop.permute.xlu0 %1786
    %1788 = vrot.lane.b32.xlu0 %v1751, 1
    %v1789 = vpop.permute.xlu0 %1788
    %1790 = vrot.lane.b32.xlu0 %v1696, 1
    %v1791 = vpop.permute.xlu0 %1790
    %1792 = vrot.lane.b32.xlu0 %v1704, 1
    %v1793 = vpop.permute.xlu0 %1792
    %1794 = vrot.lane.b32.xlu0 %v1712, 1
    %v1795 = vpop.permute.xlu0 %1794
    %1796 = vrot.lane.b32.xlu0 %v1720, 1
    %v1797 = vpop.permute.xlu0 %1796
    %1798 = vrot.lane.b32.xlu0 %v1728, 1
    %v1799 = vpop.permute.xlu0 %1798
    %1800 = vrot.lane.b32.xlu0 %v1736, 1
    %v1801 = vpop.permute.xlu0 %1800
    %1802 = vrot.lane.b32.xlu0 %v1744, 1
    %v1803 = vpop.permute.xlu0 %1802
    %1804 = vrot.lane.b32.xlu0 %v1752, 1
    %v1805 = vpop.permute.xlu0 %1804
    %1806 = vrot.lane.b32.xlu0 %v1697, 1
    %v1807 = vpop.permute.xlu0 %1806
    %1808 = vrot.lane.b32.xlu0 %v1705, 1
    %v1809 = vpop.permute.xlu0 %1808
    %1810 = vrot.lane.b32.xlu0 %v1713, 1
    %v1811 = vpop.permute.xlu0 %1810
    %1812 = vrot.lane.b32.xlu0 %v1721, 1
    %v1813 = vpop.permute.xlu0 %1812
    %1814 = vrot.lane.b32.xlu0 %v1729, 1
    %v1815 = vpop.permute.xlu0 %1814
    %1816 = vrot.lane.b32.xlu0 %v1737, 1
    %v1817 = vpop.permute.xlu0 %1816
    %1818 = vrot.lane.b32.xlu0 %v1745, 1
    %v1819 = vpop.permute.xlu0 %1818
    %1820 = vrot.lane.b32.xlu0 %v1753, 1
    %v1821 = vpop.permute.xlu0 %1820
    %1822 = vrot.lane.b32.xlu0 %v1698, 1
    %v1823 = vpop.permute.xlu0 %1822
    %1824 = vrot.lane.b32.xlu0 %v1706, 1
    %v1825 = vpop.permute.xlu0 %1824
    %1826 = vrot.lane.b32.xlu0 %v1714, 1
    %v1827 = vpop.permute.xlu0 %1826
    %1828 = vrot.lane.b32.xlu0 %v1722, 1
    %v1829 = vpop.permute.xlu0 %1828
    %1830 = vrot.lane.b32.xlu0 %v1730, 1
    %v1831 = vpop.permute.xlu0 %1830
    %1832 = vrot.lane.b32.xlu0 %v1738, 1
    %v1833 = vpop.permute.xlu0 %1832
    %1834 = vrot.lane.b32.xlu0 %v1746, 1
    %v1835 = vpop.permute.xlu0 %1834
    %1836 = vrot.lane.b32.xlu0 %v1754, 1
    %v1837 = vpop.permute.xlu0 %1836
    %1838 = vrot.lane.b32.xlu0 %v1699, 1
    %v1839 = vpop.permute.xlu0 %1838
    %1840 = vrot.lane.b32.xlu0 %v1707, 1
    %v1841 = vpop.permute.xlu0 %1840
    %1842 = vrot.lane.b32.xlu0 %v1715, 1
    %v1843 = vpop.permute.xlu0 %1842
    %1844 = vrot.lane.b32.xlu0 %v1723, 1
    %v1845 = vpop.permute.xlu0 %1844
    %1846 = vrot.lane.b32.xlu0 %v1731, 1
    %v1847 = vpop.permute.xlu0 %1846
    %1848 = vrot.lane.b32.xlu0 %v1739, 1
    %v1849 = vpop.permute.xlu0 %1848
    %1850 = vrot.lane.b32.xlu0 %v1747, 1
    %v1851 = vpop.permute.xlu0 %1850
    %1852 = vrot.lane.b32.xlu0 %v1755, 1
    %v1853 = vpop.permute.xlu0 %1852
    %1854 = vrot.lane.b32.xlu0 %v1700, 1
    %v1855 = vpop.permute.xlu0 %1854
    %1856 = vrot.lane.b32.xlu0 %v1708, 1
    %v1857 = vpop.permute.xlu0 %1856
    %1858 = vrot.lane.b32.xlu0 %v1716, 1
    %v1859 = vpop.permute.xlu0 %1858
    %1860 = vrot.lane.b32.xlu0 %v1724, 1
    %v1861 = vpop.permute.xlu0 %1860
    %1862 = vrot.lane.b32.xlu0 %v1732, 1
    %v1863 = vpop.permute.xlu0 %1862
    %1864 = vrot.lane.b32.xlu0 %v1740, 1
    %v1865 = vpop.permute.xlu0 %1864
    %1866 = vrot.lane.b32.xlu0 %v1748, 1
    %v1867 = vpop.permute.xlu0 %1866
    %1868 = vrot.lane.b32.xlu0 %v1756, 1
    %v1869 = vpop.permute.xlu0 %1868
    %1870 = vrot.lane.b32.xlu0 %v1701, 1
    %v1871 = vpop.permute.xlu0 %1870
    %1872 = vrot.lane.b32.xlu0 %v1709, 1
    %v1873 = vpop.permute.xlu0 %1872
    %1874 = vrot.lane.b32.xlu0 %v1717, 1
    %v1875 = vpop.permute.xlu0 %1874
    %1876 = vrot.lane.b32.xlu0 %v1725, 1
    %v1877 = vpop.permute.xlu0 %1876
    %1878 = vrot.lane.b32.xlu0 %v1733, 1
    %v1879 = vpop.permute.xlu0 %1878
    %1880 = vrot.lane.b32.xlu0 %v1741, 1
    %v1881 = vpop.permute.xlu0 %1880
    %1882 = vrot.lane.b32.xlu0 %v1749, 1
    %v1883 = vpop.permute.xlu0 %1882
    %1884 = vrot.lane.b32.xlu0 %v1757, 1
    %v1885 = vpop.permute.xlu0 %1884
    %v1886 = vsel %vm435, %v1855, %v1871
    %v1887 = vsel %vm435, %v1857, %v1873
    %v1888 = vsel %vm435, %v1859, %v1875
    %v1889 = vsel %vm435, %v1861, %v1877
    %v1890 = vsel %vm435, %v1863, %v1879
    %v1891 = vsel %vm435, %v1865, %v1881
    %v1892 = vsel %vm435, %v1867, %v1883
    %v1893 = vsel %vm435, %v1869, %v1885
    %v1894 = vsel %vm435, %v1839, %v1855
    %v1895 = vsel %vm435, %v1841, %v1857
    %v1896 = vsel %vm435, %v1843, %v1859
    %v1897 = vsel %vm435, %v1845, %v1861
    %v1898 = vsel %vm435, %v1847, %v1863
    %v1899 = vsel %vm435, %v1849, %v1865
    %v1900 = vsel %vm435, %v1851, %v1867
    %v1901 = vsel %vm435, %v1853, %v1869
    %v1902 = vsel %vm435, %v1823, %v1839
    %v1903 = vsel %vm435, %v1825, %v1841
    %v1904 = vsel %vm435, %v1827, %v1843
    %v1905 = vsel %vm435, %v1829, %v1845
    %v1906 = vsel %vm435, %v1831, %v1847
    %v1907 = vsel %vm435, %v1833, %v1849
    %v1908 = vsel %vm435, %v1835, %v1851
    %v1909 = vsel %vm435, %v1837, %v1853
    %v1910 = vsel %vm435, %v1807, %v1823
    %v1911 = vsel %vm435, %v1809, %v1825
    %v1912 = vsel %vm435, %v1811, %v1827
    %v1913 = vsel %vm435, %v1813, %v1829
    %v1914 = vsel %vm435, %v1815, %v1831
    %v1915 = vsel %vm435, %v1817, %v1833
    %v1916 = vsel %vm435, %v1819, %v1835
    %v1917 = vsel %vm435, %v1821, %v1837
    %v1918 = vsel %vm435, %v1791, %v1807
    %v1919 = vsel %vm435, %v1793, %v1809
    %v1920 = vsel %vm435, %v1795, %v1811
    %v1921 = vsel %vm435, %v1797, %v1813
    %v1922 = vsel %vm435, %v1799, %v1815
    %v1923 = vsel %vm435, %v1801, %v1817
    %v1924 = vsel %vm435, %v1803, %v1819
    %v1925 = vsel %vm435, %v1805, %v1821
    %v1926 = vsel %vm435, %v1775, %v1791
    %v1927 = vsel %vm435, %v1777, %v1793
    %v1928 = vsel %vm435, %v1779, %v1795
    %v1929 = vsel %vm435, %v1781, %v1797
    %v1930 = vsel %vm435, %v1783, %v1799
    %v1931 = vsel %vm435, %v1785, %v1801
    %v1932 = vsel %vm435, %v1787, %v1803
    %v1933 = vsel %vm435, %v1789, %v1805
    %v1934 = vsel %vm435, %v1759, %v1775
    %v1935 = vsel %vm435, %v1761, %v1777
    %v1936 = vsel %vm435, %v1763, %v1779
    %v1937 = vsel %vm435, %v1765, %v1781
    %v1938 = vsel %vm435, %v1767, %v1783
    %v1939 = vsel %vm435, %v1769, %v1785
    %v1940 = vsel %vm435, %v1771, %v1787
    %v1941 = vsel %vm435, %v1773, %v1789
    %v1942 = vsel %vm435, %v1871, %v1759
    %v1943 = vsel %vm435, %v1873, %v1761
    %v1944 = vsel %vm435, %v1875, %v1763
    %v1945 = vsel %vm435, %v1877, %v1765
    %v1946 = vsel %vm435, %v1879, %v1767
    %v1947 = vsel %vm435, %v1881, %v1769
    %v1948 = vsel %vm435, %v1883, %v1771
    %v1949 = vsel %vm435, %v1885, %v1773
    %v1950 = vsel %vm981, 0.0, %v1942
    %v1951 = vsel %vm982, 0.0, %v1934
    %v1952 = vsel %vm983, 0.0, %v1926
    %v1953 = vsel %vm984, 0.0, %v1918
    %v1954 = vsel %vm985, 0.0, %v1910
    %v1955 = vsel %vm986, 0.0, %v1902
    %v1956 = vsel %vm987, 0.0, %v1894
    %v1957 = vsel %vm988, 0.0, %v1886
    %v1958 = vsel %vm981, 0.0, %v1943
    %v1959 = vsel %vm982, 0.0, %v1935
    %v1960 = vsel %vm983, 0.0, %v1927
    %v1961 = vsel %vm984, 0.0, %v1919
    %v1962 = vsel %vm985, 0.0, %v1911
    %v1963 = vsel %vm986, 0.0, %v1903
    %v1964 = vsel %vm987, 0.0, %v1895
    %v1965 = vsel %vm988, 0.0, %v1887
    %v1966 = vsel %vm981, 0.0, %v1944
    %v1967 = vsel %vm982, 0.0, %v1936
    %v1968 = vsel %vm983, 0.0, %v1928
    %v1969 = vsel %vm984, 0.0, %v1920
    %v1970 = vsel %vm985, 0.0, %v1912
    %v1971 = vsel %vm986, 0.0, %v1904
    %v1972 = vsel %vm987, 0.0, %v1896
    %v1973 = vsel %vm988, 0.0, %v1888
    %v1974 = vsel %vm981, 0.0, %v1945
    %v1975 = vsel %vm982, 0.0, %v1937
    %v1976 = vsel %vm983, 0.0, %v1929
    %v1977 = vsel %vm984, 0.0, %v1921
    %v1978 = vsel %vm985, 0.0, %v1913
    %v1979 = vsel %vm986, 0.0, %v1905
    %v1980 = vsel %vm987, 0.0, %v1897
    %v1981 = vsel %vm988, 0.0, %v1889
    %v1982 = vsel %vm981, 0.0, %v1946
    %v1983 = vsel %vm982, 0.0, %v1938
    %v1984 = vsel %vm983, 0.0, %v1930
    %v1985 = vsel %vm984, 0.0, %v1922
    %v1986 = vsel %vm985, 0.0, %v1914
    %v1987 = vsel %vm986, 0.0, %v1906
    %v1988 = vsel %vm987, 0.0, %v1898
    %v1989 = vsel %vm988, 0.0, %v1890
    %v1990 = vsel %vm981, 0.0, %v1947
    %v1991 = vsel %vm982, 0.0, %v1939
    %v1992 = vsel %vm983, 0.0, %v1931
    %v1993 = vsel %vm984, 0.0, %v1923
    %v1994 = vsel %vm985, 0.0, %v1915
    %v1995 = vsel %vm986, 0.0, %v1907
    %v1996 = vsel %vm987, 0.0, %v1899
    %v1997 = vsel %vm988, 0.0, %v1891
    %v1998 = vsel %vm981, 0.0, %v1948
    %v1999 = vsel %vm982, 0.0, %v1940
    %v2000 = vsel %vm983, 0.0, %v1932
    %v2001 = vsel %vm984, 0.0, %v1924
    %v2002 = vsel %vm985, 0.0, %v1916
    %v2003 = vsel %vm986, 0.0, %v1908
    %v2004 = vsel %vm987, 0.0, %v1900
    %v2005 = vsel %vm988, 0.0, %v1892
    %v2006 = vsel %vm981, 0.0, %v1949
    %v2007 = vsel %vm982, 0.0, %v1941
    %v2008 = vsel %vm983, 0.0, %v1933
    %v2009 = vsel %vm984, 0.0, %v1925
    %v2010 = vsel %vm985, 0.0, %v1917
    %v2011 = vsel %vm986, 0.0, %v1909
    %v2012 = vsel %vm987, 0.0, %v1901
    %v2013 = vsel %vm988, 0.0, %v1893
    %2014 = vrot.lane.b32.xlu0 %v1694, 127
    %v2015 = vpop.permute.xlu0 %2014
    %2016 = vrot.lane.b32.xlu0 %v1702, 127
    %v2017 = vpop.permute.xlu0 %2016
    %2018 = vrot.lane.b32.xlu0 %v1710, 127
    %v2019 = vpop.permute.xlu0 %2018
    %2020 = vrot.lane.b32.xlu0 %v1718, 127
    %v2021 = vpop.permute.xlu0 %2020
    %2022 = vrot.lane.b32.xlu0 %v1726, 127
    %v2023 = vpop.permute.xlu0 %2022
    %2024 = vrot.lane.b32.xlu0 %v1734, 127
    %v2025 = vpop.permute.xlu0 %2024
    %2026 = vrot.lane.b32.xlu0 %v1742, 127
    %v2027 = vpop.permute.xlu0 %2026
    %2028 = vrot.lane.b32.xlu0 %v1750, 127
    %v2029 = vpop.permute.xlu0 %2028
    %2030 = vrot.lane.b32.xlu0 %v1695, 127
    %v2031 = vpop.permute.xlu0 %2030
    %2032 = vrot.lane.b32.xlu0 %v1703, 127
    %v2033 = vpop.permute.xlu0 %2032
    %2034 = vrot.lane.b32.xlu0 %v1711, 127
    %v2035 = vpop.permute.xlu0 %2034
    %2036 = vrot.lane.b32.xlu0 %v1719, 127
    %v2037 = vpop.permute.xlu0 %2036
    %2038 = vrot.lane.b32.xlu0 %v1727, 127
    %v2039 = vpop.permute.xlu0 %2038
    %2040 = vrot.lane.b32.xlu0 %v1735, 127
    %v2041 = vpop.permute.xlu0 %2040
    %2042 = vrot.lane.b32.xlu0 %v1743, 127
    %v2043 = vpop.permute.xlu0 %2042
    %2044 = vrot.lane.b32.xlu0 %v1751, 127
    %v2045 = vpop.permute.xlu0 %2044
    %2046 = vrot.lane.b32.xlu0 %v1696, 127
    %v2047 = vpop.permute.xlu0 %2046
    %2048 = vrot.lane.b32.xlu0 %v1704, 127
    %v2049 = vpop.permute.xlu0 %2048
    %2050 = vrot.lane.b32.xlu0 %v1712, 127
    %v2051 = vpop.permute.xlu0 %2050
    %2052 = vrot.lane.b32.xlu0 %v1720, 127
    %v2053 = vpop.permute.xlu0 %2052
    %2054 = vrot.lane.b32.xlu0 %v1728, 127
    %v2055 = vpop.permute.xlu0 %2054
    %2056 = vrot.lane.b32.xlu0 %v1736, 127
    %v2057 = vpop.permute.xlu0 %2056
    %2058 = vrot.lane.b32.xlu0 %v1744, 127
    %v2059 = vpop.permute.xlu0 %2058
    %2060 = vrot.lane.b32.xlu0 %v1752, 127
    %v2061 = vpop.permute.xlu0 %2060
    %2062 = vrot.lane.b32.xlu0 %v1697, 127
    %v2063 = vpop.permute.xlu0 %2062
    %2064 = vrot.lane.b32.xlu0 %v1705, 127
    %v2065 = vpop.permute.xlu0 %2064
    %2066 = vrot.lane.b32.xlu0 %v1713, 127
    %v2067 = vpop.permute.xlu0 %2066
    %2068 = vrot.lane.b32.xlu0 %v1721, 127
    %v2069 = vpop.permute.xlu0 %2068
    %2070 = vrot.lane.b32.xlu0 %v1729, 127
    %v2071 = vpop.permute.xlu0 %2070
    %2072 = vrot.lane.b32.xlu0 %v1737, 127
    %v2073 = vpop.permute.xlu0 %2072
    %2074 = vrot.lane.b32.xlu0 %v1745, 127
    %v2075 = vpop.permute.xlu0 %2074
    %2076 = vrot.lane.b32.xlu0 %v1753, 127
    %v2077 = vpop.permute.xlu0 %2076
    %2078 = vrot.lane.b32.xlu0 %v1698, 127
    %v2079 = vpop.permute.xlu0 %2078
    %2080 = vrot.lane.b32.xlu0 %v1706, 127
    %v2081 = vpop.permute.xlu0 %2080
    %2082 = vrot.lane.b32.xlu0 %v1714, 127
    %v2083 = vpop.permute.xlu0 %2082
    %2084 = vrot.lane.b32.xlu0 %v1722, 127
    %v2085 = vpop.permute.xlu0 %2084
    %2086 = vrot.lane.b32.xlu0 %v1730, 127
    %v2087 = vpop.permute.xlu0 %2086
    %2088 = vrot.lane.b32.xlu0 %v1738, 127
    %v2089 = vpop.permute.xlu0 %2088
    %2090 = vrot.lane.b32.xlu0 %v1746, 127
    %v2091 = vpop.permute.xlu0 %2090
    %2092 = vrot.lane.b32.xlu0 %v1754, 127
    %v2093 = vpop.permute.xlu0 %2092
    %2094 = vrot.lane.b32.xlu0 %v1699, 127
    %v2095 = vpop.permute.xlu0 %2094
    %2096 = vrot.lane.b32.xlu0 %v1707, 127
    %v2097 = vpop.permute.xlu0 %2096
    %2098 = vrot.lane.b32.xlu0 %v1715, 127
    %v2099 = vpop.permute.xlu0 %2098
    %2100 = vrot.lane.b32.xlu0 %v1723, 127
    %v2101 = vpop.permute.xlu0 %2100
    %2102 = vrot.lane.b32.xlu0 %v1731, 127
    %v2103 = vpop.permute.xlu0 %2102
    %2104 = vrot.lane.b32.xlu0 %v1739, 127
    %v2105 = vpop.permute.xlu0 %2104
    %2106 = vrot.lane.b32.xlu0 %v1747, 127
    %v2107 = vpop.permute.xlu0 %2106
    %2108 = vrot.lane.b32.xlu0 %v1755, 127
    %v2109 = vpop.permute.xlu0 %2108
    %2110 = vrot.lane.b32.xlu0 %v1700, 127
    %v2111 = vpop.permute.xlu0 %2110
    %2112 = vrot.lane.b32.xlu0 %v1708, 127
    %v2113 = vpop.permute.xlu0 %2112
    %2114 = vrot.lane.b32.xlu0 %v1716, 127
    %v2115 = vpop.permute.xlu0 %2114
    %2116 = vrot.lane.b32.xlu0 %v1724, 127
    %v2117 = vpop.permute.xlu0 %2116
    %2118 = vrot.lane.b32.xlu0 %v1732, 127
    %v2119 = vpop.permute.xlu0 %2118
    %2120 = vrot.lane.b32.xlu0 %v1740, 127
    %v2121 = vpop.permute.xlu0 %2120
    %2122 = vrot.lane.b32.xlu0 %v1748, 127
    %v2123 = vpop.permute.xlu0 %2122
    %2124 = vrot.lane.b32.xlu0 %v1756, 127
    %v2125 = vpop.permute.xlu0 %2124
    %2126 = vrot.lane.b32.xlu0 %v1701, 127
    %v2127 = vpop.permute.xlu0 %2126
    %2128 = vrot.lane.b32.xlu0 %v1709, 127
    %v2129 = vpop.permute.xlu0 %2128
    %2130 = vrot.lane.b32.xlu0 %v1717, 127
    %v2131 = vpop.permute.xlu0 %2130
    %2132 = vrot.lane.b32.xlu0 %v1725, 127
    %v2133 = vpop.permute.xlu0 %2132
    %2134 = vrot.lane.b32.xlu0 %v1733, 127
    %v2135 = vpop.permute.xlu0 %2134
    %2136 = vrot.lane.b32.xlu0 %v1741, 127
    %v2137 = vpop.permute.xlu0 %2136
    %2138 = vrot.lane.b32.xlu0 %v1749, 127
    %v2139 = vpop.permute.xlu0 %2138
    %2140 = vrot.lane.b32.xlu0 %v1757, 127
    %v2141 = vpop.permute.xlu0 %2140
    %v2142 = vsel %vm620, %v2111, %v2127
    %v2143 = vsel %vm620, %v2113, %v2129
    %v2144 = vsel %vm620, %v2115, %v2131
    %v2145 = vsel %vm620, %v2117, %v2133
    %v2146 = vsel %vm620, %v2119, %v2135
    %v2147 = vsel %vm620, %v2121, %v2137
    %v2148 = vsel %vm620, %v2123, %v2139
    %v2149 = vsel %vm620, %v2125, %v2141
    %v2150 = vsel %vm620, %v2095, %v2111
    %v2151 = vsel %vm620, %v2097, %v2113
    %v2152 = vsel %vm620, %v2099, %v2115
    %v2153 = vsel %vm620, %v2101, %v2117
    %v2154 = vsel %vm620, %v2103, %v2119
    %v2155 = vsel %vm620, %v2105, %v2121
    %v2156 = vsel %vm620, %v2107, %v2123
    %v2157 = vsel %vm620, %v2109, %v2125
    %v2158 = vsel %vm620, %v2079, %v2095
    %v2159 = vsel %vm620, %v2081, %v2097
    %v2160 = vsel %vm620, %v2083, %v2099
    %v2161 = vsel %vm620, %v2085, %v2101
    %v2162 = vsel %vm620, %v2087, %v2103
    %v2163 = vsel %vm620, %v2089, %v2105
    %v2164 = vsel %vm620, %v2091, %v2107
    %v2165 = vsel %vm620, %v2093, %v2109
    %v2166 = vsel %vm620, %v2063, %v2079
    %v2167 = vsel %vm620, %v2065, %v2081
    %v2168 = vsel %vm620, %v2067, %v2083
    %v2169 = vsel %vm620, %v2069, %v2085
    %v2170 = vsel %vm620, %v2071, %v2087
    %v2171 = vsel %vm620, %v2073, %v2089
    %v2172 = vsel %vm620, %v2075, %v2091
    %v2173 = vsel %vm620, %v2077, %v2093
    %v2174 = vsel %vm620, %v2047, %v2063
    %v2175 = vsel %vm620, %v2049, %v2065
    %v2176 = vsel %vm620, %v2051, %v2067
    %v2177 = vsel %vm620, %v2053, %v2069
    %v2178 = vsel %vm620, %v2055, %v2071
    %v2179 = vsel %vm620, %v2057, %v2073
    %v2180 = vsel %vm620, %v2059, %v2075
    %v2181 = vsel %vm620, %v2061, %v2077
    %v2182 = vsel %vm620, %v2031, %v2047
    %v2183 = vsel %vm620, %v2033, %v2049
    %v2184 = vsel %vm620, %v2035, %v2051
    %v2185 = vsel %vm620, %v2037, %v2053
    %v2186 = vsel %vm620, %v2039, %v2055
    %v2187 = vsel %vm620, %v2041, %v2057
    %v2188 = vsel %vm620, %v2043, %v2059
    %v2189 = vsel %vm620, %v2045, %v2061
    %v2190 = vsel %vm620, %v2015, %v2031
    %v2191 = vsel %vm620, %v2017, %v2033
    %v2192 = vsel %vm620, %v2019, %v2035
    %v2193 = vsel %vm620, %v2021, %v2037
    %v2194 = vsel %vm620, %v2023, %v2039
    %v2195 = vsel %vm620, %v2025, %v2041
    %v2196 = vsel %vm620, %v2027, %v2043
    %v2197 = vsel %vm620, %v2029, %v2045
    %v2198 = vsel %vm620, %v2127, %v2015
    %v2199 = vsel %vm620, %v2129, %v2017
    %v2200 = vsel %vm620, %v2131, %v2019
    %v2201 = vsel %vm620, %v2133, %v2021
    %v2202 = vsel %vm620, %v2135, %v2023
    %v2203 = vsel %vm620, %v2137, %v2025
    %v2204 = vsel %vm620, %v2139, %v2027
    %v2205 = vsel %vm620, %v2141, %v2029
    %v2206 = vsel %vm1125, 0.0, %v2190
    %v2207 = vsel %vm1126, 0.0, %v2182
    %v2208 = vsel %vm1127, 0.0, %v2174
    %v2209 = vsel %vm1128, 0.0, %v2166
    %v2210 = vsel %vm1129, 0.0, %v2158
    %v2211 = vsel %vm1130, 0.0, %v2150
    %v2212 = vsel %vm1131, 0.0, %v2142
    %v2213 = vsel %vm1132, 0.0, %v2198
    %v2214 = vsel %vm1125, 0.0, %v2191
    %v2215 = vsel %vm1126, 0.0, %v2183
    %v2216 = vsel %vm1127, 0.0, %v2175
    %v2217 = vsel %vm1128, 0.0, %v2167
    %v2218 = vsel %vm1129, 0.0, %v2159
    %v2219 = vsel %vm1130, 0.0, %v2151
    %v2220 = vsel %vm1131, 0.0, %v2143
    %v2221 = vsel %vm1132, 0.0, %v2199
    %v2222 = vsel %vm1125, 0.0, %v2192
    %v2223 = vsel %vm1126, 0.0, %v2184
    %v2224 = vsel %vm1127, 0.0, %v2176
    %v2225 = vsel %vm1128, 0.0, %v2168
    %v2226 = vsel %vm1129, 0.0, %v2160
    %v2227 = vsel %vm1130, 0.0, %v2152
    %v2228 = vsel %vm1131, 0.0, %v2144
    %v2229 = vsel %vm1132, 0.0, %v2200
    %v2230 = vsel %vm1125, 0.0, %v2193
    %v2231 = vsel %vm1126, 0.0, %v2185
    %v2232 = vsel %vm1127, 0.0, %v2177
    %v2233 = vsel %vm1128, 0.0, %v2169
    %v2234 = vsel %vm1129, 0.0, %v2161
    %v2235 = vsel %vm1130, 0.0, %v2153
    %v2236 = vsel %vm1131, 0.0, %v2145
    %v2237 = vsel %vm1132, 0.0, %v2201
    %v2238 = vsel %vm1125, 0.0, %v2194
    %v2239 = vsel %vm1126, 0.0, %v2186
    %v2240 = vsel %vm1127, 0.0, %v2178
    %v2241 = vsel %vm1128, 0.0, %v2170
    %v2242 = vsel %vm1129, 0.0, %v2162
    %v2243 = vsel %vm1130, 0.0, %v2154
    %v2244 = vsel %vm1131, 0.0, %v2146
    %v2245 = vsel %vm1132, 0.0, %v2202
    %v2246 = vsel %vm1125, 0.0, %v2195
    %v2247 = vsel %vm1126, 0.0, %v2187
    %v2248 = vsel %vm1127, 0.0, %v2179
    %v2249 = vsel %vm1128, 0.0, %v2171
    %v2250 = vsel %vm1129, 0.0, %v2163
    %v2251 = vsel %vm1130, 0.0, %v2155
    %v2252 = vsel %vm1131, 0.0, %v2147
    %v2253 = vsel %vm1132, 0.0, %v2203
    %v2254 = vsel %vm1125, 0.0, %v2196
    %v2255 = vsel %vm1126, 0.0, %v2188
    %v2256 = vsel %vm1127, 0.0, %v2180
    %v2257 = vsel %vm1128, 0.0, %v2172
    %v2258 = vsel %vm1129, 0.0, %v2164
    %v2259 = vsel %vm1130, 0.0, %v2156
    %v2260 = vsel %vm1131, 0.0, %v2148
    %v2261 = vsel %vm1132, 0.0, %v2204
    %v2262 = vsel %vm1125, 0.0, %v2197
    %v2263 = vsel %vm1126, 0.0, %v2189
    %v2264 = vsel %vm1127, 0.0, %v2181
    %v2265 = vsel %vm1128, 0.0, %v2173
    %v2266 = vsel %vm1129, 0.0, %v2165
    %v2267 = vsel %vm1130, 0.0, %v2157
    %v2268 = vsel %vm1131, 0.0, %v2149
    %v2269 = vsel %vm1132, 0.0, %v2205
    %v2270 = vld [vmem:[%s4] sm:$0xff]
    %v2271 = vld [vmem:[%s4 + $0x8] sm:$0xff]
    %v2272 = vld [vmem:[%s4 + $0x10] sm:$0xff]
    %v2273 = vld [vmem:[%s4 + $0x18] sm:$0xff]
    %v2274 = vld [vmem:[%s4 + $0x20] sm:$0xff]
    %v2275 = vld [vmem:[%s4 + $0x28] sm:$0xff]
    %v2276 = vld [vmem:[%s4 + $0x30] sm:$0xff]
    %v2277 = vld [vmem:[%s4 + $0x38] sm:$0xff]
    %v2278 = vld [vmem:[%s4 + $0x40] sm:$0xff]
    %v2279 = vld [vmem:[%s4 + $0x48] sm:$0xff]
    %v2280 = vld [vmem:[%s4 + $0x50] sm:$0xff]
    %v2281 = vld [vmem:[%s4 + $0x58] sm:$0xff]
    %v2282 = vld [vmem:[%s4 + $0x60] sm:$0xff]
    %v2283 = vld [vmem:[%s4 + $0x68] sm:$0xff]
    %v2284 = vld [vmem:[%s4 + $0x70] sm:$0xff]
    %v2285 = vld [vmem:[%s4 + $0x78] sm:$0xff]
    %v2286 = vld [vmem:[%s4 + $0x80] sm:$0xff]
    %v2287 = vld [vmem:[%s4 + $0x88] sm:$0xff]
    %v2288 = vld [vmem:[%s4 + $0x90] sm:$0xff]
    %v2289 = vld [vmem:[%s4 + $0x98] sm:$0xff]
    %v2290 = vld [vmem:[%s4 + $0xa0] sm:$0xff]
    %v2291 = vld [vmem:[%s4 + $0xa8] sm:$0xff]
    %v2292 = vld [vmem:[%s4 + $0xb0] sm:$0xff]
    %v2293 = vld [vmem:[%s4 + $0xb8] sm:$0xff]
    %v2294 = vld [vmem:[%s4 + $0xc0] sm:$0xff]
    %v2295 = vld [vmem:[%s4 + $0xc8] sm:$0xff]
    %v2296 = vld [vmem:[%s4 + $0xd0] sm:$0xff]
    %v2297 = vld [vmem:[%s4 + $0xd8] sm:$0xff]
    %v2298 = vld [vmem:[%s4 + $0xe0] sm:$0xff]
    %v2299 = vld [vmem:[%s4 + $0xe8] sm:$0xff]
    %v2300 = vld [vmem:[%s4 + $0xf0] sm:$0xff]
    %v2301 = vld [vmem:[%s4 + $0xf8] sm:$0xff]
    %2303 = vset.pattern.permute.xlu0 0
    %2304 = vperm.xlu0 %2303, %v403
    %v2305 = vpop.permute.xlu0 %2304
    %2308 = vset.pattern.permute.xlu0 0
    %2309 = vperm.xlu0 %2308, %v404
    %v2310 = vpop.permute.xlu0 %2309
    %2313 = vset.pattern.permute.xlu0 0
    %2314 = vperm.xlu0 %2313, %v405
    %v2315 = vpop.permute.xlu0 %2314
    %2318 = vset.pattern.permute.xlu0 0
    %2319 = vperm.xlu0 %2318, %v406
    %v2320 = vpop.permute.xlu0 %2319
    %2323 = vset.pattern.permute.xlu0 0
    %2324 = vperm.xlu0 %2323, %v407
    %v2325 = vpop.permute.xlu0 %2324
    %2328 = vset.pattern.permute.xlu0 0
    %2329 = vperm.xlu0 %2328, %v408
    %v2330 = vpop.permute.xlu0 %2329
    %2333 = vset.pattern.permute.xlu0 0
    %2334 = vperm.xlu0 %2333, %v409
    %v2335 = vpop.permute.xlu0 %2334
    %2338 = vset.pattern.permute.xlu0 0
    %2339 = vperm.xlu0 %2338, %v410
    %v2340 = vpop.permute.xlu0 %2339
    %2343 = vset.pattern.permute.xlu0 0
    %2344 = vperm.xlu0 %2343, %v411
    %v2345 = vpop.permute.xlu0 %2344
    %2348 = vset.pattern.permute.xlu0 0
    %2349 = vperm.xlu0 %2348, %v412
    %v2350 = vpop.permute.xlu0 %2349
    %2353 = vset.pattern.permute.xlu0 0
    %2354 = vperm.xlu0 %2353, %v413
    %v2355 = vpop.permute.xlu0 %2354
    %2358 = vset.pattern.permute.xlu0 0
    %2359 = vperm.xlu0 %2358, %v414
    %v2360 = vpop.permute.xlu0 %2359
    %2363 = vset.pattern.permute.xlu0 0
    %2364 = vperm.xlu0 %2363, %v415
    %v2365 = vpop.permute.xlu0 %2364
    %2368 = vset.pattern.permute.xlu0 0
    %2369 = vperm.xlu0 %2368, %v416
    %v2370 = vpop.permute.xlu0 %2369
    %2373 = vset.pattern.permute.xlu0 0
    %2374 = vperm.xlu0 %2373, %v417
    %v2375 = vpop.permute.xlu0 %2374
    %2378 = vset.pattern.permute.xlu0 0
    %2379 = vperm.xlu0 %2378, %v418
    %v2380 = vpop.permute.xlu0 %2379
    %vm2382 = vcmask 523264
    %v2384 = vsel %vm2382, %v2271, 0
    %v2387 = vsel %vm2382, %v2273, 0
    %v2390 = vsel %vm2382, %v2275, 0
    %v2393 = vsel %vm2382, %v2277, 0
    %v2396 = vsel %vm2382, %v2279, 0
    %v2399 = vsel %vm2382, %v2281, 0
    %v2402 = vsel %vm2382, %v2283, 0
    %v2405 = vsel %vm2382, %v2285, 0
    %v2408 = vsel %vm2382, %v2287, 0
    %v2411 = vsel %vm2382, %v2289, 0
    %v2414 = vsel %vm2382, %v2291, 0
    %v2417 = vsel %vm2382, %v2293, 0
    %v2420 = vsel %vm2382, %v2295, 0
    %v2423 = vsel %vm2382, %v2297, 0
    %v2426 = vsel %vm2382, %v2299, 0
    %v2429 = vsel %vm2382, %v2301, 0
    %2431 = vmatpush.msra.mxu0 %v1750
    %2432 = vmatpush.msra.mxu0 %v1742
    %2433 = vmatpush.msra.mxu0 %v1734
    %2434 = vmatpush.msra.mxu0 %v1726
    %2435 = vmatpush.msra.mxu0 %v1718
    %2436 = vmatpush.msra.mxu0 %v1710
    %2437 = vmatpush.msra.mxu0 %v1702
    %2438 = vmatpush.msra.mxu0 %v1694
    %2439 = vmatpush.msra.mxu0 %v2006
    %2440 = vmatpush.msra.mxu0 %v1998
    %2441 = vmatpush.msra.mxu0 %v1990
    %2442 = vmatpush.msra.mxu0 %v1982
    %2443 = vmatpush.msra.mxu0 %v1974
    %2444 = vmatpush.msra.mxu0 %v1966
    %2445 = vmatpush.msra.mxu0 %v1958
    %2446 = vmatpush.msra.mxu0 %v1950
    %2447 = vmatmul.f32.gmra.mxu0 %v2270
    %v2448 = vpop.f32.mrf.mxu0
    %v2449 = vadd.f32 %v2305, %v2448
    %2450 = vmatmul.f32.gmra.mxu0 %v2272
    %v2451 = vpop.f32.mrf.mxu0
    %v2452 = vadd.f32 %v2310, %v2451
    %2453 = vmatmul.f32.gmra.mxu0 %v2274
    %v2454 = vpop.f32.mrf.mxu0
    %v2455 = vadd.f32 %v2315, %v2454
    %2456 = vmatmul.f32.gmra.mxu0 %v2276
    %v2457 = vpop.f32.mrf.mxu0
    %v2458 = vadd.f32 %v2320, %v2457
    %2459 = vmatmul.f32.gmra.mxu0 %v2278
    %v2460 = vpop.f32.mrf.mxu0
    %v2461 = vadd.f32 %v2325, %v2460
    %2462 = vmatmul.f32.gmra.mxu0 %v2280
    %v2463 = vpop.f32.mrf.mxu0
    %v2464 = vadd.f32 %v2330, %v2463
    %2465 = vmatmul.f32.gmra.mxu0 %v2282
    %v2466 = vpop.f32.mrf.mxu0
    %v2467 = vadd.f32 %v2335, %v2466
    %2468 = vmatmul.f32.gmra.mxu0 %v2284
    %v2469 = vpop.f32.mrf.mxu0
    %v2470 = vadd.f32 %v2340, %v2469
    %2471 = vmatmul.f32.gmra.mxu0 %v2286
    %v2472 = vpop.f32.mrf.mxu0
    %v2473 = vadd.f32 %v2345, %v2472
    %2474 = vmatmul.f32.gmra.mxu0 %v2288
    %v2475 = vpop.f32.mrf.mxu0
    %v2476 = vadd.f32 %v2350, %v2475
    %2477 = vmatmul.f32.gmra.mxu0 %v2290
    %v2478 = vpop.f32.mrf.mxu0
    %v2479 = vadd.f32 %v2355, %v2478
    %2480 = vmatmul.f32.gmra.mxu0 %v2292
    %v2481 = vpop.f32.mrf.mxu0
    %v2482 = vadd.f32 %v2360, %v2481
    %2483 = vmatmul.f32.gmra.mxu0 %v2294
    %v2484 = vpop.f32.mrf.mxu0
    %v2485 = vadd.f32 %v2365, %v2484
    %2486 = vmatmul.f32.gmra.mxu0 %v2296
    %v2487 = vpop.f32.mrf.mxu0
    %v2488 = vadd.f32 %v2370, %v2487
    %2489 = vmatmul.f32.gmra.mxu0 %v2298
    %v2490 = vpop.f32.mrf.mxu0
    %v2491 = vadd.f32 %v2375, %v2490
    %2492 = vmatmul.f32.gmra.mxu0 %v2300
    %v2493 = vpop.f32.mrf.mxu0
    %v2494 = vadd.f32 %v2380, %v2493
    %2495 = vdwg.mxu0
    %2496 = vmatpush.msra.mxu0 0.0
    %2497 = vmatpush.msra.mxu0 0.0
    %2498 = vmatpush.msra.mxu0 0.0
    %2499 = vmatpush.msra.mxu0 0.0
    %2500 = vmatpush.msra.mxu0 0.0
    %2501 = vmatpush.msra.mxu0 0.0
    %2502 = vmatpush.msra.mxu0 0.0
    %2503 = vmatpush.msra.mxu0 0.0
    %2504 = vmatpush.msra.mxu0 %v2262
    %2505 = vmatpush.msra.mxu0 %v2254
    %2506 = vmatpush.msra.mxu0 %v2246
    %2507 = vmatpush.msra.mxu0 %v2238
    %2508 = vmatpush.msra.mxu0 %v2230
    %2509 = vmatpush.msra.mxu0 %v2222
    %2510 = vmatpush.msra.mxu0 %v2214
    %2511 = vmatpush.msra.mxu0 %v2206
    %2512 = vmatmul.f32.gmra.mxu0 %v2384
    %v2513 = vpop.f32.mrf.mxu0
    %v2514 = vadd.f32 %v2449, %v2513
    %2515 = vmatmul.f32.gmra.mxu0 %v2387
    %v2516 = vpop.f32.mrf.mxu0
    %v2517 = vadd.f32 %v2452, %v2516
    %2518 = vmatmul.f32.gmra.mxu0 %v2390
    %v2519 = vpop.f32.mrf.mxu0
    %v2520 = vadd.f32 %v2455, %v2519
    %2521 = vmatmul.f32.gmra.mxu0 %v2393
    %v2522 = vpop.f32.mrf.mxu0
    %v2523 = vadd.f32 %v2458, %v2522
    %2524 = vmatmul.f32.gmra.mxu0 %v2396
    %v2525 = vpop.f32.mrf.mxu0
    %v2526 = vadd.f32 %v2461, %v2525
    %2527 = vmatmul.f32.gmra.mxu0 %v2399
    %v2528 = vpop.f32.mrf.mxu0
    %v2529 = vadd.f32 %v2464, %v2528
    %2530 = vmatmul.f32.gmra.mxu0 %v2402
    %v2531 = vpop.f32.mrf.mxu0
    %v2532 = vadd.f32 %v2467, %v2531
    %2533 = vmatmul.f32.gmra.mxu0 %v2405
    %v2534 = vpop.f32.mrf.mxu0
    %v2535 = vadd.f32 %v2470, %v2534
    %2536 = vmatmul.f32.gmra.mxu0 %v2408
    %v2537 = vpop.f32.mrf.mxu0
    %v2538 = vadd.f32 %v2473, %v2537
    %2539 = vmatmul.f32.gmra.mxu0 %v2411
    %v2540 = vpop.f32.mrf.mxu0
    %v2541 = vadd.f32 %v2476, %v2540
    %2542 = vmatmul.f32.gmra.mxu0 %v2414
    %v2543 = vpop.f32.mrf.mxu0
    %v2544 = vadd.f32 %v2479, %v2543
    %2545 = vmatmul.f32.gmra.mxu0 %v2417
    %v2546 = vpop.f32.mrf.mxu0
    %v2547 = vadd.f32 %v2482, %v2546
    %2548 = vmatmul.f32.gmra.mxu0 %v2420
    %v2549 = vpop.f32.mrf.mxu0
    %v2550 = vadd.f32 %v2485, %v2549
    %2551 = vmatmul.f32.gmra.mxu0 %v2423
    %v2552 = vpop.f32.mrf.mxu0
    %v2553 = vadd.f32 %v2488, %v2552
    %2554 = vmatmul.f32.gmra.mxu0 %v2426
    %v2555 = vpop.f32.mrf.mxu0
    %v2556 = vadd.f32 %v2491, %v2555
    %2557 = vmatmul.f32.gmra.mxu0 %v2429
    %v2558 = vpop.f32.mrf.mxu0
    %v2559 = vadd.f32 %v2494, %v2558
    %2560 = vdwg.mxu0
    %2561 = vmatpush.msra.mxu0 %v1751
    %2562 = vmatpush.msra.mxu0 %v1743
    %2563 = vmatpush.msra.mxu0 %v1735
    %2564 = vmatpush.msra.mxu0 %v1727
    %2565 = vmatpush.msra.mxu0 %v1719
    %2566 = vmatpush.msra.mxu0 %v1711
    %2567 = vmatpush.msra.mxu0 %v1703
    %2568 = vmatpush.msra.mxu0 %v1695
    %2569 = vmatpush.msra.mxu0 %v2007
    %2570 = vmatpush.msra.mxu0 %v1999
    %2571 = vmatpush.msra.mxu0 %v1991
    %2572 = vmatpush.msra.mxu0 %v1983
    %2573 = vmatpush.msra.mxu0 %v1975
    %2574 = vmatpush.msra.mxu0 %v1967
    %2575 = vmatpush.msra.mxu0 %v1959
    %2576 = vmatpush.msra.mxu0 %v1951
    %2577 = vmatmul.f32.gmra.mxu0 %v2270
    %v2578 = vpop.f32.mrf.mxu0
    %v2579 = vadd.f32 %v2305, %v2578
    %2580 = vmatmul.f32.gmra.mxu0 %v2272
    %v2581 = vpop.f32.mrf.mxu0
    %v2582 = vadd.f32 %v2310, %v2581
    %2583 = vmatmul.f32.gmra.mxu0 %v2274
    %v2584 = vpop.f32.mrf.mxu0
    %v2585 = vadd.f32 %v2315, %v2584
    %2586 = vmatmul.f32.gmra.mxu0 %v2276
    %v2587 = vpop.f32.mrf.mxu0
    %v2588 = vadd.f32 %v2320, %v2587
    %2589 = vmatmul.f32.gmra.mxu0 %v2278
    %v2590 = vpop.f32.mrf.mxu0
    %v2591 = vadd.f32 %v2325, %v2590
    %2592 = vmatmul.f32.gmra.mxu0 %v2280
    %v2593 = vpop.f32.mrf.mxu0
    %v2594 = vadd.f32 %v2330, %v2593
    %2595 = vmatmul.f32.gmra.mxu0 %v2282
    %v2596 = vpop.f32.mrf.mxu0
    %v2597 = vadd.f32 %v2335, %v2596
    %2598 = vmatmul.f32.gmra.mxu0 %v2284
    %v2599 = vpop.f32.mrf.mxu0
    %v2600 = vadd.f32 %v2340, %v2599
    %2601 = vmatmul.f32.gmra.mxu0 %v2286
    %v2602 = vpop.f32.mrf.mxu0
    %v2603 = vadd.f32 %v2345, %v2602
    %2604 = vmatmul.f32.gmra.mxu0 %v2288
    %v2605 = vpop.f32.mrf.mxu0
    %v2606 = vadd.f32 %v2350, %v2605
    %2607 = vmatmul.f32.gmra.mxu0 %v2290
    %v2608 = vpop.f32.mrf.mxu0
    %v2609 = vadd.f32 %v2355, %v2608
    %2610 = vmatmul.f32.gmra.mxu0 %v2292
    %v2611 = vpop.f32.mrf.mxu0
    %v2612 = vadd.f32 %v2360, %v2611
    %2613 = vmatmul.f32.gmra.mxu0 %v2294
    %v2614 = vpop.f32.mrf.mxu0
    %v2615 = vadd.f32 %v2365, %v2614
    %2616 = vmatmul.f32.gmra.mxu0 %v2296
    %v2617 = vpop.f32.mrf.mxu0
    %v2618 = vadd.f32 %v2370, %v2617
    %2619 = vmatmul.f32.gmra.mxu0 %v2298
    %v2620 = vpop.f32.mrf.mxu0
    %v2621 = vadd.f32 %v2375, %v2620
    %2622 = vmatmul.f32.gmra.mxu0 %v2300
    %v2623 = vpop.f32.mrf.mxu0
    %v2624 = vadd.f32 %v2380, %v2623
    %2625 = vdwg.mxu0
    %2626 = vmatpush.msra.mxu0 0.0
    %2627 = vmatpush.msra.mxu0 0.0
    %2628 = vmatpush.msra.mxu0 0.0
    %2629 = vmatpush.msra.mxu0 0.0
    %2630 = vmatpush.msra.mxu0 0.0
    %2631 = vmatpush.msra.mxu0 0.0
    %2632 = vmatpush.msra.mxu0 0.0
    %2633 = vmatpush.msra.mxu0 0.0
    %2634 = vmatpush.msra.mxu0 %v2263
    %2635 = vmatpush.msra.mxu0 %v2255
    %2636 = vmatpush.msra.mxu0 %v2247
    %2637 = vmatpush.msra.mxu0 %v2239
    %2638 = vmatpush.msra.mxu0 %v2231
    %2639 = vmatpush.msra.mxu0 %v2223
    %2640 = vmatpush.msra.mxu0 %v2215
    %2641 = vmatpush.msra.mxu0 %v2207
    %2642 = vmatmul.f32.gmra.mxu0 %v2384
    %v2643 = vpop.f32.mrf.mxu0
    %v2644 = vadd.f32 %v2579, %v2643
    %2645 = vmatmul.f32.gmra.mxu0 %v2387
    %v2646 = vpop.f32.mrf.mxu0
    %v2647 = vadd.f32 %v2582, %v2646
    %2648 = vmatmul.f32.gmra.mxu0 %v2390
    %v2649 = vpop.f32.mrf.mxu0
    %v2650 = vadd.f32 %v2585, %v2649
    %2651 = vmatmul.f32.gmra.mxu0 %v2393
    %v2652 = vpop.f32.mrf.mxu0
    %v2653 = vadd.f32 %v2588, %v2652
    %2654 = vmatmul.f32.gmra.mxu0 %v2396
    %v2655 = vpop.f32.mrf.mxu0
    %v2656 = vadd.f32 %v2591, %v2655
    %2657 = vmatmul.f32.gmra.mxu0 %v2399
    %v2658 = vpop.f32.mrf.mxu0
    %v2659 = vadd.f32 %v2594, %v2658
    %2660 = vmatmul.f32.gmra.mxu0 %v2402
    %v2661 = vpop.f32.mrf.mxu0
    %v2662 = vadd.f32 %v2597, %v2661
    %2663 = vmatmul.f32.gmra.mxu0 %v2405
    %v2664 = vpop.f32.mrf.mxu0
    %v2665 = vadd.f32 %v2600, %v2664
    %2666 = vmatmul.f32.gmra.mxu0 %v2408
    %v2667 = vpop.f32.mrf.mxu0
    %v2668 = vadd.f32 %v2603, %v2667
    %2669 = vmatmul.f32.gmra.mxu0 %v2411
    %v2670 = vpop.f32.mrf.mxu0
    %v2671 = vadd.f32 %v2606, %v2670
    %2672 = vmatmul.f32.gmra.mxu0 %v2414
    %v2673 = vpop.f32.mrf.mxu0
    %v2674 = vadd.f32 %v2609, %v2673
    %2675 = vmatmul.f32.gmra.mxu0 %v2417
    %v2676 = vpop.f32.mrf.mxu0
    %v2677 = vadd.f32 %v2612, %v2676
    %2678 = vmatmul.f32.gmra.mxu0 %v2420
    %v2679 = vpop.f32.mrf.mxu0
    %v2680 = vadd.f32 %v2615, %v2679
    %2681 = vmatmul.f32.gmra.mxu0 %v2423
    %v2682 = vpop.f32.mrf.mxu0
    %v2683 = vadd.f32 %v2618, %v2682
    %2684 = vmatmul.f32.gmra.mxu0 %v2426
    %v2685 = vpop.f32.mrf.mxu0
    %v2686 = vadd.f32 %v2621, %v2685
    %2687 = vmatmul.f32.gmra.mxu0 %v2429
    %v2688 = vpop.f32.mrf.mxu0
    %v2689 = vadd.f32 %v2624, %v2688
    %2690 = vdwg.mxu0
    %2691 = vmatpush.msra.mxu0 %v1752
    %2692 = vmatpush.msra.mxu0 %v1744
    %2693 = vmatpush.msra.mxu0 %v1736
    %2694 = vmatpush.msra.mxu0 %v1728
    %2695 = vmatpush.msra.mxu0 %v1720
    %2696 = vmatpush.msra.mxu0 %v1712
    %2697 = vmatpush.msra.mxu0 %v1704
    %2698 = vmatpush.msra.mxu0 %v1696
    %2699 = vmatpush.msra.mxu0 %v2008
    %2700 = vmatpush.msra.mxu0 %v2000
    %2701 = vmatpush.msra.mxu0 %v1992
    %2702 = vmatpush.msra.mxu0 %v1984
    %2703 = vmatpush.msra.mxu0 %v1976
    %2704 = vmatpush.msra.mxu0 %v1968
    %2705 = vmatpush.msra.mxu0 %v1960
    %2706 = vmatpush.msra.mxu0 %v1952
    %2707 = vmatmul.f32.gmra.mxu0 %v2270
    %v2708 = vpop.f32.mrf.mxu0
    %v2709 = vadd.f32 %v2305, %v2708
    %2710 = vmatmul.f32.gmra.mxu0 %v2272
    %v2711 = vpop.f32.mrf.mxu0
    %v2712 = vadd.f32 %v2310, %v2711
    %2713 = vmatmul.f32.gmra.mxu0 %v2274
    %v2714 = vpop.f32.mrf.mxu0
    %v2715 = vadd.f32 %v2315, %v2714
    %2716 = vmatmul.f32.gmra.mxu0 %v2276
    %v2717 = vpop.f32.mrf.mxu0
    %v2718 = vadd.f32 %v2320, %v2717
    %2719 = vmatmul.f32.gmra.mxu0 %v2278
    %v2720 = vpop.f32.mrf.mxu0
    %v2721 = vadd.f32 %v2325, %v2720
    %2722 = vmatmul.f32.gmra.mxu0 %v2280
    %v2723 = vpop.f32.mrf.mxu0
    %v2724 = vadd.f32 %v2330, %v2723
    %2725 = vmatmul.f32.gmra.mxu0 %v2282
    %v2726 = vpop.f32.mrf.mxu0
    %v2727 = vadd.f32 %v2335, %v2726
    %2728 = vmatmul.f32.gmra.mxu0 %v2284
    %v2729 = vpop.f32.mrf.mxu0
    %v2730 = vadd.f32 %v2340, %v2729
    %2731 = vmatmul.f32.gmra.mxu0 %v2286
    %v2732 = vpop.f32.mrf.mxu0
    %v2733 = vadd.f32 %v2345, %v2732
    %2734 = vmatmul.f32.gmra.mxu0 %v2288
    %v2735 = vpop.f32.mrf.mxu0
    %v2736 = vadd.f32 %v2350, %v2735
    %2737 = vmatmul.f32.gmra.mxu0 %v2290
    %v2738 = vpop.f32.mrf.mxu0
    %v2739 = vadd.f32 %v2355, %v2738
    %2740 = vmatmul.f32.gmra.mxu0 %v2292
    %v2741 = vpop.f32.mrf.mxu0
    %v2742 = vadd.f32 %v2360, %v2741
    %2743 = vmatmul.f32.gmra.mxu0 %v2294
    %v2744 = vpop.f32.mrf.mxu0
    %v2745 = vadd.f32 %v2365, %v2744
    %2746 = vmatmul.f32.gmra.mxu0 %v2296
    %v2747 = vpop.f32.mrf.mxu0
    %v2748 = vadd.f32 %v2370, %v2747
    %2749 = vmatmul.f32.gmra.mxu0 %v2298
    %v2750 = vpop.f32.mrf.mxu0
    %v2751 = vadd.f32 %v2375, %v2750
    %2752 = vmatmul.f32.gmra.mxu0 %v2300
    %v2753 = vpop.f32.mrf.mxu0
    %v2754 = vadd.f32 %v2380, %v2753
    %2755 = vdwg.mxu0
    %2756 = vmatpush.msra.mxu0 0.0
    %2757 = vmatpush.msra.mxu0 0.0
    %2758 = vmatpush.msra.mxu0 0.0
    %2759 = vmatpush.msra.mxu0 0.0
    %2760 = vmatpush.msra.mxu0 0.0
    %2761 = vmatpush.msra.mxu0 0.0
    %2762 = vmatpush.msra.mxu0 0.0
    %2763 = vmatpush.msra.mxu0 0.0
    %2764 = vmatpush.msra.mxu0 %v2264
    %2765 = vmatpush.msra.mxu0 %v2256
    %2766 = vmatpush.msra.mxu0 %v2248
    %2767 = vmatpush.msra.mxu0 %v2240
    %2768 = vmatpush.msra.mxu0 %v2232
    %2769 = vmatpush.msra.mxu0 %v2224
    %2770 = vmatpush.msra.mxu0 %v2216
    %2771 = vmatpush.msra.mxu0 %v2208
    %2772 = vmatmul.f32.gmra.mxu0 %v2384
    %v2773 = vpop.f32.mrf.mxu0
    %v2774 = vadd.f32 %v2709, %v2773
    %2775 = vmatmul.f32.gmra.mxu0 %v2387
    %v2776 = vpop.f32.mrf.mxu0
    %v2777 = vadd.f32 %v2712, %v2776
    %2778 = vmatmul.f32.gmra.mxu0 %v2390
    %v2779 = vpop.f32.mrf.mxu0
    %v2780 = vadd.f32 %v2715, %v2779
    %2781 = vmatmul.f32.gmra.mxu0 %v2393
    %v2782 = vpop.f32.mrf.mxu0
    %v2783 = vadd.f32 %v2718, %v2782
    %2784 = vmatmul.f32.gmra.mxu0 %v2396
    %v2785 = vpop.f32.mrf.mxu0
    %v2786 = vadd.f32 %v2721, %v2785
    %2787 = vmatmul.f32.gmra.mxu0 %v2399
    %v2788 = vpop.f32.mrf.mxu0
    %v2789 = vadd.f32 %v2724, %v2788
    %2790 = vmatmul.f32.gmra.mxu0 %v2402
    %v2791 = vpop.f32.mrf.mxu0
    %v2792 = vadd.f32 %v2727, %v2791
    %2793 = vmatmul.f32.gmra.mxu0 %v2405
    %v2794 = vpop.f32.mrf.mxu0
    %v2795 = vadd.f32 %v2730, %v2794
    %2796 = vmatmul.f32.gmra.mxu0 %v2408
    %v2797 = vpop.f32.mrf.mxu0
    %v2798 = vadd.f32 %v2733, %v2797
    %2799 = vmatmul.f32.gmra.mxu0 %v2411
    %v2800 = vpop.f32.mrf.mxu0
    %v2801 = vadd.f32 %v2736, %v2800
    %2802 = vmatmul.f32.gmra.mxu0 %v2414
    %v2803 = vpop.f32.mrf.mxu0
    %v2804 = vadd.f32 %v2739, %v2803
    %2805 = vmatmul.f32.gmra.mxu0 %v2417
    %v2806 = vpop.f32.mrf.mxu0
    %v2807 = vadd.f32 %v2742, %v2806
    %2808 = vmatmul.f32.gmra.mxu0 %v2420
    %v2809 = vpop.f32.mrf.mxu0
    %v2810 = vadd.f32 %v2745, %v2809
    %2811 = vmatmul.f32.gmra.mxu0 %v2423
    %v2812 = vpop.f32.mrf.mxu0
    %v2813 = vadd.f32 %v2748, %v2812
    %2814 = vmatmul.f32.gmra.mxu0 %v2426
    %v2815 = vpop.f32.mrf.mxu0
    %v2816 = vadd.f32 %v2751, %v2815
    %2817 = vmatmul.f32.gmra.mxu0 %v2429
    %v2818 = vpop.f32.mrf.mxu0
    %v2819 = vadd.f32 %v2754, %v2818
    %2820 = vdwg.mxu0
    %2821 = vmatpush.msra.mxu0 %v1753
    %2822 = vmatpush.msra.mxu0 %v1745
    %2823 = vmatpush.msra.mxu0 %v1737
    %2824 = vmatpush.msra.mxu0 %v1729
    %2825 = vmatpush.msra.mxu0 %v1721
    %2826 = vmatpush.msra.mxu0 %v1713
    %2827 = vmatpush.msra.mxu0 %v1705
    %2828 = vmatpush.msra.mxu0 %v1697
    %2829 = vmatpush.msra.mxu0 %v2009
    %2830 = vmatpush.msra.mxu0 %v2001
    %2831 = vmatpush.msra.mxu0 %v1993
    %2832 = vmatpush.msra.mxu0 %v1985
    %2833 = vmatpush.msra.mxu0 %v1977
    %2834 = vmatpush.msra.mxu0 %v1969
    %2835 = vmatpush.msra.mxu0 %v1961
    %2836 = vmatpush.msra.mxu0 %v1953
    %2837 = vmatmul.f32.gmra.mxu0 %v2270
    %v2838 = vpop.f32.mrf.mxu0
    %v2839 = vadd.f32 %v2305, %v2838
    %2840 = vmatmul.f32.gmra.mxu0 %v2272
    %v2841 = vpop.f32.mrf.mxu0
    %v2842 = vadd.f32 %v2310, %v2841
    %2843 = vmatmul.f32.gmra.mxu0 %v2274
    %v2844 = vpop.f32.mrf.mxu0
    %v2845 = vadd.f32 %v2315, %v2844
    %2846 = vmatmul.f32.gmra.mxu0 %v2276
    %v2847 = vpop.f32.mrf.mxu0
    %v2848 = vadd.f32 %v2320, %v2847
    %2849 = vmatmul.f32.gmra.mxu0 %v2278
    %v2850 = vpop.f32.mrf.mxu0
    %v2851 = vadd.f32 %v2325, %v2850
    %2852 = vmatmul.f32.gmra.mxu0 %v2280
    %v2853 = vpop.f32.mrf.mxu0
    %v2854 = vadd.f32 %v2330, %v2853
    %2855 = vmatmul.f32.gmra.mxu0 %v2282
    %v2856 = vpop.f32.mrf.mxu0
    %v2857 = vadd.f32 %v2335, %v2856
    %2858 = vmatmul.f32.gmra.mxu0 %v2284
    %v2859 = vpop.f32.mrf.mxu0
    %v2860 = vadd.f32 %v2340, %v2859
    %2861 = vmatmul.f32.gmra.mxu0 %v2286
    %v2862 = vpop.f32.mrf.mxu0
    %v2863 = vadd.f32 %v2345, %v2862
    %2864 = vmatmul.f32.gmra.mxu0 %v2288
    %v2865 = vpop.f32.mrf.mxu0
    %v2866 = vadd.f32 %v2350, %v2865
    %2867 = vmatmul.f32.gmra.mxu0 %v2290
    %v2868 = vpop.f32.mrf.mxu0
    %v2869 = vadd.f32 %v2355, %v2868
    %2870 = vmatmul.f32.gmra.mxu0 %v2292
    %v2871 = vpop.f32.mrf.mxu0
    %v2872 = vadd.f32 %v2360, %v2871
    %2873 = vmatmul.f32.gmra.mxu0 %v2294
    %v2874 = vpop.f32.mrf.mxu0
    %v2875 = vadd.f32 %v2365, %v2874
    %2876 = vmatmul.f32.gmra.mxu0 %v2296
    %v2877 = vpop.f32.mrf.mxu0
    %v2878 = vadd.f32 %v2370, %v2877
    %2879 = vmatmul.f32.gmra.mxu0 %v2298
    %v2880 = vpop.f32.mrf.mxu0
    %v2881 = vadd.f32 %v2375, %v2880
    %2882 = vmatmul.f32.gmra.mxu0 %v2300
    %v2883 = vpop.f32.mrf.mxu0
    %v2884 = vadd.f32 %v2380, %v2883
    %2885 = vdwg.mxu0
    %2886 = vmatpush.msra.mxu0 0.0
    %2887 = vmatpush.msra.mxu0 0.0
    %2888 = vmatpush.msra.mxu0 0.0
    %2889 = vmatpush.msra.mxu0 0.0
    %2890 = vmatpush.msra.mxu0 0.0
    %2891 = vmatpush.msra.mxu0 0.0
    %2892 = vmatpush.msra.mxu0 0.0
    %2893 = vmatpush.msra.mxu0 0.0
    %2894 = vmatpush.msra.mxu0 %v2265
    %2895 = vmatpush.msra.mxu0 %v2257
    %2896 = vmatpush.msra.mxu0 %v2249
    %2897 = vmatpush.msra.mxu0 %v2241
    %2898 = vmatpush.msra.mxu0 %v2233
    %2899 = vmatpush.msra.mxu0 %v2225
    %2900 = vmatpush.msra.mxu0 %v2217
    %2901 = vmatpush.msra.mxu0 %v2209
    %2902 = vmatmul.f32.gmra.mxu0 %v2384
    %v2903 = vpop.f32.mrf.mxu0
    %v2904 = vadd.f32 %v2839, %v2903
    %2905 = vmatmul.f32.gmra.mxu0 %v2387
    %v2906 = vpop.f32.mrf.mxu0
    %v2907 = vadd.f32 %v2842, %v2906
    %2908 = vmatmul.f32.gmra.mxu0 %v2390
    %v2909 = vpop.f32.mrf.mxu0
    %v2910 = vadd.f32 %v2845, %v2909
    %2911 = vmatmul.f32.gmra.mxu0 %v2393
    %v2912 = vpop.f32.mrf.mxu0
    %v2913 = vadd.f32 %v2848, %v2912
    %2914 = vmatmul.f32.gmra.mxu0 %v2396
    %v2915 = vpop.f32.mrf.mxu0
    %v2916 = vadd.f32 %v2851, %v2915
    %2917 = vmatmul.f32.gmra.mxu0 %v2399
    %v2918 = vpop.f32.mrf.mxu0
    %v2919 = vadd.f32 %v2854, %v2918
    %2920 = vmatmul.f32.gmra.mxu0 %v2402
    %v2921 = vpop.f32.mrf.mxu0
    %v2922 = vadd.f32 %v2857, %v2921
    %2923 = vmatmul.f32.gmra.mxu0 %v2405
    %v2924 = vpop.f32.mrf.mxu0
    %v2925 = vadd.f32 %v2860, %v2924
    %2926 = vmatmul.f32.gmra.mxu0 %v2408
    %v2927 = vpop.f32.mrf.mxu0
    %v2928 = vadd.f32 %v2863, %v2927
    %2929 = vmatmul.f32.gmra.mxu0 %v2411
    %v2930 = vpop.f32.mrf.mxu0
    %v2931 = vadd.f32 %v2866, %v2930
    %2932 = vmatmul.f32.gmra.mxu0 %v2414
    %v2933 = vpop.f32.mrf.mxu0
    %v2934 = vadd.f32 %v2869, %v2933
    %2935 = vmatmul.f32.gmra.mxu0 %v2417
    %v2936 = vpop.f32.mrf.mxu0
    %v2937 = vadd.f32 %v2872, %v2936
    %2938 = vmatmul.f32.gmra.mxu0 %v2420
    %v2939 = vpop.f32.mrf.mxu0
    %v2940 = vadd.f32 %v2875, %v2939
    %2941 = vmatmul.f32.gmra.mxu0 %v2423
    %v2942 = vpop.f32.mrf.mxu0
    %v2943 = vadd.f32 %v2878, %v2942
    %2944 = vmatmul.f32.gmra.mxu0 %v2426
    %v2945 = vpop.f32.mrf.mxu0
    %v2946 = vadd.f32 %v2881, %v2945
    %2947 = vmatmul.f32.gmra.mxu0 %v2429
    %v2948 = vpop.f32.mrf.mxu0
    %v2949 = vadd.f32 %v2884, %v2948
    %2950 = vdwg.mxu0
    %2951 = vmatpush.msra.mxu0 %v1754
    %2952 = vmatpush.msra.mxu0 %v1746
    %2953 = vmatpush.msra.mxu0 %v1738
    %2954 = vmatpush.msra.mxu0 %v1730
    %2955 = vmatpush.msra.mxu0 %v1722
    %2956 = vmatpush.msra.mxu0 %v1714
    %2957 = vmatpush.msra.mxu0 %v1706
    %2958 = vmatpush.msra.mxu0 %v1698
    %2959 = vmatpush.msra.mxu0 %v2010
    %2960 = vmatpush.msra.mxu0 %v2002
    %2961 = vmatpush.msra.mxu0 %v1994
    %2962 = vmatpush.msra.mxu0 %v1986
    %2963 = vmatpush.msra.mxu0 %v1978
    %2964 = vmatpush.msra.mxu0 %v1970
    %2965 = vmatpush.msra.mxu0 %v1962
    %2966 = vmatpush.msra.mxu0 %v1954
    %2967 = vmatmul.f32.gmra.mxu0 %v2270
    %v2968 = vpop.f32.mrf.mxu0
    %v2969 = vadd.f32 %v2305, %v2968
    %2970 = vmatmul.f32.gmra.mxu0 %v2272
    %v2971 = vpop.f32.mrf.mxu0
    %v2972 = vadd.f32 %v2310, %v2971
    %2973 = vmatmul.f32.gmra.mxu0 %v2274
    %v2974 = vpop.f32.mrf.mxu0
    %v2975 = vadd.f32 %v2315, %v2974
    %2976 = vmatmul.f32.gmra.mxu0 %v2276
    %v2977 = vpop.f32.mrf.mxu0
    %v2978 = vadd.f32 %v2320, %v2977
    %2979 = vmatmul.f32.gmra.mxu0 %v2278
    %v2980 = vpop.f32.mrf.mxu0
    %v2981 = vadd.f32 %v2325, %v2980
    %2982 = vmatmul.f32.gmra.mxu0 %v2280
    %v2983 = vpop.f32.mrf.mxu0
    %v2984 = vadd.f32 %v2330, %v2983
    %2985 = vmatmul.f32.gmra.mxu0 %v2282
    %v2986 = vpop.f32.mrf.mxu0
    %v2987 = vadd.f32 %v2335, %v2986
    %2988 = vmatmul.f32.gmra.mxu0 %v2284
    %v2989 = vpop.f32.mrf.mxu0
    %v2990 = vadd.f32 %v2340, %v2989
    %2991 = vmatmul.f32.gmra.mxu0 %v2286
    %v2992 = vpop.f32.mrf.mxu0
    %v2993 = vadd.f32 %v2345, %v2992
    %2994 = vmatmul.f32.gmra.mxu0 %v2288
    %v2995 = vpop.f32.mrf.mxu0
    %v2996 = vadd.f32 %v2350, %v2995
    %2997 = vmatmul.f32.gmra.mxu0 %v2290
    %v2998 = vpop.f32.mrf.mxu0
    %v2999 = vadd.f32 %v2355, %v2998
    %3000 = vmatmul.f32.gmra.mxu0 %v2292
    %v3001 = vpop.f32.mrf.mxu0
    %v3002 = vadd.f32 %v2360, %v3001
    %3003 = vmatmul.f32.gmra.mxu0 %v2294
    %v3004 = vpop.f32.mrf.mxu0
    %v3005 = vadd.f32 %v2365, %v3004
    %3006 = vmatmul.f32.gmra.mxu0 %v2296
    %v3007 = vpop.f32.mrf.mxu0
    %v3008 = vadd.f32 %v2370, %v3007
    %3009 = vmatmul.f32.gmra.mxu0 %v2298
    %v3010 = vpop.f32.mrf.mxu0
    %v3011 = vadd.f32 %v2375, %v3010
    %3012 = vmatmul.f32.gmra.mxu0 %v2300
    %v3013 = vpop.f32.mrf.mxu0
    %v3014 = vadd.f32 %v2380, %v3013
    %3015 = vdwg.mxu0
    %3016 = vmatpush.msra.mxu0 0.0
    %3017 = vmatpush.msra.mxu0 0.0
    %3018 = vmatpush.msra.mxu0 0.0
    %3019 = vmatpush.msra.mxu0 0.0
    %3020 = vmatpush.msra.mxu0 0.0
    %3021 = vmatpush.msra.mxu0 0.0
    %3022 = vmatpush.msra.mxu0 0.0
    %3023 = vmatpush.msra.mxu0 0.0
    %3024 = vmatpush.msra.mxu0 %v2266
    %3025 = vmatpush.msra.mxu0 %v2258
    %3026 = vmatpush.msra.mxu0 %v2250
    %3027 = vmatpush.msra.mxu0 %v2242
    %3028 = vmatpush.msra.mxu0 %v2234
    %3029 = vmatpush.msra.mxu0 %v2226
    %3030 = vmatpush.msra.mxu0 %v2218
    %3031 = vmatpush.msra.mxu0 %v2210
    %3032 = vmatmul.f32.gmra.mxu0 %v2384
    %v3033 = vpop.f32.mrf.mxu0
    %v3034 = vadd.f32 %v2969, %v3033
    %3035 = vmatmul.f32.gmra.mxu0 %v2387
    %v3036 = vpop.f32.mrf.mxu0
    %v3037 = vadd.f32 %v2972, %v3036
    %3038 = vmatmul.f32.gmra.mxu0 %v2390
    %v3039 = vpop.f32.mrf.mxu0
    %v3040 = vadd.f32 %v2975, %v3039
    %3041 = vmatmul.f32.gmra.mxu0 %v2393
    %v3042 = vpop.f32.mrf.mxu0
    %v3043 = vadd.f32 %v2978, %v3042
    %3044 = vmatmul.f32.gmra.mxu0 %v2396
    %v3045 = vpop.f32.mrf.mxu0
    %v3046 = vadd.f32 %v2981, %v3045
    %3047 = vmatmul.f32.gmra.mxu0 %v2399
    %v3048 = vpop.f32.mrf.mxu0
    %v3049 = vadd.f32 %v2984, %v3048
    %3050 = vmatmul.f32.gmra.mxu0 %v2402
    %v3051 = vpop.f32.mrf.mxu0
    %v3052 = vadd.f32 %v2987, %v3051
    %3053 = vmatmul.f32.gmra.mxu0 %v2405
    %v3054 = vpop.f32.mrf.mxu0
    %v3055 = vadd.f32 %v2990, %v3054
    %3056 = vmatmul.f32.gmra.mxu0 %v2408
    %v3057 = vpop.f32.mrf.mxu0
    %v3058 = vadd.f32 %v2993, %v3057
    %3059 = vmatmul.f32.gmra.mxu0 %v2411
    %v3060 = vpop.f32.mrf.mxu0
    %v3061 = vadd.f32 %v2996, %v3060
    %3062 = vmatmul.f32.gmra.mxu0 %v2414
    %v3063 = vpop.f32.mrf.mxu0
    %v3064 = vadd.f32 %v2999, %v3063
    %3065 = vmatmul.f32.gmra.mxu0 %v2417
    %v3066 = vpop.f32.mrf.mxu0
    %v3067 = vadd.f32 %v3002, %v3066
    %3068 = vmatmul.f32.gmra.mxu0 %v2420
    %v3069 = vpop.f32.mrf.mxu0
    %v3070 = vadd.f32 %v3005, %v3069
    %3071 = vmatmul.f32.gmra.mxu0 %v2423
    %v3072 = vpop.f32.mrf.mxu0
    %v3073 = vadd.f32 %v3008, %v3072
    %3074 = vmatmul.f32.gmra.mxu0 %v2426
    %v3075 = vpop.f32.mrf.mxu0
    %v3076 = vadd.f32 %v3011, %v3075
    %3077 = vmatmul.f32.gmra.mxu0 %v2429
    %v3078 = vpop.f32.mrf.mxu0
    %v3079 = vadd.f32 %v3014, %v3078
    %3080 = vdwg.mxu0
    %3081 = vmatpush.msra.mxu0 %v1755
    %3082 = vmatpush.msra.mxu0 %v1747
    %3083 = vmatpush.msra.mxu0 %v1739
    %3084 = vmatpush.msra.mxu0 %v1731
    %3085 = vmatpush.msra.mxu0 %v1723
    %3086 = vmatpush.msra.mxu0 %v1715
    %3087 = vmatpush.msra.mxu0 %v1707
    %3088 = vmatpush.msra.mxu0 %v1699
    %3089 = vmatpush.msra.mxu0 %v2011
    %3090 = vmatpush.msra.mxu0 %v2003
    %3091 = vmatpush.msra.mxu0 %v1995
    %3092 = vmatpush.msra.mxu0 %v1987
    %3093 = vmatpush.msra.mxu0 %v1979
    %3094 = vmatpush.msra.mxu0 %v1971
    %3095 = vmatpush.msra.mxu0 %v1963
    %3096 = vmatpush.msra.mxu0 %v1955
    %3097 = vmatmul.f32.gmra.mxu0 %v2270
    %v3098 = vpop.f32.mrf.mxu0
    %v3099 = vadd.f32 %v2305, %v3098
    %3100 = vmatmul.f32.gmra.mxu0 %v2272
    %v3101 = vpop.f32.mrf.mxu0
    %v3102 = vadd.f32 %v2310, %v3101
    %3103 = vmatmul.f32.gmra.mxu0 %v2274
    %v3104 = vpop.f32.mrf.mxu0
    %v3105 = vadd.f32 %v2315, %v3104
    %3106 = vmatmul.f32.gmra.mxu0 %v2276
    %v3107 = vpop.f32.mrf.mxu0
    %v3108 = vadd.f32 %v2320, %v3107
    %3109 = vmatmul.f32.gmra.mxu0 %v2278
    %v3110 = vpop.f32.mrf.mxu0
    %v3111 = vadd.f32 %v2325, %v3110
    %3112 = vmatmul.f32.gmra.mxu0 %v2280
    %v3113 = vpop.f32.mrf.mxu0
    %v3114 = vadd.f32 %v2330, %v3113
    %3115 = vmatmul.f32.gmra.mxu0 %v2282
    %v3116 = vpop.f32.mrf.mxu0
    %v3117 = vadd.f32 %v2335, %v3116
    %3118 = vmatmul.f32.gmra.mxu0 %v2284
    %v3119 = vpop.f32.mrf.mxu0
    %v3120 = vadd.f32 %v2340, %v3119
    %3121 = vmatmul.f32.gmra.mxu0 %v2286
    %v3122 = vpop.f32.mrf.mxu0
    %v3123 = vadd.f32 %v2345, %v3122
    %3124 = vmatmul.f32.gmra.mxu0 %v2288
    %v3125 = vpop.f32.mrf.mxu0
    %v3126 = vadd.f32 %v2350, %v3125
    %3127 = vmatmul.f32.gmra.mxu0 %v2290
    %v3128 = vpop.f32.mrf.mxu0
    %v3129 = vadd.f32 %v2355, %v3128
    %3130 = vmatmul.f32.gmra.mxu0 %v2292
    %v3131 = vpop.f32.mrf.mxu0
    %v3132 = vadd.f32 %v2360, %v3131
    %3133 = vmatmul.f32.gmra.mxu0 %v2294
    %v3134 = vpop.f32.mrf.mxu0
    %v3135 = vadd.f32 %v2365, %v3134
    %3136 = vmatmul.f32.gmra.mxu0 %v2296
    %v3137 = vpop.f32.mrf.mxu0
    %v3138 = vadd.f32 %v2370, %v3137
    %3139 = vmatmul.f32.gmra.mxu0 %v2298
    %v3140 = vpop.f32.mrf.mxu0
    %v3141 = vadd.f32 %v2375, %v3140
    %3142 = vmatmul.f32.gmra.mxu0 %v2300
    %v3143 = vpop.f32.mrf.mxu0
    %v3144 = vadd.f32 %v2380, %v3143
    %3145 = vdwg.mxu0
    %3146 = vmatpush.msra.mxu0 0.0
    %3147 = vmatpush.msra.mxu0 0.0
    %3148 = vmatpush.msra.mxu0 0.0
    %3149 = vmatpush.msra.mxu0 0.0
    %3150 = vmatpush.msra.mxu0 0.0
    %3151 = vmatpush.msra.mxu0 0.0
    %3152 = vmatpush.msra.mxu0 0.0
    %3153 = vmatpush.msra.mxu0 0.0
    %3154 = vmatpush.msra.mxu0 %v2267
    %3155 = vmatpush.msra.mxu0 %v2259
    %3156 = vmatpush.msra.mxu0 %v2251
    %3157 = vmatpush.msra.mxu0 %v2243
    %3158 = vmatpush.msra.mxu0 %v2235
    %3159 = vmatpush.msra.mxu0 %v2227
    %3160 = vmatpush.msra.mxu0 %v2219
    %3161 = vmatpush.msra.mxu0 %v2211
    %3162 = vmatmul.f32.gmra.mxu0 %v2384
    %v3163 = vpop.f32.mrf.mxu0
    %v3164 = vadd.f32 %v3099, %v3163
    %3165 = vmatmul.f32.gmra.mxu0 %v2387
    %v3166 = vpop.f32.mrf.mxu0
    %v3167 = vadd.f32 %v3102, %v3166
    %3168 = vmatmul.f32.gmra.mxu0 %v2390
    %v3169 = vpop.f32.mrf.mxu0
    %v3170 = vadd.f32 %v3105, %v3169
    %3171 = vmatmul.f32.gmra.mxu0 %v2393
    %v3172 = vpop.f32.mrf.mxu0
    %v3173 = vadd.f32 %v3108, %v3172
    %3174 = vmatmul.f32.gmra.mxu0 %v2396
    %v3175 = vpop.f32.mrf.mxu0
    %v3176 = vadd.f32 %v3111, %v3175
    %3177 = vmatmul.f32.gmra.mxu0 %v2399
    %v3178 = vpop.f32.mrf.mxu0
    %v3179 = vadd.f32 %v3114, %v3178
    %3180 = vmatmul.f32.gmra.mxu0 %v2402
    %v3181 = vpop.f32.mrf.mxu0
    %v3182 = vadd.f32 %v3117, %v3181
    %3183 = vmatmul.f32.gmra.mxu0 %v2405
    %v3184 = vpop.f32.mrf.mxu0
    %v3185 = vadd.f32 %v3120, %v3184
    %3186 = vmatmul.f32.gmra.mxu0 %v2408
    %v3187 = vpop.f32.mrf.mxu0
    %v3188 = vadd.f32 %v3123, %v3187
    %3189 = vmatmul.f32.gmra.mxu0 %v2411
    %v3190 = vpop.f32.mrf.mxu0
    %v3191 = vadd.f32 %v3126, %v3190
    %3192 = vmatmul.f32.gmra.mxu0 %v2414
    %v3193 = vpop.f32.mrf.mxu0
    %v3194 = vadd.f32 %v3129, %v3193
    %3195 = vmatmul.f32.gmra.mxu0 %v2417
    %v3196 = vpop.f32.mrf.mxu0
    %v3197 = vadd.f32 %v3132, %v3196
    %3198 = vmatmul.f32.gmra.mxu0 %v2420
    %v3199 = vpop.f32.mrf.mxu0
    %v3200 = vadd.f32 %v3135, %v3199
    %3201 = vmatmul.f32.gmra.mxu0 %v2423
    %v3202 = vpop.f32.mrf.mxu0
    %v3203 = vadd.f32 %v3138, %v3202
    %3204 = vmatmul.f32.gmra.mxu0 %v2426
    %v3205 = vpop.f32.mrf.mxu0
    %v3206 = vadd.f32 %v3141, %v3205
    %3207 = vmatmul.f32.gmra.mxu0 %v2429
    %v3208 = vpop.f32.mrf.mxu0
    %v3209 = vadd.f32 %v3144, %v3208
    %3210 = vdwg.mxu0
    %3211 = vmatpush.msra.mxu0 %v1756
    %3212 = vmatpush.msra.mxu0 %v1748
    %3213 = vmatpush.msra.mxu0 %v1740
    %3214 = vmatpush.msra.mxu0 %v1732
    %3215 = vmatpush.msra.mxu0 %v1724
    %3216 = vmatpush.msra.mxu0 %v1716
    %3217 = vmatpush.msra.mxu0 %v1708
    %3218 = vmatpush.msra.mxu0 %v1700
    %3219 = vmatpush.msra.mxu0 %v2012
    %3220 = vmatpush.msra.mxu0 %v2004
    %3221 = vmatpush.msra.mxu0 %v1996
    %3222 = vmatpush.msra.mxu0 %v1988
    %3223 = vmatpush.msra.mxu0 %v1980
    %3224 = vmatpush.msra.mxu0 %v1972
    %3225 = vmatpush.msra.mxu0 %v1964
    %3226 = vmatpush.msra.mxu0 %v1956
    %3227 = vmatmul.f32.gmra.mxu0 %v2270
    %v3228 = vpop.f32.mrf.mxu0
    %v3229 = vadd.f32 %v2305, %v3228
    %3230 = vmatmul.f32.gmra.mxu0 %v2272
    %v3231 = vpop.f32.mrf.mxu0
    %v3232 = vadd.f32 %v2310, %v3231
    %3233 = vmatmul.f32.gmra.mxu0 %v2274
    %v3234 = vpop.f32.mrf.mxu0
    %v3235 = vadd.f32 %v2315, %v3234
    %3236 = vmatmul.f32.gmra.mxu0 %v2276
    %v3237 = vpop.f32.mrf.mxu0
    %v3238 = vadd.f32 %v2320, %v3237
    %3239 = vmatmul.f32.gmra.mxu0 %v2278
    %v3240 = vpop.f32.mrf.mxu0
    %v3241 = vadd.f32 %v2325, %v3240
    %3242 = vmatmul.f32.gmra.mxu0 %v2280
    %v3243 = vpop.f32.mrf.mxu0
    %v3244 = vadd.f32 %v2330, %v3243
    %3245 = vmatmul.f32.gmra.mxu0 %v2282
    %v3246 = vpop.f32.mrf.mxu0
    %v3247 = vadd.f32 %v2335, %v3246
    %3248 = vmatmul.f32.gmra.mxu0 %v2284
    %v3249 = vpop.f32.mrf.mxu0
    %v3250 = vadd.f32 %v2340, %v3249
    %3251 = vmatmul.f32.gmra.mxu0 %v2286
    %v3252 = vpop.f32.mrf.mxu0
    %v3253 = vadd.f32 %v2345, %v3252
    %3254 = vmatmul.f32.gmra.mxu0 %v2288
    %v3255 = vpop.f32.mrf.mxu0
    %v3256 = vadd.f32 %v2350, %v3255
    %3257 = vmatmul.f32.gmra.mxu0 %v2290
    %v3258 = vpop.f32.mrf.mxu0
    %v3259 = vadd.f32 %v2355, %v3258
    %3260 = vmatmul.f32.gmra.mxu0 %v2292
    %v3261 = vpop.f32.mrf.mxu0
    %v3262 = vadd.f32 %v2360, %v3261
    %3263 = vmatmul.f32.gmra.mxu0 %v2294
    %v3264 = vpop.f32.mrf.mxu0
    %v3265 = vadd.f32 %v2365, %v3264
    %3266 = vmatmul.f32.gmra.mxu0 %v2296
    %v3267 = vpop.f32.mrf.mxu0
    %v3268 = vadd.f32 %v2370, %v3267
    %3269 = vmatmul.f32.gmra.mxu0 %v2298
    %v3270 = vpop.f32.mrf.mxu0
    %v3271 = vadd.f32 %v2375, %v3270
    %3272 = vmatmul.f32.gmra.mxu0 %v2300
    %v3273 = vpop.f32.mrf.mxu0
    %v3274 = vadd.f32 %v2380, %v3273
    %3275 = vdwg.mxu0
    %3276 = vmatpush.msra.mxu0 0.0
    %3277 = vmatpush.msra.mxu0 0.0
    %3278 = vmatpush.msra.mxu0 0.0
    %3279 = vmatpush.msra.mxu0 0.0
    %3280 = vmatpush.msra.mxu0 0.0
    %3281 = vmatpush.msra.mxu0 0.0
    %3282 = vmatpush.msra.mxu0 0.0
    %3283 = vmatpush.msra.mxu0 0.0
    %3284 = vmatpush.msra.mxu0 %v2268
    %3285 = vmatpush.msra.mxu0 %v2260
    %3286 = vmatpush.msra.mxu0 %v2252
    %3287 = vmatpush.msra.mxu0 %v2244
    %3288 = vmatpush.msra.mxu0 %v2236
    %3289 = vmatpush.msra.mxu0 %v2228
    %3290 = vmatpush.msra.mxu0 %v2220
    %3291 = vmatpush.msra.mxu0 %v2212
    %3292 = vmatmul.f32.gmra.mxu0 %v2384
    %v3293 = vpop.f32.mrf.mxu0
    %v3294 = vadd.f32 %v3229, %v3293
    %3295 = vmatmul.f32.gmra.mxu0 %v2387
    %v3296 = vpop.f32.mrf.mxu0
    %v3297 = vadd.f32 %v3232, %v3296
    %3298 = vmatmul.f32.gmra.mxu0 %v2390
    %v3299 = vpop.f32.mrf.mxu0
    %v3300 = vadd.f32 %v3235, %v3299
    %3301 = vmatmul.f32.gmra.mxu0 %v2393
    %v3302 = vpop.f32.mrf.mxu0
    %v3303 = vadd.f32 %v3238, %v3302
    %3304 = vmatmul.f32.gmra.mxu0 %v2396
    %v3305 = vpop.f32.mrf.mxu0
    %v3306 = vadd.f32 %v3241, %v3305
    %3307 = vmatmul.f32.gmra.mxu0 %v2399
    %v3308 = vpop.f32.mrf.mxu0
    %v3309 = vadd.f32 %v3244, %v3308
    %3310 = vmatmul.f32.gmra.mxu0 %v2402
    %v3311 = vpop.f32.mrf.mxu0
    %v3312 = vadd.f32 %v3247, %v3311
    %3313 = vmatmul.f32.gmra.mxu0 %v2405
    %v3314 = vpop.f32.mrf.mxu0
    %v3315 = vadd.f32 %v3250, %v3314
    %3316 = vmatmul.f32.gmra.mxu0 %v2408
    %v3317 = vpop.f32.mrf.mxu0
    %v3318 = vadd.f32 %v3253, %v3317
    %3319 = vmatmul.f32.gmra.mxu0 %v2411
    %v3320 = vpop.f32.mrf.mxu0
    %v3321 = vadd.f32 %v3256, %v3320
    %3322 = vmatmul.f32.gmra.mxu0 %v2414
    %v3323 = vpop.f32.mrf.mxu0
    %v3324 = vadd.f32 %v3259, %v3323
    %3325 = vmatmul.f32.gmra.mxu0 %v2417
    %v3326 = vpop.f32.mrf.mxu0
    %v3327 = vadd.f32 %v3262, %v3326
    %3328 = vmatmul.f32.gmra.mxu0 %v2420
    %v3329 = vpop.f32.mrf.mxu0
    %v3330 = vadd.f32 %v3265, %v3329
    %3331 = vmatmul.f32.gmra.mxu0 %v2423
    %v3332 = vpop.f32.mrf.mxu0
    %v3333 = vadd.f32 %v3268, %v3332
    %3334 = vmatmul.f32.gmra.mxu0 %v2426
    %v3335 = vpop.f32.mrf.mxu0
    %v3336 = vadd.f32 %v3271, %v3335
    %3337 = vmatmul.f32.gmra.mxu0 %v2429
    %v3338 = vpop.f32.mrf.mxu0
    %v3339 = vadd.f32 %v3274, %v3338
    %3340 = vdwg.mxu0
    %3341 = vmatpush.msra.mxu0 %v1757
    %3342 = vmatpush.msra.mxu0 %v1749
    %3343 = vmatpush.msra.mxu0 %v1741
    %3344 = vmatpush.msra.mxu0 %v1733
    %3345 = vmatpush.msra.mxu0 %v1725
    %3346 = vmatpush.msra.mxu0 %v1717
    %3347 = vmatpush.msra.mxu0 %v1709
    %3348 = vmatpush.msra.mxu0 %v1701
    %3349 = vmatpush.msra.mxu0 %v2013
    %3350 = vmatpush.msra.mxu0 %v2005
    %3351 = vmatpush.msra.mxu0 %v1997
    %3352 = vmatpush.msra.mxu0 %v1989
    %3353 = vmatpush.msra.mxu0 %v1981
    %3354 = vmatpush.msra.mxu0 %v1973
    %3355 = vmatpush.msra.mxu0 %v1965
    %3356 = vmatpush.msra.mxu0 %v1957
    %3357 = vmatmul.f32.gmra.mxu0 %v2270
    %v3358 = vpop.f32.mrf.mxu0
    %v3359 = vadd.f32 %v2305, %v3358
    %3360 = vmatmul.f32.gmra.mxu0 %v2272
    %v3361 = vpop.f32.mrf.mxu0
    %v3362 = vadd.f32 %v2310, %v3361
    %3363 = vmatmul.f32.gmra.mxu0 %v2274
    %v3364 = vpop.f32.mrf.mxu0
    %v3365 = vadd.f32 %v2315, %v3364
    %3366 = vmatmul.f32.gmra.mxu0 %v2276
    %v3367 = vpop.f32.mrf.mxu0
    %v3368 = vadd.f32 %v2320, %v3367
    %3369 = vmatmul.f32.gmra.mxu0 %v2278
    %v3370 = vpop.f32.mrf.mxu0
    %v3371 = vadd.f32 %v2325, %v3370
    %3372 = vmatmul.f32.gmra.mxu0 %v2280
    %v3373 = vpop.f32.mrf.mxu0
    %v3374 = vadd.f32 %v2330, %v3373
    %3375 = vmatmul.f32.gmra.mxu0 %v2282
    %v3376 = vpop.f32.mrf.mxu0
    %v3377 = vadd.f32 %v2335, %v3376
    %3378 = vmatmul.f32.gmra.mxu0 %v2284
    %v3379 = vpop.f32.mrf.mxu0
    %v3380 = vadd.f32 %v2340, %v3379
    %3381 = vmatmul.f32.gmra.mxu0 %v2286
    %v3382 = vpop.f32.mrf.mxu0
    %v3383 = vadd.f32 %v2345, %v3382
    %3384 = vmatmul.f32.gmra.mxu0 %v2288
    %v3385 = vpop.f32.mrf.mxu0
    %v3386 = vadd.f32 %v2350, %v3385
    %3387 = vmatmul.f32.gmra.mxu0 %v2290
    %v3388 = vpop.f32.mrf.mxu0
    %v3389 = vadd.f32 %v2355, %v3388
    %3390 = vmatmul.f32.gmra.mxu0 %v2292
    %v3391 = vpop.f32.mrf.mxu0
    %v3392 = vadd.f32 %v2360, %v3391
    %3393 = vmatmul.f32.gmra.mxu0 %v2294
    %v3394 = vpop.f32.mrf.mxu0
    %v3395 = vadd.f32 %v2365, %v3394
    %3396 = vmatmul.f32.gmra.mxu0 %v2296
    %v3397 = vpop.f32.mrf.mxu0
    %v3398 = vadd.f32 %v2370, %v3397
    %3399 = vmatmul.f32.gmra.mxu0 %v2298
    %v3400 = vpop.f32.mrf.mxu0
    %v3401 = vadd.f32 %v2375, %v3400
    %3402 = vmatmul.f32.gmra.mxu0 %v2300
    %v3403 = vpop.f32.mrf.mxu0
    %v3404 = vadd.f32 %v2380, %v3403
    %3405 = vdwg.mxu0
    %3406 = vmatpush.msra.mxu0 0.0
    %3407 = vmatpush.msra.mxu0 0.0
    %3408 = vmatpush.msra.mxu0 0.0
    %3409 = vmatpush.msra.mxu0 0.0
    %3410 = vmatpush.msra.mxu0 0.0
    %3411 = vmatpush.msra.mxu0 0.0
    %3412 = vmatpush.msra.mxu0 0.0
    %3413 = vmatpush.msra.mxu0 0.0
    %3414 = vmatpush.msra.mxu0 %v2269
    %3415 = vmatpush.msra.mxu0 %v2261
    %3416 = vmatpush.msra.mxu0 %v2253
    %3417 = vmatpush.msra.mxu0 %v2245
    %3418 = vmatpush.msra.mxu0 %v2237
    %3419 = vmatpush.msra.mxu0 %v2229
    %3420 = vmatpush.msra.mxu0 %v2221
    %3421 = vmatpush.msra.mxu0 %v2213
    %3422 = vmatmul.f32.gmra.mxu0 %v2384
    %v3423 = vpop.f32.mrf.mxu0
    %v3424 = vadd.f32 %v3359, %v3423
    %3425 = vmatmul.f32.gmra.mxu0 %v2387
    %v3426 = vpop.f32.mrf.mxu0
    %v3427 = vadd.f32 %v3362, %v3426
    %3428 = vmatmul.f32.gmra.mxu0 %v2390
    %v3429 = vpop.f32.mrf.mxu0
    %v3430 = vadd.f32 %v3365, %v3429
    %3431 = vmatmul.f32.gmra.mxu0 %v2393
    %v3432 = vpop.f32.mrf.mxu0
    %v3433 = vadd.f32 %v3368, %v3432
    %3434 = vmatmul.f32.gmra.mxu0 %v2396
    %v3435 = vpop.f32.mrf.mxu0
    %v3436 = vadd.f32 %v3371, %v3435
    %3437 = vmatmul.f32.gmra.mxu0 %v2399
    %v3438 = vpop.f32.mrf.mxu0
    %v3439 = vadd.f32 %v3374, %v3438
    %3440 = vmatmul.f32.gmra.mxu0 %v2402
    %v3441 = vpop.f32.mrf.mxu0
    %v3442 = vadd.f32 %v3377, %v3441
    %3443 = vmatmul.f32.gmra.mxu0 %v2405
    %v3444 = vpop.f32.mrf.mxu0
    %v3445 = vadd.f32 %v3380, %v3444
    %3446 = vmatmul.f32.gmra.mxu0 %v2408
    %v3447 = vpop.f32.mrf.mxu0
    %v3448 = vadd.f32 %v3383, %v3447
    %3449 = vmatmul.f32.gmra.mxu0 %v2411
    %v3450 = vpop.f32.mrf.mxu0
    %v3451 = vadd.f32 %v3386, %v3450
    %3452 = vmatmul.f32.gmra.mxu0 %v2414
    %v3453 = vpop.f32.mrf.mxu0
    %v3454 = vadd.f32 %v3389, %v3453
    %3455 = vmatmul.f32.gmra.mxu0 %v2417
    %v3456 = vpop.f32.mrf.mxu0
    %v3457 = vadd.f32 %v3392, %v3456
    %3458 = vmatmul.f32.gmra.mxu0 %v2420
    %v3459 = vpop.f32.mrf.mxu0
    %v3460 = vadd.f32 %v3395, %v3459
    %3461 = vmatmul.f32.gmra.mxu0 %v2423
    %v3462 = vpop.f32.mrf.mxu0
    %v3463 = vadd.f32 %v3398, %v3462
    %3464 = vmatmul.f32.gmra.mxu0 %v2426
    %v3465 = vpop.f32.mrf.mxu0
    %v3466 = vadd.f32 %v3401, %v3465
    %3467 = vmatmul.f32.gmra.mxu0 %v2429
    %v3468 = vpop.f32.mrf.mxu0
    %v3469 = vadd.f32 %v3404, %v3468
    %3470 = vdwg.mxu0
    %vm3471 = vcmp.ge.f32.partialorder %v2514, 0.0
    %vm3472 = vcmp.ge.f32.partialorder %v2644, 0.0
    %vm3473 = vcmp.ge.f32.partialorder %v2774, 0.0
    %vm3474 = vcmp.ge.f32.partialorder %v2904, 0.0
    %vm3475 = vcmp.ge.f32.partialorder %v3034, 0.0
    %vm3476 = vcmp.ge.f32.partialorder %v3164, 0.0
    %vm3477 = vcmp.ge.f32.partialorder %v3294, 0.0
    %vm3478 = vcmp.ge.f32.partialorder %v3424, 0.0
    %vm3479 = vcmp.ge.f32.partialorder %v2517, 0.0
    %vm3480 = vcmp.ge.f32.partialorder %v2647, 0.0
    %vm3481 = vcmp.ge.f32.partialorder %v2777, 0.0
    %vm3482 = vcmp.ge.f32.partialorder %v2907, 0.0
    %vm3483 = vcmp.ge.f32.partialorder %v3037, 0.0
    %vm3484 = vcmp.ge.f32.partialorder %v3167, 0.0
    %vm3485 = vcmp.ge.f32.partialorder %v3297, 0.0
    %vm3486 = vcmp.ge.f32.partialorder %v3427, 0.0
    %vm3487 = vcmp.ge.f32.partialorder %v2520, 0.0
    %vm3488 = vcmp.ge.f32.partialorder %v2650, 0.0
    %vm3489 = vcmp.ge.f32.partialorder %v2780, 0.0
    %vm3490 = vcmp.ge.f32.partialorder %v2910, 0.0
    %vm3491 = vcmp.ge.f32.partialorder %v3040, 0.0
    %vm3492 = vcmp.ge.f32.partialorder %v3170, 0.0
    %vm3493 = vcmp.ge.f32.partialorder %v3300, 0.0
    %vm3494 = vcmp.ge.f32.partialorder %v3430, 0.0
    %vm3495 = vcmp.ge.f32.partialorder %v2523, 0.0
    %vm3496 = vcmp.ge.f32.partialorder %v2653, 0.0
    %vm3497 = vcmp.ge.f32.partialorder %v2783, 0.0
    %vm3498 = vcmp.ge.f32.partialorder %v2913, 0.0
    %vm3499 = vcmp.ge.f32.partialorder %v3043, 0.0
    %vm3500 = vcmp.ge.f32.partialorder %v3173, 0.0
    %vm3501 = vcmp.ge.f32.partialorder %v3303, 0.0
    %vm3502 = vcmp.ge.f32.partialorder %v3433, 0.0
    %vm3503 = vcmp.ge.f32.partialorder %v2526, 0.0
    %vm3504 = vcmp.ge.f32.partialorder %v2656, 0.0
    %vm3505 = vcmp.ge.f32.partialorder %v2786, 0.0
    %vm3506 = vcmp.ge.f32.partialorder %v2916, 0.0
    %vm3507 = vcmp.ge.f32.partialorder %v3046, 0.0
    %vm3508 = vcmp.ge.f32.partialorder %v3176, 0.0
    %vm3509 = vcmp.ge.f32.partialorder %v3306, 0.0
    %vm3510 = vcmp.ge.f32.partialorder %v3436, 0.0
    %vm3511 = vcmp.ge.f32.partialorder %v2529, 0.0
    %vm3512 = vcmp.ge.f32.partialorder %v2659, 0.0
    %vm3513 = vcmp.ge.f32.partialorder %v2789, 0.0
    %vm3514 = vcmp.ge.f32.partialorder %v2919, 0.0
    %vm3515 = vcmp.ge.f32.partialorder %v3049, 0.0
    %vm3516 = vcmp.ge.f32.partialorder %v3179, 0.0
    %vm3517 = vcmp.ge.f32.partialorder %v3309, 0.0
    %vm3518 = vcmp.ge.f32.partialorder %v3439, 0.0
    %vm3519 = vcmp.ge.f32.partialorder %v2532, 0.0
    %vm3520 = vcmp.ge.f32.partialorder %v2662, 0.0
    %vm3521 = vcmp.ge.f32.partialorder %v2792, 0.0
    %vm3522 = vcmp.ge.f32.partialorder %v2922, 0.0
    %vm3523 = vcmp.ge.f32.partialorder %v3052, 0.0
    %vm3524 = vcmp.ge.f32.partialorder %v3182, 0.0
    %vm3525 = vcmp.ge.f32.partialorder %v3312, 0.0
    %vm3526 = vcmp.ge.f32.partialorder %v3442, 0.0
    %vm3527 = vcmp.ge.f32.partialorder %v2535, 0.0
    %vm3528 = vcmp.ge.f32.partialorder %v2665, 0.0
    %vm3529 = vcmp.ge.f32.partialorder %v2795, 0.0
    %vm3530 = vcmp.ge.f32.partialorder %v2925, 0.0
    %vm3531 = vcmp.ge.f32.partialorder %v3055, 0.0
    %vm3532 = vcmp.ge.f32.partialorder %v3185, 0.0
    %vm3533 = vcmp.ge.f32.partialorder %v3315, 0.0
    %vm3534 = vcmp.ge.f32.partialorder %v3445, 0.0
    %vm3535 = vcmp.ge.f32.partialorder %v2538, 0.0
    %vm3536 = vcmp.ge.f32.partialorder %v2668, 0.0
    %vm3537 = vcmp.ge.f32.partialorder %v2798, 0.0
    %vm3538 = vcmp.ge.f32.partialorder %v2928, 0.0
    %vm3539 = vcmp.ge.f32.partialorder %v3058, 0.0
    %vm3540 = vcmp.ge.f32.partialorder %v3188, 0.0
    %vm3541 = vcmp.ge.f32.partialorder %v3318, 0.0
    %vm3542 = vcmp.ge.f32.partialorder %v3448, 0.0
    %vm3543 = vcmp.ge.f32.partialorder %v2541, 0.0
    %vm3544 = vcmp.ge.f32.partialorder %v2671, 0.0
    %vm3545 = vcmp.ge.f32.partialorder %v2801, 0.0
    %vm3546 = vcmp.ge.f32.partialorder %v2931, 0.0
    %vm3547 = vcmp.ge.f32.partialorder %v3061, 0.0
    %vm3548 = vcmp.ge.f32.partialorder %v3191, 0.0
    %vm3549 = vcmp.ge.f32.partialorder %v3321, 0.0
    %vm3550 = vcmp.ge.f32.partialorder %v3451, 0.0
    %vm3551 = vcmp.ge.f32.partialorder %v2544, 0.0
    %vm3552 = vcmp.ge.f32.partialorder %v2674, 0.0
    %vm3553 = vcmp.ge.f32.partialorder %v2804, 0.0
    %vm3554 = vcmp.ge.f32.partialorder %v2934, 0.0
    %vm3555 = vcmp.ge.f32.partialorder %v3064, 0.0
    %vm3556 = vcmp.ge.f32.partialorder %v3194, 0.0
    %vm3557 = vcmp.ge.f32.partialorder %v3324, 0.0
    %vm3558 = vcmp.ge.f32.partialorder %v3454, 0.0
    %vm3559 = vcmp.ge.f32.partialorder %v2547, 0.0
    %vm3560 = vcmp.ge.f32.partialorder %v2677, 0.0
    %vm3561 = vcmp.ge.f32.partialorder %v2807, 0.0
    %vm3562 = vcmp.ge.f32.partialorder %v2937, 0.0
    %vm3563 = vcmp.ge.f32.partialorder %v3067, 0.0
    %vm3564 = vcmp.ge.f32.partialorder %v3197, 0.0
    %vm3565 = vcmp.ge.f32.partialorder %v3327, 0.0
    %vm3566 = vcmp.ge.f32.partialorder %v3457, 0.0
    %vm3567 = vcmp.ge.f32.partialorder %v2550, 0.0
    %vm3568 = vcmp.ge.f32.partialorder %v2680, 0.0
    %vm3569 = vcmp.ge.f32.partialorder %v2810, 0.0
    %vm3570 = vcmp.ge.f32.partialorder %v2940, 0.0
    %vm3571 = vcmp.ge.f32.partialorder %v3070, 0.0
    %vm3572 = vcmp.ge.f32.partialorder %v3200, 0.0
    %vm3573 = vcmp.ge.f32.partialorder %v3330, 0.0
    %vm3574 = vcmp.ge.f32.partialorder %v3460, 0.0
    %vm3575 = vcmp.ge.f32.partialorder %v2553, 0.0
    %vm3576 = vcmp.ge.f32.partialorder %v2683, 0.0
    %vm3577 = vcmp.ge.f32.partialorder %v2813, 0.0
    %vm3578 = vcmp.ge.f32.partialorder %v2943, 0.0
    %vm3579 = vcmp.ge.f32.partialorder %v3073, 0.0
    %vm3580 = vcmp.ge.f32.partialorder %v3203, 0.0
    %vm3581 = vcmp.ge.f32.partialorder %v3333, 0.0
    %vm3582 = vcmp.ge.f32.partialorder %v3463, 0.0
    %vm3583 = vcmp.ge.f32.partialorder %v2556, 0.0
    %vm3584 = vcmp.ge.f32.partialorder %v2686, 0.0
    %vm3585 = vcmp.ge.f32.partialorder %v2816, 0.0
    %vm3586 = vcmp.ge.f32.partialorder %v2946, 0.0
    %vm3587 = vcmp.ge.f32.partialorder %v3076, 0.0
    %vm3588 = vcmp.ge.f32.partialorder %v3206, 0.0
    %vm3589 = vcmp.ge.f32.partialorder %v3336, 0.0
    %vm3590 = vcmp.ge.f32.partialorder %v3466, 0.0
    %vm3591 = vcmp.ge.f32.partialorder %v2559, 0.0
    %vm3592 = vcmp.ge.f32.partialorder %v2689, 0.0
    %vm3593 = vcmp.ge.f32.partialorder %v2819, 0.0
    %vm3594 = vcmp.ge.f32.partialorder %v2949, 0.0
    %vm3595 = vcmp.ge.f32.partialorder %v3079, 0.0
    %vm3596 = vcmp.ge.f32.partialorder %v3209, 0.0
    %vm3597 = vcmp.ge.f32.partialorder %v3339, 0.0
    %vm3598 = vcmp.ge.f32.partialorder %v3469, 0.0
    %v3599 = vmul.f32 %v2514, 0.01
    %v3600 = vmul.f32 %v2644, 0.01
    %v3601 = vmul.f32 %v2774, 0.01
    %v3602 = vmul.f32 %v2904, 0.01
    %v3603 = vmul.f32 %v3034, 0.01
    %v3604 = vmul.f32 %v3164, 0.01
    %v3605 = vmul.f32 %v3294, 0.01
    %v3606 = vmul.f32 %v3424, 0.01
    %v3607 = vmul.f32 %v2517, 0.01
    %v3608 = vmul.f32 %v2647, 0.01
    %v3609 = vmul.f32 %v2777, 0.01
    %v3610 = vmul.f32 %v2907, 0.01
    %v3611 = vmul.f32 %v3037, 0.01
    %v3612 = vmul.f32 %v3167, 0.01
    %v3613 = vmul.f32 %v3297, 0.01
    %v3614 = vmul.f32 %v3427, 0.01
    %v3615 = vmul.f32 %v2520, 0.01
    %v3616 = vmul.f32 %v2650, 0.01
    %v3617 = vmul.f32 %v2780, 0.01
    %v3618 = vmul.f32 %v2910, 0.01
    %v3619 = vmul.f32 %v3040, 0.01
    %v3620 = vmul.f32 %v3170, 0.01
    %v3621 = vmul.f32 %v3300, 0.01
    %v3622 = vmul.f32 %v3430, 0.01
    %v3623 = vmul.f32 %v2523, 0.01
    %v3624 = vmul.f32 %v2653, 0.01
    %v3625 = vmul.f32 %v2783, 0.01
    %v3626 = vmul.f32 %v2913, 0.01
    %v3627 = vmul.f32 %v3043, 0.01
    %v3628 = vmul.f32 %v3173, 0.01
    %v3629 = vmul.f32 %v3303, 0.01
    %v3630 = vmul.f32 %v3433, 0.01
    %v3631 = vmul.f32 %v2526, 0.01
    %v3632 = vmul.f32 %v2656, 0.01
    %v3633 = vmul.f32 %v2786, 0.01
    %v3634 = vmul.f32 %v2916, 0.01
    %v3635 = vmul.f32 %v3046, 0.01
    %v3636 = vmul.f32 %v3176, 0.01
    %v3637 = vmul.f32 %v3306, 0.01
    %v3638 = vmul.f32 %v3436, 0.01
    %v3639 = vmul.f32 %v2529, 0.01
    %v3640 = vmul.f32 %v2659, 0.01
    %v3641 = vmul.f32 %v2789, 0.01
    %v3642 = vmul.f32 %v2919, 0.01
    %v3643 = vmul.f32 %v3049, 0.01
    %v3644 = vmul.f32 %v3179, 0.01
    %v3645 = vmul.f32 %v3309, 0.01
    %v3646 = vmul.f32 %v3439, 0.01
    %v3647 = vmul.f32 %v2532, 0.01
    %v3648 = vmul.f32 %v2662, 0.01
    %v3649 = vmul.f32 %v2792, 0.01
    %v3650 = vmul.f32 %v2922, 0.01
    %v3651 = vmul.f32 %v3052, 0.01
    %v3652 = vmul.f32 %v3182, 0.01
    %v3653 = vmul.f32 %v3312, 0.01
    %v3654 = vmul.f32 %v3442, 0.01
    %v3655 = vmul.f32 %v2535, 0.01
    %v3656 = vmul.f32 %v2665, 0.01
    %v3657 = vmul.f32 %v2795, 0.01
    %v3658 = vmul.f32 %v2925, 0.01
    %v3659 = vmul.f32 %v3055, 0.01
    %v3660 = vmul.f32 %v3185, 0.01
    %v3661 = vmul.f32 %v3315, 0.01
    %v3662 = vmul.f32 %v3445, 0.01
    %v3663 = vmul.f32 %v2538, 0.01
    %v3664 = vmul.f32 %v2668, 0.01
    %v3665 = vmul.f32 %v2798, 0.01
    %v3666 = vmul.f32 %v2928, 0.01
    %v3667 = vmul.f32 %v3058, 0.01
    %v3668 = vmul.f32 %v3188, 0.01
    %v3669 = vmul.f32 %v3318, 0.01
    %v3670 = vmul.f32 %v3448, 0.01
    %v3671 = vmul.f32 %v2541, 0.01
    %v3672 = vmul.f32 %v2671, 0.01
    %v3673 = vmul.f32 %v2801, 0.01
    %v3674 = vmul.f32 %v2931, 0.01
    %v3675 = vmul.f32 %v3061, 0.01
    %v3676 = vmul.f32 %v3191, 0.01
    %v3677 = vmul.f32 %v3321, 0.01
    %v3678 = vmul.f32 %v3451, 0.01
    %v3679 = vmul.f32 %v2544, 0.01
    %v3680 = vmul.f32 %v2674, 0.01
    %v3681 = vmul.f32 %v2804, 0.01
    %v3682 = vmul.f32 %v2934, 0.01
    %v3683 = vmul.f32 %v3064, 0.01
    %v3684 = vmul.f32 %v3194, 0.01
    %v3685 = vmul.f32 %v3324, 0.01
    %v3686 = vmul.f32 %v3454, 0.01
    %v3687 = vmul.f32 %v2547, 0.01
    %v3688 = vmul.f32 %v2677, 0.01
    %v3689 = vmul.f32 %v2807, 0.01
    %v3690 = vmul.f32 %v2937, 0.01
    %v3691 = vmul.f32 %v3067, 0.01
    %v3692 = vmul.f32 %v3197, 0.01
    %v3693 = vmul.f32 %v3327, 0.01
    %v3694 = vmul.f32 %v3457, 0.01
    %v3695 = vmul.f32 %v2550, 0.01
    %v3696 = vmul.f32 %v2680, 0.01
    %v3697 = vmul.f32 %v2810, 0.01
    %v3698 = vmul.f32 %v2940, 0.01
    %v3699 = vmul.f32 %v3070, 0.01
    %v3700 = vmul.f32 %v3200, 0.01
    %v3701 = vmul.f32 %v3330, 0.01
    %v3702 = vmul.f32 %v3460, 0.01
    %v3703 = vmul.f32 %v2553, 0.01
    %v3704 = vmul.f32 %v2683, 0.01
    %v3705 = vmul.f32 %v2813, 0.01
    %v3706 = vmul.f32 %v2943, 0.01
    %v3707 = vmul.f32 %v3073, 0.01
    %v3708 = vmul.f32 %v3203, 0.01
    %v3709 = vmul.f32 %v3333, 0.01
    %v3710 = vmul.f32 %v3463, 0.01
    %v3711 = vmul.f32 %v2556, 0.01
    %v3712 = vmul.f32 %v2686, 0.01
    %v3713 = vmul.f32 %v2816, 0.01
    %v3714 = vmul.f32 %v2946, 0.01
    %v3715 = vmul.f32 %v3076, 0.01
    %v3716 = vmul.f32 %v3206, 0.01
    %v3717 = vmul.f32 %v3336, 0.01
    %v3718 = vmul.f32 %v3466, 0.01
    %v3719 = vmul.f32 %v2559, 0.01
    %v3720 = vmul.f32 %v2689, 0.01
    %v3721 = vmul.f32 %v2819, 0.01
    %v3722 = vmul.f32 %v2949, 0.01
    %v3723 = vmul.f32 %v3079, 0.01
    %v3724 = vmul.f32 %v3209, 0.01
    %v3725 = vmul.f32 %v3339, 0.01
    %v3726 = vmul.f32 %v3469, 0.01
    %v3727 = vsel %vm3471, %v2514, %v3599
    %v3728 = vsel %vm3472, %v2644, %v3600
    %v3729 = vsel %vm3473, %v2774, %v3601
    %v3730 = vsel %vm3474, %v2904, %v3602
    %v3731 = vsel %vm3475, %v3034, %v3603
    %v3732 = vsel %vm3476, %v3164, %v3604
    %v3733 = vsel %vm3477, %v3294, %v3605
    %v3734 = vsel %vm3478, %v3424, %v3606
    %v3735 = vsel %vm3479, %v2517, %v3607
    %v3736 = vsel %vm3480, %v2647, %v3608
    %v3737 = vsel %vm3481, %v2777, %v3609
    %v3738 = vsel %vm3482, %v2907, %v3610
    %v3739 = vsel %vm3483, %v3037, %v3611
    %v3740 = vsel %vm3484, %v3167, %v3612
    %v3741 = vsel %vm3485, %v3297, %v3613
    %v3742 = vsel %vm3486, %v3427, %v3614
    %v3743 = vsel %vm3487, %v2520, %v3615
    %v3744 = vsel %vm3488, %v2650, %v3616
    %v3745 = vsel %vm3489, %v2780, %v3617
    %v3746 = vsel %vm3490, %v2910, %v3618
    %v3747 = vsel %vm3491, %v3040, %v3619
    %v3748 = vsel %vm3492, %v3170, %v3620
    %v3749 = vsel %vm3493, %v3300, %v3621
    %v3750 = vsel %vm3494, %v3430, %v3622
    %v3751 = vsel %vm3495, %v2523, %v3623
    %v3752 = vsel %vm3496, %v2653, %v3624
    %v3753 = vsel %vm3497, %v2783, %v3625
    %v3754 = vsel %vm3498, %v2913, %v3626
    %v3755 = vsel %vm3499, %v3043, %v3627
    %v3756 = vsel %vm3500, %v3173, %v3628
    %v3757 = vsel %vm3501, %v3303, %v3629
    %v3758 = vsel %vm3502, %v3433, %v3630
    %v3759 = vsel %vm3503, %v2526, %v3631
    %v3760 = vsel %vm3504, %v2656, %v3632
    %v3761 = vsel %vm3505, %v2786, %v3633
    %v3762 = vsel %vm3506, %v2916, %v3634
    %v3763 = vsel %vm3507, %v3046, %v3635
    %v3764 = vsel %vm3508, %v3176, %v3636
    %v3765 = vsel %vm3509, %v3306, %v3637
    %v3766 = vsel %vm3510, %v3436, %v3638
    %v3767 = vsel %vm3511, %v2529, %v3639
    %v3768 = vsel %vm3512, %v2659, %v3640
    %v3769 = vsel %vm3513, %v2789, %v3641
    %v3770 = vsel %vm3514, %v2919, %v3642
    %v3771 = vsel %vm3515, %v3049, %v3643
    %v3772 = vsel %vm3516, %v3179, %v3644
    %v3773 = vsel %vm3517, %v3309, %v3645
    %v3774 = vsel %vm3518, %v3439, %v3646
    %v3775 = vsel %vm3519, %v2532, %v3647
    %v3776 = vsel %vm3520, %v2662, %v3648
    %v3777 = vsel %vm3521, %v2792, %v3649
    %v3778 = vsel %vm3522, %v2922, %v3650
    %v3779 = vsel %vm3523, %v3052, %v3651
    %v3780 = vsel %vm3524, %v3182, %v3652
    %v3781 = vsel %vm3525, %v3312, %v3653
    %v3782 = vsel %vm3526, %v3442, %v3654
    %v3783 = vsel %vm3527, %v2535, %v3655
    %v3784 = vsel %vm3528, %v2665, %v3656
    %v3785 = vsel %vm3529, %v2795, %v3657
    %v3786 = vsel %vm3530, %v2925, %v3658
    %v3787 = vsel %vm3531, %v3055, %v3659
    %v3788 = vsel %vm3532, %v3185, %v3660
    %v3789 = vsel %vm3533, %v3315, %v3661
    %v3790 = vsel %vm3534, %v3445, %v3662
    %v3791 = vsel %vm3535, %v2538, %v3663
    %v3792 = vsel %vm3536, %v2668, %v3664
    %v3793 = vsel %vm3537, %v2798, %v3665
    %v3794 = vsel %vm3538, %v2928, %v3666
    %v3795 = vsel %vm3539, %v3058, %v3667
    %v3796 = vsel %vm3540, %v3188, %v3668
    %v3797 = vsel %vm3541, %v3318, %v3669
    %v3798 = vsel %vm3542, %v3448, %v3670
    %v3799 = vsel %vm3543, %v2541, %v3671
    %v3800 = vsel %vm3544, %v2671, %v3672
    %v3801 = vsel %vm3545, %v2801, %v3673
    %v3802 = vsel %vm3546, %v2931, %v3674
    %v3803 = vsel %vm3547, %v3061, %v3675
    %v3804 = vsel %vm3548, %v3191, %v3676
    %v3805 = vsel %vm3549, %v3321, %v3677
    %v3806 = vsel %vm3550, %v3451, %v3678
    %v3807 = vsel %vm3551, %v2544, %v3679
    %v3808 = vsel %vm3552, %v2674, %v3680
    %v3809 = vsel %vm3553, %v2804, %v3681
    %v3810 = vsel %vm3554, %v2934, %v3682
    %v3811 = vsel %vm3555, %v3064, %v3683
    %v3812 = vsel %vm3556, %v3194, %v3684
    %v3813 = vsel %vm3557, %v3324, %v3685
    %v3814 = vsel %vm3558, %v3454, %v3686
    %v3815 = vsel %vm3559, %v2547, %v3687
    %v3816 = vsel %vm3560, %v2677, %v3688
    %v3817 = vsel %vm3561, %v2807, %v3689
    %v3818 = vsel %vm3562, %v2937, %v3690
    %v3819 = vsel %vm3563, %v3067, %v3691
    %v3820 = vsel %vm3564, %v3197, %v3692
    %v3821 = vsel %vm3565, %v3327, %v3693
    %v3822 = vsel %vm3566, %v3457, %v3694
    %v3823 = vsel %vm3567, %v2550, %v3695
    %v3824 = vsel %vm3568, %v2680, %v3696
    %v3825 = vsel %vm3569, %v2810, %v3697
    %v3826 = vsel %vm3570, %v2940, %v3698
    %v3827 = vsel %vm3571, %v3070, %v3699
    %v3828 = vsel %vm3572, %v3200, %v3700
    %v3829 = vsel %vm3573, %v3330, %v3701
    %v3830 = vsel %vm3574, %v3460, %v3702
    %v3831 = vsel %vm3575, %v2553, %v3703
    %v3832 = vsel %vm3576, %v2683, %v3704
    %v3833 = vsel %vm3577, %v2813, %v3705
    %v3834 = vsel %vm3578, %v2943, %v3706
    %v3835 = vsel %vm3579, %v3073, %v3707
    %v3836 = vsel %vm3580, %v3203, %v3708
    %v3837 = vsel %vm3581, %v3333, %v3709
    %v3838 = vsel %vm3582, %v3463, %v3710
    %v3839 = vsel %vm3583, %v2556, %v3711
    %v3840 = vsel %vm3584, %v2686, %v3712
    %v3841 = vsel %vm3585, %v2816, %v3713
    %v3842 = vsel %vm3586, %v2946, %v3714
    %v3843 = vsel %vm3587, %v3076, %v3715
    %v3844 = vsel %vm3588, %v3206, %v3716
    %v3845 = vsel %vm3589, %v3336, %v3717
    %v3846 = vsel %vm3590, %v3466, %v3718
    %v3847 = vsel %vm3591, %v2559, %v3719
    %v3848 = vsel %vm3592, %v2689, %v3720
    %v3849 = vsel %vm3593, %v2819, %v3721
    %v3850 = vsel %vm3594, %v2949, %v3722
    %v3851 = vsel %vm3595, %v3079, %v3723
    %v3852 = vsel %vm3596, %v3209, %v3724
    %v3853 = vsel %vm3597, %v3339, %v3725
    %v3854 = vsel %vm3598, %v3469, %v3726
    %v3855 = vld [vmem:[%s5] sm:$0xff]
    %v3856 = vld [vmem:[%s5 + $0x8] sm:$0xff]
    %v3857 = vld [vmem:[%s5 + $0x10] sm:$0xff]
    %v3858 = vld [vmem:[%s5 + $0x18] sm:$0xff]
    %v3859 = vld [vmem:[%s5 + $0x20] sm:$0xff]
    %v3860 = vld [vmem:[%s5 + $0x28] sm:$0xff]
    %v3861 = vld [vmem:[%s5 + $0x30] sm:$0xff]
    %v3862 = vld [vmem:[%s5 + $0x38] sm:$0xff]
    %3863 = vmatpush.xpose.msra.mxu0 %v3847
    %3864 = vmatpush.xpose.msra.mxu0 %v3839
    %3865 = vmatpush.xpose.msra.mxu0 %v3831
    %3866 = vmatpush.xpose.msra.mxu0 %v3823
    %3867 = vmatpush.xpose.msra.mxu0 %v3815
    %3868 = vmatpush.xpose.msra.mxu0 %v3807
    %3869 = vmatpush.xpose.msra.mxu0 %v3799
    %3870 = vmatpush.xpose.msra.mxu0 %v3791
    %3871 = vmatpush.xpose.msra.mxu0 %v3783
    %3872 = vmatpush.xpose.msra.mxu0 %v3775
    %3873 = vmatpush.xpose.msra.mxu0 %v3767
    %3874 = vmatpush.xpose.msra.mxu0 %v3759
    %3875 = vmatpush.xpose.msra.mxu0 %v3751
    %3876 = vmatpush.xpose.msra.mxu0 %v3743
    %3877 = vmatpush.xpose.msra.mxu0 %v3735
    %3878 = vmatpush.xpose.msra.mxu0 %v3727
    %3879 = vmatmul.f32.gmra.mxu0 %v3855
    %v3880 = vpop.f32.mrf.mxu0
    %v3881 = vadd.f32 0.0, %v3880
    %3882 = vdwg.mxu0
    %3883 = vmatpush.xpose.msra.mxu0 %v3848
    %3884 = vmatpush.xpose.msra.mxu0 %v3840
    %3885 = vmatpush.xpose.msra.mxu0 %v3832
    %3886 = vmatpush.xpose.msra.mxu0 %v3824
    %3887 = vmatpush.xpose.msra.mxu0 %v3816
    %3888 = vmatpush.xpose.msra.mxu0 %v3808
    %3889 = vmatpush.xpose.msra.mxu0 %v3800
    %3890 = vmatpush.xpose.msra.mxu0 %v3792
    %3891 = vmatpush.xpose.msra.mxu0 %v3784
    %3892 = vmatpush.xpose.msra.mxu0 %v3776
    %3893 = vmatpush.xpose.msra.mxu0 %v3768
    %3894 = vmatpush.xpose.msra.mxu0 %v3760
    %3895 = vmatpush.xpose.msra.mxu0 %v3752
    %3896 = vmatpush.xpose.msra.mxu0 %v3744
    %3897 = vmatpush.xpose.msra.mxu0 %v3736
    %3898 = vmatpush.xpose.msra.mxu0 %v3728
    %3899 = vmatmul.f32.gmra.mxu0 %v3856
    %v3900 = vpop.f32.mrf.mxu0
    %v3901 = vadd.f32 %v3881, %v3900
    %3902 = vdwg.mxu0
    %3903 = vmatpush.xpose.msra.mxu0 %v3849
    %3904 = vmatpush.xpose.msra.mxu0 %v3841
    %3905 = vmatpush.xpose.msra.mxu0 %v3833
    %3906 = vmatpush.xpose.msra.mxu0 %v3825
    %3907 = vmatpush.xpose.msra.mxu0 %v3817
    %3908 = vmatpush.xpose.msra.mxu0 %v3809
    %3909 = vmatpush.xpose.msra.mxu0 %v3801
    %3910 = vmatpush.xpose.msra.mxu0 %v3793
    %3911 = vmatpush.xpose.msra.mxu0 %v3785
    %3912 = vmatpush.xpose.msra.mxu0 %v3777
    %3913 = vmatpush.xpose.msra.mxu0 %v3769
    %3914 = vmatpush.xpose.msra.mxu0 %v3761
    %3915 = vmatpush.xpose.msra.mxu0 %v3753
    %3916 = vmatpush.xpose.msra.mxu0 %v3745
    %3917 = vmatpush.xpose.msra.mxu0 %v3737
    %3918 = vmatpush.xpose.msra.mxu0 %v3729
    %3919 = vmatmul.f32.gmra.mxu0 %v3857
    %v3920 = vpop.f32.mrf.mxu0
    %v3921 = vadd.f32 %v3901, %v3920
    %3922 = vdwg.mxu0
    %3923 = vmatpush.xpose.msra.mxu0 %v3850
    %3924 = vmatpush.xpose.msra.mxu0 %v3842
    %3925 = vmatpush.xpose.msra.mxu0 %v3834
    %3926 = vmatpush.xpose.msra.mxu0 %v3826
    %3927 = vmatpush.xpose.msra.mxu0 %v3818
    %3928 = vmatpush.xpose.msra.mxu0 %v3810
    %3929 = vmatpush.xpose.msra.mxu0 %v3802
    %3930 = vmatpush.xpose.msra.mxu0 %v3794
    %3931 = vmatpush.xpose.msra.mxu0 %v3786
    %3932 = vmatpush.xpose.msra.mxu0 %v3778
    %3933 = vmatpush.xpose.msra.mxu0 %v3770
    %3934 = vmatpush.xpose.msra.mxu0 %v3762
    %3935 = vmatpush.xpose.msra.mxu0 %v3754
    %3936 = vmatpush.xpose.msra.mxu0 %v3746
    %3937 = vmatpush.xpose.msra.mxu0 %v3738
    %3938 = vmatpush.xpose.msra.mxu0 %v3730
    %3939 = vmatmul.f32.gmra.mxu0 %v3858
    %v3940 = vpop.f32.mrf.mxu0
    %v3941 = vadd.f32 %v3921, %v3940
    %3942 = vdwg.mxu0
    %3943 = vmatpush.xpose.msra.mxu0 %v3851
    %3944 = vmatpush.xpose.msra.mxu0 %v3843
    %3945 = vmatpush.xpose.msra.mxu0 %v3835
    %3946 = vmatpush.xpose.msra.mxu0 %v3827
    %3947 = vmatpush.xpose.msra.mxu0 %v3819
    %3948 = vmatpush.xpose.msra.mxu0 %v3811
    %3949 = vmatpush.xpose.msra.mxu0 %v3803
    %3950 = vmatpush.xpose.msra.mxu0 %v3795
    %3951 = vmatpush.xpose.msra.mxu0 %v3787
    %3952 = vmatpush.xpose.msra.mxu0 %v3779
    %3953 = vmatpush.xpose.msra.mxu0 %v3771
    %3954 = vmatpush.xpose.msra.mxu0 %v3763
    %3955 = vmatpush.xpose.msra.mxu0 %v3755
    %3956 = vmatpush.xpose.msra.mxu0 %v3747
    %3957 = vmatpush.xpose.msra.mxu0 %v3739
    %3958 = vmatpush.xpose.msra.mxu0 %v3731
    %3959 = vmatmul.f32.gmra.mxu0 %v3859
    %v3960 = vpop.f32.mrf.mxu0
    %v3961 = vadd.f32 %v3941, %v3960
    %3962 = vdwg.mxu0
    %3963 = vmatpush.xpose.msra.mxu0 %v3852
    %3964 = vmatpush.xpose.msra.mxu0 %v3844
    %3965 = vmatpush.xpose.msra.mxu0 %v3836
    %3966 = vmatpush.xpose.msra.mxu0 %v3828
    %3967 = vmatpush.xpose.msra.mxu0 %v3820
    %3968 = vmatpush.xpose.msra.mxu0 %v3812
    %3969 = vmatpush.xpose.msra.mxu0 %v3804
    %3970 = vmatpush.xpose.msra.mxu0 %v3796
    %3971 = vmatpush.xpose.msra.mxu0 %v3788
    %3972 = vmatpush.xpose.msra.mxu0 %v3780
    %3973 = vmatpush.xpose.msra.mxu0 %v3772
    %3974 = vmatpush.xpose.msra.mxu0 %v3764
    %3975 = vmatpush.xpose.msra.mxu0 %v3756
    %3976 = vmatpush.xpose.msra.mxu0 %v3748
    %3977 = vmatpush.xpose.msra.mxu0 %v3740
    %3978 = vmatpush.xpose.msra.mxu0 %v3732
    %3979 = vmatmul.f32.gmra.mxu0 %v3860
    %v3980 = vpop.f32.mrf.mxu0
    %v3981 = vadd.f32 %v3961, %v3980
    %3982 = vdwg.mxu0
    %3983 = vmatpush.xpose.msra.mxu0 %v3853
    %3984 = vmatpush.xpose.msra.mxu0 %v3845
    %3985 = vmatpush.xpose.msra.mxu0 %v3837
    %3986 = vmatpush.xpose.msra.mxu0 %v3829
    %3987 = vmatpush.xpose.msra.mxu0 %v3821
    %3988 = vmatpush.xpose.msra.mxu0 %v3813
    %3989 = vmatpush.xpose.msra.mxu0 %v3805
    %3990 = vmatpush.xpose.msra.mxu0 %v3797
    %3991 = vmatpush.xpose.msra.mxu0 %v3789
    %3992 = vmatpush.xpose.msra.mxu0 %v3781
    %3993 = vmatpush.xpose.msra.mxu0 %v3773
    %3994 = vmatpush.xpose.msra.mxu0 %v3765
    %3995 = vmatpush.xpose.msra.mxu0 %v3757
    %3996 = vmatpush.xpose.msra.mxu0 %v3749
    %3997 = vmatpush.xpose.msra.mxu0 %v3741
    %3998 = vmatpush.xpose.msra.mxu0 %v3733
    %3999 = vmatmul.f32.gmra.mxu0 %v3861
    %v4000 = vpop.f32.mrf.mxu0
    %v4001 = vadd.f32 %v3981, %v4000
    %4002 = vdwg.mxu0
    %4003 = vmatpush.xpose.msra.mxu0 %v3854
    %4004 = vmatpush.xpose.msra.mxu0 %v3846
    %4005 = vmatpush.xpose.msra.mxu0 %v3838
    %4006 = vmatpush.xpose.msra.mxu0 %v3830
    %4007 = vmatpush.xpose.msra.mxu0 %v3822
    %4008 = vmatpush.xpose.msra.mxu0 %v3814
    %4009 = vmatpush.xpose.msra.mxu0 %v3806
    %4010 = vmatpush.xpose.msra.mxu0 %v3798
    %4011 = vmatpush.xpose.msra.mxu0 %v3790
    %4012 = vmatpush.xpose.msra.mxu0 %v3782
    %4013 = vmatpush.xpose.msra.mxu0 %v3774
    %4014 = vmatpush.xpose.msra.mxu0 %v3766
    %4015 = vmatpush.xpose.msra.mxu0 %v3758
    %4016 = vmatpush.xpose.msra.mxu0 %v3750
    %4017 = vmatpush.xpose.msra.mxu0 %v3742
    %4018 = vmatpush.xpose.msra.mxu0 %v3734
    %4019 = vmatmul.f32.gmra.mxu0 %v3862
    %v4020 = vpop.f32.mrf.mxu0
    %v4021 = vadd.f32 %v4001, %v4020
    %4022 = vdwg.mxu0
    %v4023 = vld [vmem:[%s6] sm:$0xff]
    %v4024 = vld [vmem:[%s6 + $0x8] sm:$0xff]
    %v4025 = vld [vmem:[%s6 + $0x10] sm:$0xff]
    %v4026 = vld [vmem:[%s6 + $0x18] sm:$0xff]
    %v4027 = vld [vmem:[%s6 + $0x20] sm:$0xff]
    %v4028 = vld [vmem:[%s6 + $0x28] sm:$0xff]
    %v4029 = vld [vmem:[%s6 + $0x30] sm:$0xff]
    %v4030 = vld [vmem:[%s6 + $0x38] sm:$0xff]
    %v4031 = vld [vmem:[%s6 + $0x40] sm:$0xff]
    %v4032 = vld [vmem:[%s6 + $0x48] sm:$0xff]
    %v4033 = vld [vmem:[%s6 + $0x50] sm:$0xff]
    %v4034 = vld [vmem:[%s6 + $0x58] sm:$0xff]
    %v4035 = vld [vmem:[%s6 + $0x60] sm:$0xff]
    %v4036 = vld [vmem:[%s6 + $0x68] sm:$0xff]
    %v4037 = vld [vmem:[%s6 + $0x70] sm:$0xff]
    %v4038 = vld [vmem:[%s6 + $0x78] sm:$0xff]
    %v4039 = vld [vmem:[%s8] sm:$0x1]
    %v4040 = vperm.slane %v4039, 0
    %4041 = vmatpush.msra.mxu0 %v4038
    %4042 = vmatpush.msra.mxu0 %v4037
    %4043 = vmatpush.msra.mxu0 %v4036
    %4044 = vmatpush.msra.mxu0 %v4035
    %4045 = vmatpush.msra.mxu0 %v4034
    %4046 = vmatpush.msra.mxu0 %v4033
    %4047 = vmatpush.msra.mxu0 %v4032
    %4048 = vmatpush.msra.mxu0 %v4031
    %4049 = vmatpush.msra.mxu0 %v4030
    %4050 = vmatpush.msra.mxu0 %v4029
    %4051 = vmatpush.msra.mxu0 %v4028
    %4052 = vmatpush.msra.mxu0 %v4027
    %4053 = vmatpush.msra.mxu0 %v4026
    %4054 = vmatpush.msra.mxu0 %v4025
    %4055 = vmatpush.msra.mxu0 %v4024
    %4056 = vmatpush.msra.mxu0 %v4023
    %4057 = vmatmul.f32.gmra.mxu0 %v4021
    %v4058 = vpop.f32.mrf.mxu0
    %v4059 = vadd.f32 %v4040, %v4058
    %4060 = vdwg.mxu0
    %vm4061 = vcmp.ge.f32.partialorder %v4059, 0.0
    %v4062 = vmul.f32 %v4059, 0.01
    %v4063 = vsel %vm4061, %v4059, %v4062
    %v4064 = vld [vmem:[%s7] sm:$0xff]
    %v4065 = vld [vmem:[%s7 + $0x8] sm:$0xff]
    %v4066 = vld [vmem:[%s7 + $0x10] sm:$0xff]
    %v4067 = vld [vmem:[%s7 + $0x18] sm:$0xff]
    %v4068 = vld [vmem:[%s7 + $0x20] sm:$0xff]
    %v4069 = vld [vmem:[%s7 + $0x28] sm:$0xff]
    %v4070 = vld [vmem:[%s7 + $0x30] sm:$0xff]
    %v4071 = vld [vmem:[%s7 + $0x38] sm:$0xff]
    %v4072 = vld [vmem:[%s7 + $0x40] sm:$0xff]
    %v4073 = vld [vmem:[%s7 + $0x48] sm:$0xff]
    %v4074 = vld [vmem:[%s7 + $0x50] sm:$0xff]
    %v4075 = vld [vmem:[%s7 + $0x58] sm:$0xff]
    %v4076 = vld [vmem:[%s7 + $0x60] sm:$0xff]
    %v4077 = vld [vmem:[%s7 + $0x68] sm:$0xff]
    %v4078 = vld [vmem:[%s7 + $0x70] sm:$0xff]
    %v4079 = vld [vmem:[%s7 + $0x78] sm:$0xff]
    %v4080 = vld [vmem:[%s8 + $0x8] sm:$0x1]
    %v4081 = vperm.slane %v4080, 0
    %4082 = vmatpush.msra.mxu0 %v4079
    %4083 = vmatpush.msra.mxu0 %v4078
    %4084 = vmatpush.msra.mxu0 %v4077
    %4085 = vmatpush.msra.mxu0 %v4076
    %4086 = vmatpush.msra.mxu0 %v4075
    %4087 = vmatpush.msra.mxu0 %v4074
    %4088 = vmatpush.msra.mxu0 %v4073
    %4089 = vmatpush.msra.mxu0 %v4072
    %4090 = vmatpush.msra.mxu0 %v4071
    %4091 = vmatpush.msra.mxu0 %v4070
    %4092 = vmatpush.msra.mxu0 %v4069
    %4093 = vmatpush.msra.mxu0 %v4068
    %4094 = vmatpush.msra.mxu0 %v4067
    %4095 = vmatpush.msra.mxu0 %v4066
    %4096 = vmatpush.msra.mxu0 %v4065
    %4097 = vmatpush.msra.mxu0 %v4064
    %4098 = vmatmul.f32.gmra.mxu0 %v4063
    %v4099 = vpop.f32.mrf.mxu0
    %v4100 = vadd.f32 %v4081, %v4099
    %4101 = vdwg.mxu0
    %4102 = vst [vmem:[#allocation2] sm:$0xff] %v4100
    // Predicated region
    $region38: #{steady_pathway_pallas.1} parent=1 // pred_check
      _
    $region39: #{steady_pathway_pallas.1} parent=1 // pred_check_branch
      %4104 = sbr.rel (0) target = $region41
    $region40: #{steady_pathway_pallas.1} parent=1 // pred_region
      %4106 = vsyncadd [#allocation3], 0
      %s4108 = sshll.u32 [#allocation2], 4
      %s4109 = int_to_ptr.vmem [resolvable:$true] %s4108
      %s4110 = sshll.u32 %s9, 4
      %s4111 = int_to_ptr.hbm [resolvable:$true] %s4110
      %4113 = dma.vmem_to_hbm [thread:$0]  %s4109, 128, %s4111, [#allocation3]
    $region41: #{steady_pathway_pallas.1} parent=1 // pred_fallthru
      _
    // Predicated region
    $region42: #{steady_pathway_pallas.1} parent=1 // pred_check
      _
    $region43: #{steady_pathway_pallas.1} parent=1 // pred_check_branch
      %4115 = sbr.rel (0) target = $region45
    $region44: #{steady_pathway_pallas.1} parent=1 // pred_region
      %4117 = dma.done [#allocation3], 128
    $region45: #{steady_pathway_pallas.1} parent=1 // pred_fallthru
      _
    %4118 = vsyncpa [#allocation3], 1

</llo_original>
